<compile_context>
chip_gen: v7x
topology: tpu7x:2x2x1
jax: 0.10.0
libtpu: 0.0.40
codegen_flags: <defaults>
</compile_context>

<pallas_src>
import functools

import jax
import jax.numpy as jnp
from jax.experimental import pallas as pl
from jax.experimental.pallas import tpu as pltpu

BN_EPS = 1e-5
NUM_CORE_SPLIT = 2   # leading grid axis -> megacore split on multi-TC chips


def _round_up(x, m):
    return (x + m - 1) // m * m


def _padded_bytes(shape, itemsize):
    """Rough VMEM footprint of one buffer of `shape` (lane/sublane padded)."""
    if not shape:
        return itemsize
    s = list(shape)
    s[-1] = _round_up(s[-1], 128)
    if len(s) >= 2:
        s[-2] = _round_up(s[-2], 8)
    n = 1
    for d in s:
        n *= d
    return n * itemsize


def _vmem_limit_bytes(min_needed):
    """Generation-aware VMEM limit: 48 MiB conservative default, raised on 128 MiB chips."""
    limit = 48 * 1024 * 1024
    cap = None
    try:
        cap = getattr(pltpu.get_tpu_info(), "vmem_capacity_bytes", None)
    except Exception:
        cap = None
    if cap and cap >= 100 * 1024 * 1024:       # v5e / v6e: 128 MiB per core
        limit = 96 * 1024 * 1024
    limit = max(limit, int(min_needed * 5 // 4))
    if cap and cap > 0:
        limit = min(limit, int(cap * 15 // 16))
    else:
        limit = min(limit, 112 * 1024 * 1024)
    return int(limit)


# ---------------------------------------------------------------------------
# Pass 1: fused im2col conv-as-GEMM (per-tap MXU matmuls) + per-channel stats.
# ---------------------------------------------------------------------------
def _conv_stats_kernel(x_ref, w_ref, y_ref, sum_ref, ssq_ref, *,
                       kh, kw, stride, ho, wo, cin_pad, c_pad):
    # x_ref: (Hp, Wp, cin_pad)       one spatially pre-padded NHWC image
    # w_ref: (kh*kw, cin_pad, c_pad) per-tap GEMM weights
    # y_ref: (ho*wo, c_pad)          bias-free conv output (bias cancels under BN)
    # sum_ref/ssq_ref: (1, 8, c_pad) per-core stat accumulators (8 sublane partials)
    @pl.when(pl.program_id(1) == 0)
    def _init():
        sum_ref[...] = jnp.zeros_like(sum_ref)
        ssq_ref[...] = jnp.zeros_like(ssq_ref)

    r = ho * wo
    acc = None
    for i in range(kh):
        for j in range(kw):
            if stride == 1:
                win = x_ref[i:i + ho, j:j + wo, :]
            else:
                win = x_ref[i:i + (ho - 1) * stride + 1,
                            j:j + (wo - 1) * stride + 1, :][::stride, ::stride, :]
            lhs = win.reshape(r, cin_pad)
            contrib = jnp.dot(lhs, w_ref[i * kw + j],
                              preferred_element_type=jnp.float32)
            acc = contrib if acc is None else acc + contrib

    # Per-channel statistics of the bias-free conv output.  Zero-padded images
    # contribute exactly 0, so no row masking is needed (cnt = valid rows in glue).
    if r % 8 == 0:
        s1 = jnp.sum(acc.reshape(r // 8, 8, c_pad), axis=0)
        s2 = jnp.sum(jnp.square(acc).reshape(r // 8, 8, c_pad), axis=0)
    else:
        s1 = jnp.pad(jnp.sum(acc, axis=0, keepdims=True), ((0, 7), (0, 0)))
        s2 = jnp.pad(jnp.sum(jnp.square(acc), axis=0, keepdims=True), ((0, 7), (0, 0)))
    sum_ref[...] += s1[None]
    ssq_ref[...] += s2[None]

    y_ref[...] = acc.astype(y_ref.dtype)


# ---------------------------------------------------------------------------
# Pass 2: lane-dense normalize, one FMA per element, written in place (alias).
# ---------------------------------------------------------------------------
def _normalize_kernel(y_ref, scale_ref, shift_ref, out_ref):
    y = y_ref[...].astype(jnp.float32)
    out_ref[...] = (y * scale_ref[...] + shift_ref[...]).astype(out_ref.dtype)


# ---------------------------------------------------------------------------
# Wrapper.
# ---------------------------------------------------------------------------
def conv2d_bn(x_nchw, weight, bias, gamma, beta, *, stride=1, padding=1,
              compute_dtype=jnp.float32):
    """Forward of Conv2dBn.  x: (N, C_in, H, W), weight: (C_out, C_in, KH, KW)."""
    del bias  # Exact: the conv bias cancels under training-mode batch normalization.

    n, c_in, h, w_in = x_nchw.shape
    c_out, c_in_w, kh, kw = weight.shape
    assert c_in_w == c_in

    ho = (h + 2 * padding - kh) // stride + 1
    wo = (w_in + 2 * padding - kw) // stride + 1
    r_img = ho * wo
    hp = h + 2 * padding
    wp = w_in + 2 * padding

    itemsize = jnp.dtype(compute_dtype).itemsize
    sub_align = 8 * (4 // itemsize)            # 8 for f32, 16 for bf16
    cin_pad = _round_up(c_in, sub_align)       # contraction dim, sublane side of W
    c_pad = _round_up(c_out, 128)              # lane-dense output / full MXU N width

    core_split = max(1, min(NUM_CORE_SPLIT, n))
    n_pad = _round_up(n, core_split)
    imgs_per_core = n_pad // core_split

    # NCHW -> NHWC, spatial + channel + batch zero padding, dtype cast (one XLA copy).
    x_nhwc = jnp.transpose(x_nchw, (0, 2, 3, 1))
    x_p = jnp.pad(x_nhwc, ((0, n_pad - n), (padding, padding),
                           (padding, padding), (0, cin_pad - c_in)))
    x_p = x_p.astype(compute_dtype)

    # Weights -> (kh*kw, cin_pad, c_pad) per-tap GEMM operands.
    w_t = jnp.transpose(weight, (2, 3, 1, 0)).reshape(kh * kw, c_in, c_out)
    w_t = jnp.pad(w_t, ((0, 0), (0, cin_pad - c_in), (0, c_pad - c_out)))
    w_t = w_t.astype(compute_dtype)

    g3d = jnp.pad(gamma.reshape(1, 1, c_out).astype(jnp.float32),
                  ((0, 0), (0, 0), (0, c_pad - c_out)))
    b3d = jnp.pad(beta.reshape(1, 1, c_out).astype(jnp.float32),
                  ((0, 0), (0, 0), (0, c_pad - c_out)))

    # --- pass 1: fused conv GEMM + per-channel sum / sum-of-squares -----------------
    kernel1 = functools.partial(_conv_stats_kernel, kh=kh, kw=kw, stride=stride,
                                ho=ho, wo=wo, cin_pad=cin_pad, c_pad=c_pad)
    stats_shape = jax.ShapeDtypeStruct((core_split, 8, c_pad), jnp.float32)

    vmem_need1 = (2 * (_padded_bytes((hp, wp, cin_pad), itemsize)
                       + _padded_bytes((kh * kw, cin_pad, c_pad), itemsize)
                       + _padded_bytes((r_img, c_pad), itemsize)
                       + 2 * _padded_bytes((8, c_pad), 4))
                  + _padded_bytes((r_img, c_pad), 4)
                  + 2 * _padded_bytes((r_img, cin_pad), itemsize))

    flops1 = 2 * n_pad * r_img * cin_pad * c_pad * kh * kw
    bytes1 = (n_pad * hp * wp * cin_pad * itemsize
              + kh * kw * cin_pad * c_pad * itemsize
              + n_pad * r_img * c_pad * itemsize
              + 2 * core_split * 8 * c_pad * 4)

    y3, sums, ssqs = pl.pallas_call(
        kernel1,
        out_shape=(jax.ShapeDtypeStruct((n_pad, r_img, c_pad), compute_dtype),
                   stats_shape, stats_shape),
        grid_spec=pltpu.PrefetchScalarGridSpec(
            num_scalar_prefetch=0,
            grid=(core_split, imgs_per_core),
            in_specs=[
                pl.BlockSpec((None, hp, wp, cin_pad),
                             lambda c, b: (c * imgs_per_core + b, 0, 0, 0)),
                pl.BlockSpec((kh * kw, cin_pad, c_pad), lambda c, b: (0, 0, 0)),
            ],
            out_specs=(
                pl.BlockSpec((None, r_img, c_pad),
                             lambda c, b: (c * imgs_per_core + b, 0, 0)),
                pl.BlockSpec((1, 8, c_pad), lambda c, b: (c, 0, 0)),
                pl.BlockSpec((1, 8, c_pad), lambda c, b: (c, 0, 0)),
            )),
        compiler_params=pltpu.CompilerParams(
            dimension_semantics=("parallel", "arbitrary"),
            vmem_limit_bytes=_vmem_limit_bytes(vmem_need1)),
        cost_estimate=pl.CostEstimate(flops=flops1, transcendentals=0,
                                      bytes_accessed=bytes1),
    )(x_p, w_t)

    # --- tiny per-channel glue: fold BN into one FMA (scale/shift) ------------------
    cnt = jnp.float32(n * r_img)                       # valid rows only (pads are 0)
    total_sum = jnp.sum(sums, axis=(0, 1))[None, None, :]     # (1, 1, c_pad)
    total_ssq = jnp.sum(ssqs, axis=(0, 1))[None, None, :]
    mean = total_sum / cnt
    # TODO(synk): E[x^2] - mean^2 is mildly cancellation-prone; removing the conv bias
    # keeps |mean| small, but a shifted/Welford accumulation would be more robust.
    var = jnp.maximum(total_ssq / cnt - mean * mean, 0.0)
    inv_std = jax.lax.rsqrt(var + BN_EPS)
    scale = g3d * inv_std                              # (1, 1, c_pad) f32
    shift = b3d - mean * scale

    # --- pass 2: normalize in place (lane-dense, big blocks, 'parallel') ------------
    budget2 = 24 * 1024 * 1024
    mb = 1
    for d in range(n_pad, 0, -1):
        if n_pad % d == 0 and 4 * d * _padded_bytes((r_img, c_pad), itemsize) <= budget2:
            mb = d
            break
    grid2 = n_pad // mb
    flops2 = 2 * n_pad * r_img * c_pad
    bytes2 = 2 * n_pad * r_img * c_pad * itemsize + 2 * c_pad * 4
    vmem_need2 = 4 * mb * _padded_bytes((r_img, c_pad), itemsize)

    out3 = pl.pallas_call(
        _normalize_kernel,
        out_shape=jax.ShapeDtypeStruct((n_pad, r_img, c_pad), compute_dtype),
        grid_spec=pltpu.PrefetchScalarGridSpec(
            num_scalar_prefetch=0,
            grid=(grid2,),
            in_specs=[
                pl.BlockSpec((mb, r_img, c_pad), lambda i: (i, 0, 0)),
                pl.BlockSpec((1, 1, c_pad), lambda i: (0, 0, 0)),
                pl.BlockSpec((1, 1, c_pad), lambda i: (0, 0, 0)),
            ],
            out_specs=pl.BlockSpec((mb, r_img, c_pad), lambda i: (i, 0, 0))),
        input_output_aliases={0: 0},
        compiler_params=pltpu.CompilerParams(
            dimension_semantics=("parallel",),
            vmem_limit_bytes=_vmem_limit_bytes(vmem_need2)),
        cost_estimate=pl.CostEstimate(flops=flops2, transcendentals=0,
                                      bytes_accessed=bytes2),
    )(y3, scale, shift)

    # Drop batch/channel padding, back to NCHW f32.
    out = out3[:n].reshape(n, ho, wo, c_pad)[:, :, :, :c_out]
    return jnp.transpose(out, (0, 3, 1, 2)).astype(jnp.float32)


def _reference(x_nchw, weight, bias, gamma, beta, *, stride=1, padding=1):
    y = jax.lax.conv_general_dilated(
        x_nchw, weight, window_strides=(stride, stride),
        padding=[(padding, padding), (padding, padding)],
        dimension_numbers=("NCHW", "OIHW", "NCHW"))
    y = y + bias.reshape(1, -1, 1, 1)
    mean = jnp.mean(y, axis=(0, 2, 3), keepdims=True)
    var = jnp.mean((y - mean) ** 2, axis=(0, 2, 3), keepdims=True)
    y_hat = (y - mean) * jax.lax.rsqrt(var + BN_EPS)
    return y_hat * gamma.reshape(1, -1, 1, 1) + beta.reshape(1, -1, 1, 1)


if __name__ == "__main__":
    # Conv2dBn(in_planes=4, out_planes=8, kernel_size=3, padding=1) at small shapes.
    N, C_IN, H, W = 2, 4, 16, 16
    C_OUT, KH, KW = 8, 3, 3

    key = jax.random.PRNGKey(0)
    kx, kw_, kb = jax.random.split(key, 3)
    x = jax.random.normal(kx, (N, C_IN, H, W), dtype=jnp.float32)
    weight = jax.random.normal(kw_, (C_OUT, C_IN, KH, KW), dtype=jnp.float32) * 0.1
    bias = jax.random.normal(kb, (C_OUT,), dtype=jnp.float32) * 0.1
    gamma = jnp.ones((C_OUT,), dtype=jnp.float32)   # BatchNorm2d default init
    beta = jnp.zeros((C_OUT,), dtype=jnp.float32)

    ref = _reference(x, weight, bias, gamma, beta, stride=1, padding=1)

    # f32 path (tight tolerance).
    fwd_f32 = jax.jit(functools.partial(conv2d_bn, stride=1, padding=1,
                                        compute_dtype=jnp.float32))
    out = jax.block_until_ready(fwd_f32(x, weight, bias, gamma, beta))
    assert out.shape == (N, C_OUT, H, W)
    assert jnp.allclose(out, ref, atol=2e-4, rtol=2e-4), "f32 mismatch vs reference"

    # bf16 MXU operands + bf16 intermediate y (all generations): f32 accumulation and
    # f32 BN math, looser tolerance.
    fwd_bf16 = jax.jit(functools.partial(conv2d_bn, stride=1, padding=1,
                                         compute_dtype=jnp.bfloat16))
    out_bf16 = jax.block_until_ready(fwd_bf16(x, weight, bias, gamma, beta))
    assert out_bf16.shape == (N, C_OUT, H, W)
    assert jnp.allclose(out_bf16, ref, atol=5e-2, rtol=5e-2), "bf16 mismatch vs reference"

    print("KERNEL_OK")
</pallas_src>

<mosaic_0001>
module attributes {stable_mosaic.version = 11 : i64} {
  func.func @_conv_stats_kernel(%arg0: i32, %arg1: i32, %arg2: memref<1x18x18x8xf32, #tpu.memory_space<vmem>>, %arg3: memref<9x8x128xf32, #tpu.memory_space<vmem>>, %arg4: memref<1x256x128xf32, #tpu.memory_space<vmem>>, %arg5: memref<1x8x128xf32, #tpu.memory_space<vmem>>, %arg6: memref<1x8x128xf32, #tpu.memory_space<vmem>>) attributes {dimension_semantics = [#tpu.dimension_semantics<parallel>, #tpu.dimension_semantics<arbitrary>], iteration_bounds = array<i64: 2, 1>, scalar_prefetch = 0 : i64, scratch_operands = 0 : i64, tpu.core_type = #tpu.core_type<tc>, window_params = [{transform_indices = @transform_0, window_bounds = array<i64: 1, 18, 18, 8>}, {pipeline_mode = #tpu.pipeline_mode<synchronous>, transform_indices = @transform_1, window_bounds = array<i64: 9, 8, 128>}, {transform_indices = @transform_2, window_bounds = array<i64: 1, 256, 128>}, {transform_indices = @transform_3, window_bounds = array<i64: 1, 8, 128>}, {transform_indices = @transform_4, window_bounds = array<i64: 1, 8, 128>}]} {
    %c0_i32 = arith.constant 0 : i32
    %0 = arith.cmpi eq, %arg1, %c0_i32 : i32
    %1 = arith.extui %0 : i1 to i32
    %c0_i32_0 = arith.constant 0 : i32
    %2 = arith.cmpi ne, %1, %c0_i32_0 : i32
    scf.if %2 {
      %cst_80 = arith.constant 0.000000e+00 : f32
      %81 = vector.broadcast %cst_80 : f32 to vector<1x8x128xf32>
      %c0_81 = arith.constant 0 : index
      %c0_82 = arith.constant 0 : index
      %c0_83 = arith.constant 0 : index
      %82 = vector.load %arg5[%c0_81, %c0_82, %c0_83] : memref<1x8x128xf32, #tpu.memory_space<vmem>>, vector<1x8x128xf32>
      tpu.vector_store %arg5[%c0_81, %c0_82, %c0_83], %81 {strides = array<i32>} : memref<1x8x128xf32, #tpu.memory_space<vmem>>, vector<1x8x128xf32>,
      %cst_84 = arith.constant 0.000000e+00 : f32
      %83 = vector.broadcast %cst_84 : f32 to vector<1x8x128xf32>
      %c0_85 = arith.constant 0 : index
      %c0_86 = arith.constant 0 : index
      %c0_87 = arith.constant 0 : index
      %84 = vector.load %arg6[%c0_85, %c0_86, %c0_87] : memref<1x8x128xf32, #tpu.memory_space<vmem>>, vector<1x8x128xf32>
      tpu.vector_store %arg6[%c0_85, %c0_86, %c0_87], %83 {strides = array<i32>} : memref<1x8x128xf32, #tpu.memory_space<vmem>>, vector<1x8x128xf32>,
    } else {
    }
    %c0 = arith.constant 0 : index
    %c0_1 = arith.constant 0 : index
    %c0_2 = arith.constant 0 : index
    %c0_3 = arith.constant 0 : index
    %3 = vector.load %arg2[%c0, %c0_1, %c0_2, %c0_3] : memref<1x18x18x8xf32, #tpu.memory_space<vmem>>, vector<1x16x16x8xf32>
    %4 = vector.shape_cast %3 : vector<1x16x16x8xf32> to vector<16x16x8xf32>
    %5 = vector.shape_cast %4 : vector<16x16x8xf32> to vector<256x8xf32>
    %c0_4 = arith.constant 0 : index
    %c0_5 = arith.constant 0 : index
    %c0_6 = arith.constant 0 : index
    %6 = vector.load %arg3[%c0_4, %c0_5, %c0_6] : memref<9x8x128xf32, #tpu.memory_space<vmem>>, vector<1x8x128xf32>
    %7 = vector.shape_cast %6 : vector<1x8x128xf32> to vector<8x128xf32>
    %cst = arith.constant dense<0.000000e+00> : vector<256x128xf32>
    %8 = tpu.matmul %5, %7, %cst {dimension_numbers = #tpu.dot_dimension_numbers<[1], [0], [0], [1], [0, 0, 1, 1], [], []>} : vector<256x8xf32>, vector<8x128xf32>, vector<256x128xf32> -> vector<256x128xf32>
    %c0_7 = arith.constant 0 : index
    %c0_8 = arith.constant 0 : index
    %c1 = arith.constant 1 : index
    %c0_9 = arith.constant 0 : index
    %9 = vector.load %arg2[%c0_7, %c0_8, %c1, %c0_9] : memref<1x18x18x8xf32, #tpu.memory_space<vmem>>, vector<1x16x16x8xf32>
    %10 = vector.shape_cast %9 : vector<1x16x16x8xf32> to vector<16x16x8xf32>
    %11 = vector.shape_cast %10 : vector<16x16x8xf32> to vector<256x8xf32>
    %c1_10 = arith.constant 1 : index
    %c0_11 = arith.constant 0 : index
    %c0_12 = arith.constant 0 : index
    %12 = vector.load %arg3[%c1_10, %c0_11, %c0_12] : memref<9x8x128xf32, #tpu.memory_space<vmem>>, vector<1x8x128xf32>
    %13 = vector.shape_cast %12 : vector<1x8x128xf32> to vector<8x128xf32>
    %cst_13 = arith.constant dense<0.000000e+00> : vector<256x128xf32>
    %14 = tpu.matmul %11, %13, %cst_13 {dimension_numbers = #tpu.dot_dimension_numbers<[1], [0], [0], [1], [0, 0, 1, 1], [], []>} : vector<256x8xf32>, vector<8x128xf32>, vector<256x128xf32> -> vector<256x128xf32>
    %15 = arith.addf %8, %14 : vector<256x128xf32>
    %c0_14 = arith.constant 0 : index
    %c0_15 = arith.constant 0 : index
    %c2 = arith.constant 2 : index
    %c0_16 = arith.constant 0 : index
    %16 = vector.load %arg2[%c0_14, %c0_15, %c2, %c0_16] : memref<1x18x18x8xf32, #tpu.memory_space<vmem>>, vector<1x16x16x8xf32>
    %17 = vector.shape_cast %16 : vector<1x16x16x8xf32> to vector<16x16x8xf32>
    %18 = vector.shape_cast %17 : vector<16x16x8xf32> to vector<256x8xf32>
    %c2_17 = arith.constant 2 : index
    %c0_18 = arith.constant 0 : index
    %c0_19 = arith.constant 0 : index
    %19 = vector.load %arg3[%c2_17, %c0_18, %c0_19] : memref<9x8x128xf32, #tpu.memory_space<vmem>>, vector<1x8x128xf32>
    %20 = vector.shape_cast %19 : vector<1x8x128xf32> to vector<8x128xf32>
    %cst_20 = arith.constant dense<0.000000e+00> : vector<256x128xf32>
    %21 = tpu.matmul %18, %20, %cst_20 {dimension_numbers = #tpu.dot_dimension_numbers<[1], [0], [0], [1], [0, 0, 1, 1], [], []>} : vector<256x8xf32>, vector<8x128xf32>, vector<256x128xf32> -> vector<256x128xf32>
    %22 = arith.addf %15, %21 : vector<256x128xf32>
    %c0_21 = arith.constant 0 : index
    %c1_22 = arith.constant 1 : index
    %c0_23 = arith.constant 0 : index
    %c0_24 = arith.constant 0 : index
    %23 = vector.load %arg2[%c0_21, %c1_22, %c0_23, %c0_24] : memref<1x18x18x8xf32, #tpu.memory_space<vmem>>, vector<1x16x16x8xf32>
    %24 = vector.shape_cast %23 : vector<1x16x16x8xf32> to vector<16x16x8xf32>
    %25 = vector.shape_cast %24 : vector<16x16x8xf32> to vector<256x8xf32>
    %c3 = arith.constant 3 : index
    %c0_25 = arith.constant 0 : index
    %c0_26 = arith.constant 0 : index
    %26 = vector.load %arg3[%c3, %c0_25, %c0_26] : memref<9x8x128xf32, #tpu.memory_space<vmem>>, vector<1x8x128xf32>
    %27 = vector.shape_cast %26 : vector<1x8x128xf32> to vector<8x128xf32>
    %cst_27 = arith.constant dense<0.000000e+00> : vector<256x128xf32>
    %28 = tpu.matmul %25, %27, %cst_27 {dimension_numbers = #tpu.dot_dimension_numbers<[1], [0], [0], [1], [0, 0, 1, 1], [], []>} : vector<256x8xf32>, vector<8x128xf32>, vector<256x128xf32> -> vector<256x128xf32>
    %29 = arith.addf %22, %28 : vector<256x128xf32>
    %c0_28 = arith.constant 0 : index
    %c1_29 = arith.constant 1 : index
    %c1_30 = arith.constant 1 : index
    %c0_31 = arith.constant 0 : index
    %30 = vector.load %arg2[%c0_28, %c1_29, %c1_30, %c0_31] : memref<1x18x18x8xf32, #tpu.memory_space<vmem>>, vector<1x16x16x8xf32>
    %31 = vector.shape_cast %30 : vector<1x16x16x8xf32> to vector<16x16x8xf32>
    %32 = vector.shape_cast %31 : vector<16x16x8xf32> to vector<256x8xf32>
    %c4 = arith.constant 4 : index
    %c0_32 = arith.constant 0 : index
    %c0_33 = arith.constant 0 : index
    %33 = vector.load %arg3[%c4, %c0_32, %c0_33] : memref<9x8x128xf32, #tpu.memory_space<vmem>>, vector<1x8x128xf32>
    %34 = vector.shape_cast %33 : vector<1x8x128xf32> to vector<8x128xf32>
    %cst_34 = arith.constant dense<0.000000e+00> : vector<256x128xf32>
    %35 = tpu.matmul %32, %34, %cst_34 {dimension_numbers = #tpu.dot_dimension_numbers<[1], [0], [0], [1], [0, 0, 1, 1], [], []>} : vector<256x8xf32>, vector<8x128xf32>, vector<256x128xf32> -> vector<256x128xf32>
    %36 = arith.addf %29, %35 : vector<256x128xf32>
    %c0_35 = arith.constant 0 : index
    %c1_36 = arith.constant 1 : index
    %c2_37 = arith.constant 2 : index
    %c0_38 = arith.constant 0 : index
    %37 = vector.load %arg2[%c0_35, %c1_36, %c2_37, %c0_38] : memref<1x18x18x8xf32, #tpu.memory_space<vmem>>, vector<1x16x16x8xf32>
    %38 = vector.shape_cast %37 : vector<1x16x16x8xf32> to vector<16x16x8xf32>
    %39 = vector.shape_cast %38 : vector<16x16x8xf32> to vector<256x8xf32>
    %c5 = arith.constant 5 : index
    %c0_39 = arith.constant 0 : index
    %c0_40 = arith.constant 0 : index
    %40 = vector.load %arg3[%c5, %c0_39, %c0_40] : memref<9x8x128xf32, #tpu.memory_space<vmem>>, vector<1x8x128xf32>
    %41 = vector.shape_cast %40 : vector<1x8x128xf32> to vector<8x128xf32>
    %cst_41 = arith.constant dense<0.000000e+00> : vector<256x128xf32>
    %42 = tpu.matmul %39, %41, %cst_41 {dimension_numbers = #tpu.dot_dimension_numbers<[1], [0], [0], [1], [0, 0, 1, 1], [], []>} : vector<256x8xf32>, vector<8x128xf32>, vector<256x128xf32> -> vector<256x128xf32>
    %43 = arith.addf %36, %42 : vector<256x128xf32>
    %c0_42 = arith.constant 0 : index
    %c2_43 = arith.constant 2 : index
    %c0_44 = arith.constant 0 : index
    %c0_45 = arith.constant 0 : index
    %44 = vector.load %arg2[%c0_42, %c2_43, %c0_44, %c0_45] : memref<1x18x18x8xf32, #tpu.memory_space<vmem>>, vector<1x16x16x8xf32>
    %45 = vector.shape_cast %44 : vector<1x16x16x8xf32> to vector<16x16x8xf32>
    %46 = vector.shape_cast %45 : vector<16x16x8xf32> to vector<256x8xf32>
    %c6 = arith.constant 6 : index
    %c0_46 = arith.constant 0 : index
    %c0_47 = arith.constant 0 : index
    %47 = vector.load %arg3[%c6, %c0_46, %c0_47] : memref<9x8x128xf32, #tpu.memory_space<vmem>>, vector<1x8x128xf32>
    %48 = vector.shape_cast %47 : vector<1x8x128xf32> to vector<8x128xf32>
    %cst_48 = arith.constant dense<0.000000e+00> : vector<256x128xf32>
    %49 = tpu.matmul %46, %48, %cst_48 {dimension_numbers = #tpu.dot_dimension_numbers<[1], [0], [0], [1], [0, 0, 1, 1], [], []>} : vector<256x8xf32>, vector<8x128xf32>, vector<256x128xf32> -> vector<256x128xf32>
    %50 = arith.addf %43, %49 : vector<256x128xf32>
    %c0_49 = arith.constant 0 : index
    %c2_50 = arith.constant 2 : index
    %c1_51 = arith.constant 1 : index
    %c0_52 = arith.constant 0 : index
    %51 = vector.load %arg2[%c0_49, %c2_50, %c1_51, %c0_52] : memref<1x18x18x8xf32, #tpu.memory_space<vmem>>, vector<1x16x16x8xf32>
    %52 = vector.shape_cast %51 : vector<1x16x16x8xf32> to vector<16x16x8xf32>
    %53 = vector.shape_cast %52 : vector<16x16x8xf32> to vector<256x8xf32>
    %c7 = arith.constant 7 : index
    %c0_53 = arith.constant 0 : index
    %c0_54 = arith.constant 0 : index
    %54 = vector.load %arg3[%c7, %c0_53, %c0_54] : memref<9x8x128xf32, #tpu.memory_space<vmem>>, vector<1x8x128xf32>
    %55 = vector.shape_cast %54 : vector<1x8x128xf32> to vector<8x128xf32>
    %cst_55 = arith.constant dense<0.000000e+00> : vector<256x128xf32>
    %56 = tpu.matmul %53, %55, %cst_55 {dimension_numbers = #tpu.dot_dimension_numbers<[1], [0], [0], [1], [0, 0, 1, 1], [], []>} : vector<256x8xf32>, vector<8x128xf32>, vector<256x128xf32> -> vector<256x128xf32>
    %57 = arith.addf %50, %56 : vector<256x128xf32>
    %c0_56 = arith.constant 0 : index
    %c2_57 = arith.constant 2 : index
    %c2_58 = arith.constant 2 : index
    %c0_59 = arith.constant 0 : index
    %58 = vector.load %arg2[%c0_56, %c2_57, %c2_58, %c0_59] : memref<1x18x18x8xf32, #tpu.memory_space<vmem>>, vector<1x16x16x8xf32>
    %59 = vector.shape_cast %58 : vector<1x16x16x8xf32> to vector<16x16x8xf32>
    %60 = vector.shape_cast %59 : vector<16x16x8xf32> to vector<256x8xf32>
    %c8 = arith.constant 8 : index
    %c0_60 = arith.constant 0 : index
    %c0_61 = arith.constant 0 : index
    %61 = vector.load %arg3[%c8, %c0_60, %c0_61] : memref<9x8x128xf32, #tpu.memory_space<vmem>>, vector<1x8x128xf32>
    %62 = vector.shape_cast %61 : vector<1x8x128xf32> to vector<8x128xf32>
    %cst_62 = arith.constant dense<0.000000e+00> : vector<256x128xf32>
    %63 = tpu.matmul %60, %62, %cst_62 {dimension_numbers = #tpu.dot_dimension_numbers<[1], [0], [0], [1], [0, 0, 1, 1], [], []>} : vector<256x8xf32>, vector<8x128xf32>, vector<256x128xf32> -> vector<256x128xf32>
    %64 = arith.addf %57, %63 : vector<256x128xf32>
    %65 = vector.shape_cast %64 : vector<256x128xf32> to vector<32x8x128xf32>
    %cst_63 = arith.constant dense<0.000000e+00> : vector<8x128xf32>
    %66 = vector.multi_reduction <add>, %65, %cst_63 [0] : vector<32x8x128xf32> to vector<8x128xf32>
    %67 = arith.mulf %64, %64 : vector<256x128xf32>
    %68 = vector.shape_cast %67 : vector<256x128xf32> to vector<32x8x128xf32>
    %cst_64 = arith.constant dense<0.000000e+00> : vector<8x128xf32>
    %69 = vector.multi_reduction <add>, %68, %cst_64 [0] : vector<32x8x128xf32> to vector<8x128xf32>
    %c0_65 = arith.constant 0 : index
    %c0_66 = arith.constant 0 : index
    %c0_67 = arith.constant 0 : index
    %70 = vector.load %arg5[%c0_65, %c0_66, %c0_67] : memref<1x8x128xf32, #tpu.memory_space<vmem>>, vector<1x8x128xf32>
    %71 = vector.shape_cast %66 : vector<8x128xf32> to vector<1x8x128xf32>
    %72 = arith.addf %70, %71 : vector<1x8x128xf32>
    %c0_68 = arith.constant 0 : index
    %c0_69 = arith.constant 0 : index
    %c0_70 = arith.constant 0 : index
    %73 = vector.load %arg5[%c0_68, %c0_69, %c0_70] : memref<1x8x128xf32, #tpu.memory_space<vmem>>, vector<1x8x128xf32>
    tpu.vector_store %arg5[%c0_68, %c0_69, %c0_70], %72 {strides = array<i32>} : memref<1x8x128xf32, #tpu.memory_space<vmem>>, vector<1x8x128xf32>,
    %c0_71 = arith.constant 0 : index
    %c0_72 = arith.constant 0 : index
    %c0_73 = arith.constant 0 : index
    %74 = vector.load %arg6[%c0_71, %c0_72, %c0_73] : memref<1x8x128xf32, #tpu.memory_space<vmem>>, vector<1x8x128xf32>
    %75 = vector.shape_cast %69 : vector<8x128xf32> to vector<1x8x128xf32>
    %76 = arith.addf %74, %75 : vector<1x8x128xf32>
    %c0_74 = arith.constant 0 : index
    %c0_75 = arith.constant 0 : index
    %c0_76 = arith.constant 0 : index
    %77 = vector.load %arg6[%c0_74, %c0_75, %c0_76] : memref<1x8x128xf32, #tpu.memory_space<vmem>>, vector<1x8x128xf32>
    tpu.vector_store %arg6[%c0_74, %c0_75, %c0_76], %76 {strides = array<i32>} : memref<1x8x128xf32, #tpu.memory_space<vmem>>, vector<1x8x128xf32>,
    %c0_77 = arith.constant 0 : index
    %c0_78 = arith.constant 0 : index
    %c0_79 = arith.constant 0 : index
    %78 = vector.load %arg4[%c0_77, %c0_78, %c0_79] : memref<1x256x128xf32, #tpu.memory_space<vmem>>, vector<1x256x128xf32>
    %79 = vector.shape_cast %78 : vector<1x256x128xf32> to vector<256x128xf32>
    %80 = vector.shape_cast %64 : vector<256x128xf32> to vector<1x256x128xf32>
    tpu.vector_store %arg4[%c0_77, %c0_78, %c0_79], %80 {strides = array<i32>} : memref<1x256x128xf32, #tpu.memory_space<vmem>>, vector<1x256x128xf32>,
    return
  }
  func.func @transform_0(%arg0: i32, %arg1: i32) -> (i32, i32, i32, i32) {
    %c1_i32 = arith.constant 1 : i32
    %0 = arith.muli %arg0, %c1_i32 : i32
    %1 = arith.addi %0, %arg1 : i32
    %c0_i32 = arith.constant 0 : i32
    %c0_i32_0 = arith.constant 0 : i32
    %c0_i32_1 = arith.constant 0 : i32
    %c0_i32_2 = arith.constant 0 : i32
    return %1, %c0_i32, %c0_i32_0, %c0_i32_1 : i32, i32, i32, i32
  }
  func.func @transform_1(%arg0: i32, %arg1: i32) -> (i32, i32, i32) {
    %c0_i32 = arith.constant 0 : i32
    %c0_i32_0 = arith.constant 0 : i32
    %c0_i32_1 = arith.constant 0 : i32
    %c0_i32_2 = arith.constant 0 : i32
    return %c0_i32, %c0_i32_0, %c0_i32_1 : i32, i32, i32
  }
  func.func @transform_2(%arg0: i32, %arg1: i32) -> (i32, i32, i32) {
    %c1_i32 = arith.constant 1 : i32
    %0 = arith.muli %arg0, %c1_i32 : i32
    %1 = arith.addi %0, %arg1 : i32
    %c0_i32 = arith.constant 0 : i32
    %c0_i32_0 = arith.constant 0 : i32
    %c0_i32_1 = arith.constant 0 : i32
    return %1, %c0_i32, %c0_i32_0 : i32, i32, i32
  }
  func.func @transform_3(%arg0: i32, %arg1: i32) -> (i32, i32, i32) {
    %c0_i32 = arith.constant 0 : i32
    %c0_i32_0 = arith.constant 0 : i32
    %c0_i32_1 = arith.constant 0 : i32
    return %arg0, %c0_i32, %c0_i32_0 : i32, i32, i32
  }
  func.func @transform_4(%arg0: i32, %arg1: i32) -> (i32, i32, i32) {
    %c0_i32 = arith.constant 0 : i32
    %c0_i32_0 = arith.constant 0 : i32
    %c0_i32_1 = arith.constant 0 : i32
    return %arg0, %c0_i32, %c0_i32_0 : i32, i32, i32
  }
}

module attributes {stable_mosaic.version = 11 : i64} {
  func.func @_normalize_kernel(%arg0: i32, %arg1: memref<2x256x128xf32, #tpu.memory_space<vmem>>, %arg2: memref<1x1x128xf32, #tpu.memory_space<vmem>>, %arg3: memref<1x1x128xf32, #tpu.memory_space<vmem>>, %arg4: memref<2x256x128xf32, #tpu.memory_space<vmem>>) attributes {dimension_semantics = [#tpu.dimension_semantics<parallel>], iteration_bounds = array<i64: 1>, scalar_prefetch = 0 : i64, scratch_operands = 0 : i64, tpu.core_type = #tpu.core_type<tc>, window_params = [{transform_indices = @transform_0, window_bounds = array<i64: 2, 256, 128>}, {pipeline_mode = #tpu.pipeline_mode<synchronous>, transform_indices = @transform_1, window_bounds = array<i64: 1, 1, 128>}, {pipeline_mode = #tpu.pipeline_mode<synchronous>, transform_indices = @transform_2, window_bounds = array<i64: 1, 1, 128>}, {transform_indices = @transform_3, window_bounds = array<i64: 2, 256, 128>}]} {
    %c0 = arith.constant 0 : index
    %c0_0 = arith.constant 0 : index
    %c0_1 = arith.constant 0 : index
    %0 = vector.load %arg1[%c0, %c0_0, %c0_1] : memref<2x256x128xf32, #tpu.memory_space<vmem>>, vector<2x256x128xf32>
    %c0_2 = arith.constant 0 : index
    %c0_3 = arith.constant 0 : index
    %c0_4 = arith.constant 0 : index
    %1 = vector.load %arg2[%c0_2, %c0_3, %c0_4] : memref<1x1x128xf32, #tpu.memory_space<vmem>>, vector<1x1x128xf32>
    %2 = vector.broadcast %1 : vector<1x1x128xf32> to vector<2x256x128xf32>
    %3 = arith.mulf %0, %2 : vector<2x256x128xf32>
    %c0_5 = arith.constant 0 : index
    %c0_6 = arith.constant 0 : index
    %c0_7 = arith.constant 0 : index
    %4 = vector.load %arg3[%c0_5, %c0_6, %c0_7] : memref<1x1x128xf32, #tpu.memory_space<vmem>>, vector<1x1x128xf32>
    %5 = vector.broadcast %4 : vector<1x1x128xf32> to vector<2x256x128xf32>
    %6 = arith.addf %3, %5 : vector<2x256x128xf32>
    %c0_8 = arith.constant 0 : index
    %c0_9 = arith.constant 0 : index
    %c0_10 = arith.constant 0 : index
    %7 = vector.load %arg4[%c0_8, %c0_9, %c0_10] : memref<2x256x128xf32, #tpu.memory_space<vmem>>, vector<2x256x128xf32>
    tpu.vector_store %arg4[%c0_8, %c0_9, %c0_10], %6 {strides = array<i32>} : memref<2x256x128xf32, #tpu.memory_space<vmem>>, vector<2x256x128xf32>,
    return
  }
  func.func @transform_0(%arg0: i32) -> (i32, i32, i32) {
    %c0_i32 = arith.constant 0 : i32
    %c0_i32_0 = arith.constant 0 : i32
    %c0_i32_1 = arith.constant 0 : i32
    return %arg0, %c0_i32, %c0_i32_0 : i32, i32, i32
  }
  func.func @transform_1(%arg0: i32) -> (i32, i32, i32) {
    %c0_i32 = arith.constant 0 : i32
    %c0_i32_0 = arith.constant 0 : i32
    %c0_i32_1 = arith.constant 0 : i32
    %c0_i32_2 = arith.constant 0 : i32
    return %c0_i32, %c0_i32_0, %c0_i32_1 : i32, i32, i32
  }
  func.func @transform_2(%arg0: i32) -> (i32, i32, i32) {
    %c0_i32 = arith.constant 0 : i32
    %c0_i32_0 = arith.constant 0 : i32
    %c0_i32_1 = arith.constant 0 : i32
    %c0_i32_2 = arith.constant 0 : i32
    return %c0_i32, %c0_i32_0, %c0_i32_1 : i32, i32, i32
  }
  func.func @transform_3(%arg0: i32) -> (i32, i32, i32) {
    %c0_i32 = arith.constant 0 : i32
    %c0_i32_0 = arith.constant 0 : i32
    %c0_i32_1 = arith.constant 0 : i32
    return %arg0, %c0_i32, %c0_i32_0 : i32, i32, i32
  }
}

</mosaic_0001>

<llo_original>
// kernel: conv2d_bn.3
$region0: #{conv2d_bn.3}
  #allocation0 [shape = 'u32[]', space=smem, size = 0x4, offset = 0x4, fixed_abs, tag = 'smem constant byte address 0x4 - core index']
  #allocation1 [shape = 'u32[144,128]{1,0:T(1,128)}', space=vmem, size = 0x12000, scoped, tag = 'internal scratch']
  %s0 = inlined_call_operand.vmem [shape: f32[2,256,128], index: 0, kind: input, shape index: {}, may-alias: {0,3}]
  %s1 = inlined_call_operand.vmem [shape: f32[1,1,128], index: 1, kind: input, shape index: {}]
  %s2 = inlined_call_operand.vmem [shape: f32[1,1,128], index: 2, kind: input, shape index: {}]
  %s3 = inlined_call_operand.vmem [shape: f32[2,256,128], index: 3, kind: output, shape index: {}, may-alias: {0,3}]
  %s4 = sld [smem:[#allocation0]]
  $region22: #{conv2d_bn.3} parent=0
    _
  %s6 = ssub.s32 1, %s4
  %s7 = scalar_select 0, %s6, %s4
  // Predicated region
  $region2: #{conv2d_bn.3} parent=0 // pred_check
    _
  $region3: #{conv2d_bn.3} parent=0 // pred_check_branch
    %9 = sbr.rel (0) target = $region5
  $region4: #{conv2d_bn.3} parent=0 // pred_region
    _
  $region5: #{conv2d_bn.3} parent=0 // pred_fallthru
    _
  // Predicated region
  $region6: #{conv2d_bn.3} parent=0 // pred_check
    _
  $region7: #{conv2d_bn.3} parent=0 // pred_check_branch
    %11 = sbr.rel (0) target = $region9
  $region8: #{conv2d_bn.3} parent=0 // pred_region
    _
  $region9: #{conv2d_bn.3} parent=0 // pred_fallthru
    _
  // Predicated region
  $region10: #{conv2d_bn.3} parent=0 // pred_check
    _
  $region11: #{conv2d_bn.3} parent=0 // pred_check_branch
    %13 = sbr.rel (0) target = $region13
  $region12: #{conv2d_bn.3} parent=0 // pred_region
    _
  $region13: #{conv2d_bn.3} parent=0 // pred_fallthru
    _
  %v14 = vld [vmem:[%s0] sm:$0xff]
  %v15 = vld [vmem:[%s0 + $0x8] sm:$0xff]
  %v16 = vld [vmem:[%s0 + $0x10] sm:$0xff]
  %v17 = vld [vmem:[%s0 + $0x18] sm:$0xff]
  %v18 = vld [vmem:[%s0 + $0x20] sm:$0xff]
  %v19 = vld [vmem:[%s0 + $0x28] sm:$0xff]
  %v20 = vld [vmem:[%s0 + $0x30] sm:$0xff]
  %v21 = vld [vmem:[%s0 + $0x38] sm:$0xff]
  %v22 = vld [vmem:[%s0 + $0x40] sm:$0xff]
  %v23 = vld [vmem:[%s0 + $0x48] sm:$0xff]
  %v24 = vld [vmem:[%s0 + $0x50] sm:$0xff]
  %v25 = vld [vmem:[%s0 + $0x58] sm:$0xff]
  %v26 = vld [vmem:[%s0 + $0x60] sm:$0xff]
  %v27 = vld [vmem:[%s0 + $0x68] sm:$0xff]
  %v28 = vld [vmem:[%s0 + $0x70] sm:$0xff]
  %v29 = vld [vmem:[%s0 + $0x78] sm:$0xff]
  %v30 = vld [vmem:[%s0 + $0x80] sm:$0xff]
  %v31 = vld [vmem:[%s0 + $0x88] sm:$0xff]
  %v32 = vld [vmem:[%s0 + $0x90] sm:$0xff]
  %v33 = vld [vmem:[%s0 + $0x98] sm:$0xff]
  %v34 = vld [vmem:[%s0 + $0xa0] sm:$0xff]
  %v35 = vld [vmem:[%s0 + $0xa8] sm:$0xff]
  %v36 = vld [vmem:[%s0 + $0xb0] sm:$0xff]
  %v37 = vld [vmem:[%s0 + $0xb8] sm:$0xff]
  %v38 = vld [vmem:[%s0 + $0xc0] sm:$0xff]
  %v39 = vld [vmem:[%s0 + $0xc8] sm:$0xff]
  %v40 = vld [vmem:[%s0 + $0xd0] sm:$0xff]
  %v41 = vld [vmem:[%s0 + $0xd8] sm:$0xff]
  %v42 = vld [vmem:[%s0 + $0xe0] sm:$0xff]
  %v43 = vld [vmem:[%s0 + $0xe8] sm:$0xff]
  %v44 = vld [vmem:[%s0 + $0xf0] sm:$0xff]
  %v45 = vld [vmem:[%s0 + $0xf8] sm:$0xff]
  %v46 = vld [vmem:[%s0 + $0x100] sm:$0xff]
  %v47 = vld [vmem:[%s0 + $0x108] sm:$0xff]
  %v48 = vld [vmem:[%s0 + $0x110] sm:$0xff]
  %v49 = vld [vmem:[%s0 + $0x118] sm:$0xff]
  %v50 = vld [vmem:[%s0 + $0x120] sm:$0xff]
  %v51 = vld [vmem:[%s0 + $0x128] sm:$0xff]
  %v52 = vld [vmem:[%s0 + $0x130] sm:$0xff]
  %v53 = vld [vmem:[%s0 + $0x138] sm:$0xff]
  %v54 = vld [vmem:[%s0 + $0x140] sm:$0xff]
  %v55 = vld [vmem:[%s0 + $0x148] sm:$0xff]
  %v56 = vld [vmem:[%s0 + $0x150] sm:$0xff]
  %v57 = vld [vmem:[%s0 + $0x158] sm:$0xff]
  %v58 = vld [vmem:[%s0 + $0x160] sm:$0xff]
  %v59 = vld [vmem:[%s0 + $0x168] sm:$0xff]
  %v60 = vld [vmem:[%s0 + $0x170] sm:$0xff]
  %v61 = vld [vmem:[%s0 + $0x178] sm:$0xff]
  %v62 = vld [vmem:[%s0 + $0x180] sm:$0xff]
  %v63 = vld [vmem:[%s0 + $0x188] sm:$0xff]
  %v64 = vld [vmem:[%s0 + $0x190] sm:$0xff]
  %v65 = vld [vmem:[%s0 + $0x198] sm:$0xff]
  %v66 = vld [vmem:[%s0 + $0x1a0] sm:$0xff]
  %v67 = vld [vmem:[%s0 + $0x1a8] sm:$0xff]
  %v68 = vld [vmem:[%s0 + $0x1b0] sm:$0xff]
  %v69 = vld [vmem:[%s0 + $0x1b8] sm:$0xff]
  %v70 = vld [vmem:[%s0 + $0x1c0] sm:$0xff]
  %v71 = vld [vmem:[%s0 + $0x1c8] sm:$0xff]
  %v72 = vld [vmem:[%s0 + $0x1d0] sm:$0xff]
  %v73 = vld [vmem:[%s0 + $0x1d8] sm:$0xff]
  %v74 = vld [vmem:[%s0 + $0x1e0] sm:$0xff]
  %v75 = vld [vmem:[%s0 + $0x1e8] sm:$0xff]
  %v76 = vld [vmem:[%s0 + $0x1f0] sm:$0xff]
  %v77 = vld [vmem:[%s0 + $0x1f8] sm:$0xff]
  %v78 = vld [vmem:[%s1] sm:$0x1]
  %v80 = vlaneseq
  %v81 = vshrl.u32 %v80, 7
  %v82 = vsub.s32 0, %v81
  %v83 = vrot.slane %v78, %v82
  %v85 = vmul.f32 %v14, %v83
  %v86 = vmul.f32 %v15, %v83
  %v87 = vmul.f32 %v16, %v83
  %v88 = vmul.f32 %v17, %v83
  %v89 = vmul.f32 %v18, %v83
  %v90 = vmul.f32 %v19, %v83
  %v91 = vmul.f32 %v20, %v83
  %v92 = vmul.f32 %v21, %v83
  %v93 = vmul.f32 %v22, %v83
  %v94 = vmul.f32 %v23, %v83
  %v95 = vmul.f32 %v24, %v83
  %v96 = vmul.f32 %v25, %v83
  %v97 = vmul.f32 %v26, %v83
  %v98 = vmul.f32 %v27, %v83
  %v99 = vmul.f32 %v28, %v83
  %v100 = vmul.f32 %v29, %v83
  %v101 = vmul.f32 %v30, %v83
  %v102 = vmul.f32 %v31, %v83
  %v103 = vmul.f32 %v32, %v83
  %v104 = vmul.f32 %v33, %v83
  %v105 = vmul.f32 %v34, %v83
  %v106 = vmul.f32 %v35, %v83
  %v107 = vmul.f32 %v36, %v83
  %v108 = vmul.f32 %v37, %v83
  %v109 = vmul.f32 %v38, %v83
  %v110 = vmul.f32 %v39, %v83
  %v111 = vmul.f32 %v40, %v83
  %v112 = vmul.f32 %v41, %v83
  %v113 = vmul.f32 %v42, %v83
  %v114 = vmul.f32 %v43, %v83
  %v115 = vmul.f32 %v44, %v83
  %v116 = vmul.f32 %v45, %v83
  %v117 = vmul.f32 %v46, %v83
  %v118 = vmul.f32 %v47, %v83
  %v119 = vmul.f32 %v48, %v83
  %v120 = vmul.f32 %v49, %v83
  %v121 = vmul.f32 %v50, %v83
  %v122 = vmul.f32 %v51, %v83
  %v123 = vmul.f32 %v52, %v83
  %v124 = vmul.f32 %v53, %v83
  %v125 = vmul.f32 %v54, %v83
  %v126 = vmul.f32 %v55, %v83
  %v127 = vmul.f32 %v56, %v83
  %v128 = vmul.f32 %v57, %v83
  %v129 = vmul.f32 %v58, %v83
  %v130 = vmul.f32 %v59, %v83
  %v131 = vmul.f32 %v60, %v83
  %v132 = vmul.f32 %v61, %v83
  %v133 = vmul.f32 %v62, %v83
  %v134 = vmul.f32 %v63, %v83
  %v135 = vmul.f32 %v64, %v83
  %v136 = vmul.f32 %v65, %v83
  %v137 = vmul.f32 %v66, %v83
  %v138 = vmul.f32 %v67, %v83
  %v139 = vmul.f32 %v68, %v83
  %v140 = vmul.f32 %v69, %v83
  %v141 = vmul.f32 %v70, %v83
  %v142 = vmul.f32 %v71, %v83
  %v143 = vmul.f32 %v72, %v83
  %v144 = vmul.f32 %v73, %v83
  %v145 = vmul.f32 %v74, %v83
  %v146 = vmul.f32 %v75, %v83
  %v147 = vmul.f32 %v76, %v83
  %v148 = vmul.f32 %v77, %v83
  %v149 = vld [vmem:[%s2] sm:$0x1]
  %v151 = vlaneseq
  %v152 = vshrl.u32 %v151, 7
  %v153 = vsub.s32 0, %v152
  %v154 = vrot.slane %v149, %v153
  %v156 = vadd.f32 %v85, %v154
  %v157 = vadd.f32 %v86, %v154
  %v158 = vadd.f32 %v87, %v154
  %v159 = vadd.f32 %v88, %v154
  %v160 = vadd.f32 %v89, %v154
  %v161 = vadd.f32 %v90, %v154
  %v162 = vadd.f32 %v91, %v154
  %v163 = vadd.f32 %v92, %v154
  %v164 = vadd.f32 %v93, %v154
  %v165 = vadd.f32 %v94, %v154
  %v166 = vadd.f32 %v95, %v154
  %v167 = vadd.f32 %v96, %v154
  %v168 = vadd.f32 %v97, %v154
  %v169 = vadd.f32 %v98, %v154
  %v170 = vadd.f32 %v99, %v154
  %v171 = vadd.f32 %v100, %v154
  %v172 = vadd.f32 %v101, %v154
  %v173 = vadd.f32 %v102, %v154
  %v174 = vadd.f32 %v103, %v154
  %v175 = vadd.f32 %v104, %v154
  %v176 = vadd.f32 %v105, %v154
  %v177 = vadd.f32 %v106, %v154
  %v178 = vadd.f32 %v107, %v154
  %v179 = vadd.f32 %v108, %v154
  %v180 = vadd.f32 %v109, %v154
  %v181 = vadd.f32 %v110, %v154
  %v182 = vadd.f32 %v111, %v154
  %v183 = vadd.f32 %v112, %v154
  %v184 = vadd.f32 %v113, %v154
  %v185 = vadd.f32 %v114, %v154
  %v186 = vadd.f32 %v115, %v154
  %v187 = vadd.f32 %v116, %v154
  %v188 = vadd.f32 %v117, %v154
  %v189 = vadd.f32 %v118, %v154
  %v190 = vadd.f32 %v119, %v154
  %v191 = vadd.f32 %v120, %v154
  %v192 = vadd.f32 %v121, %v154
  %v193 = vadd.f32 %v122, %v154
  %v194 = vadd.f32 %v123, %v154
  %v195 = vadd.f32 %v124, %v154
  %v196 = vadd.f32 %v125, %v154
  %v197 = vadd.f32 %v126, %v154
  %v198 = vadd.f32 %v127, %v154
  %v199 = vadd.f32 %v128, %v154
  %v200 = vadd.f32 %v129, %v154
  %v201 = vadd.f32 %v130, %v154
  %v202 = vadd.f32 %v131, %v154
  %v203 = vadd.f32 %v132, %v154
  %v204 = vadd.f32 %v133, %v154
  %v205 = vadd.f32 %v134, %v154
  %v206 = vadd.f32 %v135, %v154
  %v207 = vadd.f32 %v136, %v154
  %v208 = vadd.f32 %v137, %v154
  %v209 = vadd.f32 %v138, %v154
  %v210 = vadd.f32 %v139, %v154
  %v211 = vadd.f32 %v140, %v154
  %v212 = vadd.f32 %v141, %v154
  %v213 = vadd.f32 %v142, %v154
  %v214 = vadd.f32 %v143, %v154
  %v215 = vadd.f32 %v144, %v154
  %v216 = vadd.f32 %v145, %v154
  %v217 = vadd.f32 %v146, %v154
  %v218 = vadd.f32 %v147, %v154
  %v219 = vadd.f32 %v148, %v154
  %220 = vst [vmem:[%s3] sm:$0xff] %v156
  %221 = vst [vmem:[%s3 + $0x8] sm:$0xff] %v157
  %222 = vst [vmem:[%s3 + $0x10] sm:$0xff] %v158
  %223 = vst [vmem:[%s3 + $0x18] sm:$0xff] %v159
  %224 = vst [vmem:[%s3 + $0x20] sm:$0xff] %v160
  %225 = vst [vmem:[%s3 + $0x28] sm:$0xff] %v161
  %226 = vst [vmem:[%s3 + $0x30] sm:$0xff] %v162
  %227 = vst [vmem:[%s3 + $0x38] sm:$0xff] %v163
  %228 = vst [vmem:[%s3 + $0x40] sm:$0xff] %v164
  %229 = vst [vmem:[%s3 + $0x48] sm:$0xff] %v165
  %230 = vst [vmem:[%s3 + $0x50] sm:$0xff] %v166
  %231 = vst [vmem:[%s3 + $0x58] sm:$0xff] %v167
  %232 = vst [vmem:[%s3 + $0x60] sm:$0xff] %v168
  %233 = vst [vmem:[%s3 + $0x68] sm:$0xff] %v169
  %234 = vst [vmem:[%s3 + $0x70] sm:$0xff] %v170
  %235 = vst [vmem:[%s3 + $0x78] sm:$0xff] %v171
  %236 = vst [vmem:[%s3 + $0x80] sm:$0xff] %v172
  %237 = vst [vmem:[%s3 + $0x88] sm:$0xff] %v173
  %238 = vst [vmem:[%s3 + $0x90] sm:$0xff] %v174
  %239 = vst [vmem:[%s3 + $0x98] sm:$0xff] %v175
  %240 = vst [vmem:[%s3 + $0xa0] sm:$0xff] %v176
  %241 = vst [vmem:[%s3 + $0xa8] sm:$0xff] %v177
  %242 = vst [vmem:[%s3 + $0xb0] sm:$0xff] %v178
  %243 = vst [vmem:[%s3 + $0xb8] sm:$0xff] %v179
  %244 = vst [vmem:[%s3 + $0xc0] sm:$0xff] %v180
  %245 = vst [vmem:[%s3 + $0xc8] sm:$0xff] %v181
  %246 = vst [vmem:[%s3 + $0xd0] sm:$0xff] %v182
  %247 = vst [vmem:[%s3 + $0xd8] sm:$0xff] %v183
  %248 = vst [vmem:[%s3 + $0xe0] sm:$0xff] %v184
  %249 = vst [vmem:[%s3 + $0xe8] sm:$0xff] %v185
  %250 = vst [vmem:[%s3 + $0xf0] sm:$0xff] %v186
  %251 = vst [vmem:[%s3 + $0xf8] sm:$0xff] %v187
  %252 = vst [vmem:[%s3 + $0x100] sm:$0xff] %v188
  %253 = vst [vmem:[%s3 + $0x108] sm:$0xff] %v189
  %254 = vst [vmem:[%s3 + $0x110] sm:$0xff] %v190
  %255 = vst [vmem:[%s3 + $0x118] sm:$0xff] %v191
  %256 = vst [vmem:[%s3 + $0x120] sm:$0xff] %v192
  %257 = vst [vmem:[%s3 + $0x128] sm:$0xff] %v193
  %258 = vst [vmem:[%s3 + $0x130] sm:$0xff] %v194
  %259 = vst [vmem:[%s3 + $0x138] sm:$0xff] %v195
  %260 = vst [vmem:[%s3 + $0x140] sm:$0xff] %v196
  %261 = vst [vmem:[%s3 + $0x148] sm:$0xff] %v197
  %262 = vst [vmem:[%s3 + $0x150] sm:$0xff] %v198
  %263 = vst [vmem:[%s3 + $0x158] sm:$0xff] %v199
  %264 = vst [vmem:[%s3 + $0x160] sm:$0xff] %v200
  %265 = vst [vmem:[%s3 + $0x168] sm:$0xff] %v201
  %266 = vst [vmem:[%s3 + $0x170] sm:$0xff] %v202
  %267 = vst [vmem:[%s3 + $0x178] sm:$0xff] %v203
  %268 = vst [vmem:[%s3 + $0x180] sm:$0xff] %v204
  %269 = vst [vmem:[%s3 + $0x188] sm:$0xff] %v205
  %270 = vst [vmem:[%s3 + $0x190] sm:$0xff] %v206
  %271 = vst [vmem:[%s3 + $0x198] sm:$0xff] %v207
  %272 = vst [vmem:[%s3 + $0x1a0] sm:$0xff] %v208
  %273 = vst [vmem:[%s3 + $0x1a8] sm:$0xff] %v209
  %274 = vst [vmem:[%s3 + $0x1b0] sm:$0xff] %v210
  %275 = vst [vmem:[%s3 + $0x1b8] sm:$0xff] %v211
  %276 = vst [vmem:[%s3 + $0x1c0] sm:$0xff] %v212
  %277 = vst [vmem:[%s3 + $0x1c8] sm:$0xff] %v213
  %278 = vst [vmem:[%s3 + $0x1d0] sm:$0xff] %v214
  %279 = vst [vmem:[%s3 + $0x1d8] sm:$0xff] %v215
  %280 = vst [vmem:[%s3 + $0x1e0] sm:$0xff] %v216
  %281 = vst [vmem:[%s3 + $0x1e8] sm:$0xff] %v217
  %282 = vst [vmem:[%s3 + $0x1f0] sm:$0xff] %v218
  %283 = vst [vmem:[%s3 + $0x1f8] sm:$0xff] %v219
  // Predicated region
  $region14: #{conv2d_bn.3} parent=0 // pred_check
    _
  $region15: #{conv2d_bn.3} parent=0 // pred_check_branch
    %285 = sbr.rel (0) target = $region17
  $region16: #{conv2d_bn.3} parent=0 // pred_region
    _
  $region17: #{conv2d_bn.3} parent=0 // pred_fallthru
    _
  // Predicated region
  $region18: #{conv2d_bn.3} parent=0 // pred_check
    _
  $region19: #{conv2d_bn.3} parent=0 // pred_check_branch
    %287 = sbr.rel (0) target = $region21
  $region20: #{conv2d_bn.3} parent=0 // pred_region
    _
  $region21: #{conv2d_bn.3} parent=0 // pred_fallthru
    _

// kernel: conv2d_bn.2
$region0: #{conv2d_bn.2}
  #allocation0 [shape = 'u32[]', space=smem, size = 0x4, offset = 0x4, fixed_abs, tag = 'smem constant byte address 0x4 - core index']
  #allocation1 [shape = 'u32[144,128]{1,0:T(1,128)}', space=vmem, size = 0x12000, scoped, tag = 'internal scratch']
  %s0 = inlined_call_operand.vmem [shape: f32[2,18,18,8], index: 0, kind: input, shape index: {}]
  %s1 = inlined_call_operand.vmem [shape: f32[9,8,128], index: 1, kind: input, shape index: {}]
  %s2 = inlined_call_operand.vmem [shape: f32[2,256,128], index: 2, kind: output, shape index: {0}]
  %s3 = inlined_call_operand.vmem [shape: f32[2,8,128], index: 3, kind: output, shape index: {1}]
  %s4 = inlined_call_operand.vmem [shape: f32[2,8,128], index: 4, kind: output, shape index: {2}]
  %5 = xla_tuple %s2, %s3, %s4
  %s6 = sld [smem:[#allocation0]]
  $region61: #{conv2d_bn.2} parent=0
    _
  %s8 = ssub.s32 1, %s6
  %s9 = scalar_select 0, %s8, %s6
  loop: start=0, step=1, limit=4
  $region2: #{conv2d_bn.2} parent=0 // loop_pre_header
    _
  $region3: #{conv2d_bn.2} parent=0 // loop_header
    %s11 = sphi 0, %s15
    %p12 = scmp.ge.s32.totalorder %s11, 4
    %s18 = sphi 0, %s30
    %s19 = sphi 0, %s26
    %s20 = sphi 0, %s18
    %s21 = sphi 0, %s19
    %s22 = sphi 0, %s20
    %s23 = sphi 0, %s21
    %s35 = sphi 0, %s37
    %s38 = sphi 0, %s35
    %s39 = sphi 0, %s38
    %s55 = sphi 0, %s39
    %s59 = sphi 0, %s59
    %s61 = sphi 0, %s59
    %s62 = sphi 0, %s61
    %s76 = sphi 0, %s62
    %s84 = sphi 0, %s86
    %s87 = sphi 0, %s84
    %s88 = sphi 0, %s87
    %s104 = sphi 0, %s88
    %s110 = sphi 0, %s112
    %s113 = sphi 0, %s110
    %s114 = sphi 0, %s113
    %s130 = sphi 0, %s114
    %s136 = sphi 0, %s138
    %s139 = sphi 0, %s136
    %s140 = sphi 0, %s139
    %s156 = sphi 0, %s140
  $region4: #{conv2d_bn.2} parent=0 // loop_header_branch
    %14 = sbr.rel (%p12) target = $region8
  $region5: #{conv2d_bn.2} parent=0 // loop_body
    %s16 = ssub.s32 %s11, 1
    %s17 = ssub.s32 %s11, 2
    %s24 = sadd.s32 1, %s19
    %p25 = scmp.ge.s32.totalorder %s24, 1
    %s26 = scalar_select %p25, 0, %s24
    %s27 = sadd.s32 1, %s18
    %s28 = scalar_select %p25, %s27, %s18
    %p29 = scmp.ge.s32.totalorder %s28, 2
    %s30 = scalar_select %p29, 0, %s28
    %s31 = sadd.s32 %s18, %s19
    %s32 = sadd.s32 %s30, %s26
    %s33 = ssub.s32 %s31, %s32
    %p34 = scmp.eq.s32.totalorder %s33, 0
    %s36 = sadd.s32 %s35, 1
    %s37 = scalar_select %p34, %s35, %s36
    %p40 = pneg %p34
    %p41 = scmp.eq.s32.totalorder %s11, 1
    %p42 = por %p40, %p41
    %p43 = scmp.ne.s32.totalorder %s35, %s38
    %p44 = scmp.eq.s32.totalorder %s11, 0
    %p45 = por %p43, %p44
    %p46 = scmp.ne.s32.totalorder %s35, %s38
    %p47 = scmp.eq.s32.totalorder %s16, 1
    %p48 = por %p46, %p47
    %p49 = scmp.ne.s32.totalorder %s38, %s39
    %p50 = scmp.eq.s32.totalorder %s16, 0
    %p51 = por %p49, %p50
    %p52 = scmp.ne.s32.totalorder %s38, %s39
    %p53 = scmp.eq.s32.totalorder %s17, 1
    %p54 = por %p52, %p53
    %p56 = scmp.ne.s32.totalorder %s39, %s55
    %p57 = scmp.eq.s32.totalorder %s17, 0
    %p58 = por %p56, %p57
    %s60 = sadd.s32 %s59, 1
    %p63 = scmp.eq.s32.totalorder %s11, 1
    %p64 = scmp.ne.s32.totalorder %s59, %s61
    %p65 = scmp.eq.s32.totalorder %s11, 0
    %p66 = por %p64, %p65
    %p67 = scmp.ne.s32.totalorder %s59, %s61
    %p68 = scmp.eq.s32.totalorder %s16, 1
    %p69 = por %p67, %p68
    %p70 = scmp.ne.s32.totalorder %s61, %s62
    %p71 = scmp.eq.s32.totalorder %s16, 0
    %p72 = por %p70, %p71
    %p73 = scmp.ne.s32.totalorder %s61, %s62
    %p74 = scmp.eq.s32.totalorder %s17, 1
    %p75 = por %p73, %p74
    %p77 = scmp.ne.s32.totalorder %s62, %s76
    %p78 = scmp.eq.s32.totalorder %s17, 0
    %p79 = por %p77, %p78
    %s80 = sadd.s32 %s18, %s19
    %s81 = sadd.s32 %s30, %s26
    %s82 = ssub.s32 %s80, %s81
    %p83 = scmp.eq.s32.totalorder %s82, 0
    %s85 = sadd.s32 %s84, 1
    %s86 = scalar_select %p83, %s84, %s85
    %p89 = pneg %p83
    %p90 = scmp.eq.s32.totalorder %s11, 1
    %p91 = por %p89, %p90
    %p92 = scmp.ne.s32.totalorder %s84, %s87
    %p93 = scmp.eq.s32.totalorder %s11, 0
    %p94 = por %p92, %p93
    %p95 = scmp.ne.s32.totalorder %s84, %s87
    %p96 = scmp.eq.s32.totalorder %s16, 1
    %p97 = por %p95, %p96
    %p98 = scmp.ne.s32.totalorder %s87, %s88
    %p99 = scmp.eq.s32.totalorder %s16, 0
    %p100 = por %p98, %p99
    %p101 = scmp.ne.s32.totalorder %s87, %s88
    %p102 = scmp.eq.s32.totalorder %s17, 1
    %p103 = por %p101, %p102
    %p105 = scmp.ne.s32.totalorder %s88, %s104
    %p106 = scmp.eq.s32.totalorder %s17, 0
    %p107 = por %p105, %p106
    %s108 = ssub.s32 %s18, %s30
    %p109 = scmp.eq.s32.totalorder %s108, 0
    %s111 = sadd.s32 %s110, 1
    %s112 = scalar_select %p109, %s110, %s111
    %p115 = pneg %p109
    %p116 = scmp.eq.s32.totalorder %s11, 1
    %p117 = por %p115, %p116
    %p118 = scmp.ne.s32.totalorder %s110, %s113
    %p119 = scmp.eq.s32.totalorder %s11, 0
    %p120 = por %p118, %p119
    %p121 = scmp.ne.s32.totalorder %s110, %s113
    %p122 = scmp.eq.s32.totalorder %s16, 1
    %p123 = por %p121, %p122
    %p124 = scmp.ne.s32.totalorder %s113, %s114
    %p125 = scmp.eq.s32.totalorder %s16, 0
    %p126 = por %p124, %p125
    %p127 = scmp.ne.s32.totalorder %s113, %s114
    %p128 = scmp.eq.s32.totalorder %s17, 1
    %p129 = por %p127, %p128
    %p131 = scmp.ne.s32.totalorder %s114, %s130
    %p132 = scmp.eq.s32.totalorder %s17, 0
    %p133 = por %p131, %p132
    %s134 = ssub.s32 %s18, %s30
    %p135 = scmp.eq.s32.totalorder %s134, 0
    %s137 = sadd.s32 %s136, 1
    %s138 = scalar_select %p135, %s136, %s137
    %p141 = pneg %p135
    %p142 = scmp.eq.s32.totalorder %s11, 1
    %p143 = por %p141, %p142
    %p144 = scmp.ne.s32.totalorder %s136, %s139
    %p145 = scmp.eq.s32.totalorder %s11, 0
    %p146 = por %p144, %p145
    %p147 = scmp.ne.s32.totalorder %s136, %s139
    %p148 = scmp.eq.s32.totalorder %s16, 1
    %p149 = por %p147, %p148
    %p150 = scmp.ne.s32.totalorder %s139, %s140
    %p151 = scmp.eq.s32.totalorder %s16, 0
    %p152 = por %p150, %p151
    %p153 = scmp.ne.s32.totalorder %s139, %s140
    %p154 = scmp.eq.s32.totalorder %s17, 1
    %p155 = por %p153, %p154
    %p157 = scmp.ne.s32.totalorder %s140, %s156
    %p158 = scmp.eq.s32.totalorder %s17, 0
    %p159 = por %p157, %p158
    %p160 = scmp.le.s32.totalorder 1, %s11
    %p161 = scmp.lt.s32.totalorder %s11, 3
    %p162 = pnand %p160, %p161
    %p163 = pneg %p162
    // Predicated region
    $region9: #{conv2d_bn.2} parent=5 // pred_check
      _
    $region10: #{conv2d_bn.2} parent=5 // pred_check_branch
      %165 = sbr.rel (%p162) target = $region12
    $region11: #{conv2d_bn.2} parent=5 // pred_region
      %s166 = ssub.s32 %s11, 1
      // Predicated region
      $region13: #{conv2d_bn.2} parent=11 // pred_check
        %p167 = pneg %p72
      $region14: #{conv2d_bn.2} parent=11 // pred_check_branch
        %169 = sbr.rel (%p167) target = $region16
      $region15: #{conv2d_bn.2} parent=11 // pred_region
        _
      $region16: #{conv2d_bn.2} parent=11 // pred_fallthru
        _
    $region12: #{conv2d_bn.2} parent=5 // pred_fallthru
      _
    %p170 = scmp.lt.s32.totalorder %s11, 2
    // Predicated region
    $region17: #{conv2d_bn.2} parent=5 // pred_check
      %p171 = pneg %p170
    $region18: #{conv2d_bn.2} parent=5 // pred_check_branch
      %173 = sbr.rel (%p171) target = $region20
    $region19: #{conv2d_bn.2} parent=5 // pred_region
      // Predicated region
      $region21: #{conv2d_bn.2} parent=19 // pred_check
        %p174 = pneg %p45
      $region22: #{conv2d_bn.2} parent=19 // pred_check_branch
        %176 = sbr.rel (%p174) target = $region24
      $region23: #{conv2d_bn.2} parent=19 // pred_region
        %s177 = sadd.s32 %s18, %s19
        %p178 = scmp.lt.s32.totalorder %s177, 1
        %s179 = scalar_select %p178, %s177, 1
        %s180 = smul.addr %s179, 54
        %s181 = smul.addr %s180, 8
        %s182 = scalar_lea.vmem %s0, %s181
        %s183 = sadd.s32 %s18, %s19
      $region24: #{conv2d_bn.2} parent=19 // pred_fallthru
        _
    $region20: #{conv2d_bn.2} parent=5 // pred_fallthru
      _
    %p184 = scmp.le.s32.totalorder 1, %s11
    %p185 = scmp.lt.s32.totalorder %s11, 3
    %p186 = pnand %p184, %p185
    %p187 = pneg %p186
    // Predicated region
    $region25: #{conv2d_bn.2} parent=5 // pred_check
      _
    $region26: #{conv2d_bn.2} parent=5 // pred_check_branch
      %189 = sbr.rel (%p186) target = $region28
    $region27: #{conv2d_bn.2} parent=5 // pred_region
      %s190 = ssub.s32 %s11, 1
      %s191 = sadd.s32 %s20, %s21
      %p192 = scmp.lt.s32.totalorder %s191, 1
      %s193 = scalar_select %p192, %s191, 1
      %s194 = smul.addr %s193, 54
      %s195 = smul.addr %s194, 8
      %s196 = scalar_lea.vmem %s0, %s195
      %p197 = pneg %p51
      %p198 = pneg %p48
      %p199 = pneg %p72
      %p200 = pneg %p69
      %p201 = pneg %p100
      %p202 = pneg %p97
      %s203 = sadd.s32 %s20, %s21
      %p204 = scmp.lt.s32.totalorder %s203, 1
      %s205 = scalar_select %p204, %s203, 1
      %s206 = smul.addr %s205, 32
      %s207 = smul.addr %s206, 8
      %s208 = scalar_lea.vmem %s2, %s207
      %p209 = pneg %p126
      %p210 = pneg %p123
      %p211 = scmp.lt.s32.totalorder %s20, 1
      %s212 = scalar_select %p211, %s20, 1
      %s213 = smul.addr %s212, 8
      %s214 = scalar_lea.vmem %s3, %s213
      %p215 = pneg %p152
      %p216 = pneg %p149
      %p217 = scmp.lt.s32.totalorder %s20, 1
      %s218 = scalar_select %p217, %s20, 1
      %s219 = smul.addr %s218, 8
      %s220 = scalar_lea.vmem %s4, %s219
      %s221 = sadd.s32 %s20, %s21
      %p222 = scmp.lt.s32.totalorder %s221, 1
      %s223 = scalar_select %p222, %s221, 1
      %s224 = smul.addr %s223, 54
      %s225 = smul.addr %s224, 8
      %s226 = scalar_lea.vmem %s0, %s225
      %s227 = sadd.s32 %s20, %s21
      %s228 = sadd.s32 %s20, %s21
      %p229 = scmp.lt.s32.totalorder %s228, 1
      %s230 = scalar_select %p229, %s228, 1
      %s231 = smul.addr %s230, 32
      %s232 = smul.addr %s231, 8
      %s233 = scalar_lea.vmem %s2, %s232
      %s234 = sadd.s32 %s20, %s21
      %p235 = scmp.lt.s32.totalorder %s20, 1
      %s236 = scalar_select %p235, %s20, 1
      %s237 = smul.addr %s236, 8
      %s238 = scalar_lea.vmem %s3, %s237
      %p239 = scmp.lt.s32.totalorder %s20, 1
      %s240 = scalar_select %p239, %s20, 1
      %s241 = smul.addr %s240, 8
      %s242 = scalar_lea.vmem %s4, %s241
      %p243 = scmp.eq.s32.totalorder %s21, 0
      // Predicated region
      $region29: #{conv2d_bn.2} parent=27 // pred_check
        %p244 = pneg %p243
      $region30: #{conv2d_bn.2} parent=27 // pred_check_branch
        %246 = sbr.rel (%p244) target = $region32
      $region31: #{conv2d_bn.2} parent=27 // pred_region
        %247 = vst [vmem:[%s238] sm:$0xff] 0.0
        %248 = vst [vmem:[%s242] sm:$0xff] 0.0
      $region32: #{conv2d_bn.2} parent=27 // pred_fallthru
        _
      %v249 = vld [vmem:[%s226] sm:$0xff]
      %v250 = vld [vmem:[%s226 + $0x8] sm:$0xff]
      %v251 = vld [vmem:[%s226 + $0x18] sm:$0xff]
      %v252 = vld [vmem:[%s226 + $0x20] sm:$0xff]
      %v253 = vld [vmem:[%s226 + $0x30] sm:$0xff]
      %v254 = vld [vmem:[%s226 + $0x38] sm:$0xff]
      %v255 = vld [vmem:[%s226 + $0x48] sm:$0xff]
      %v256 = vld [vmem:[%s226 + $0x50] sm:$0xff]
      %v257 = vld [vmem:[%s226 + $0x60] sm:$0xff]
      %v258 = vld [vmem:[%s226 + $0x68] sm:$0xff]
      %v259 = vld [vmem:[%s226 + $0x78] sm:$0xff]
      %v260 = vld [vmem:[%s226 + $0x80] sm:$0xff]
      %v261 = vld [vmem:[%s226 + $0x90] sm:$0xff]
      %v262 = vld [vmem:[%s226 + $0x98] sm:$0xff]
      %v263 = vld [vmem:[%s226 + $0xa8] sm:$0xff]
      %v264 = vld [vmem:[%s226 + $0xb0] sm:$0xff]
      %v265 = vld [vmem:[%s226 + $0xc0] sm:$0xff]
      %v266 = vld [vmem:[%s226 + $0xc8] sm:$0xff]
      %v267 = vld [vmem:[%s226 + $0xd8] sm:$0xff]
      %v268 = vld [vmem:[%s226 + $0xe0] sm:$0xff]
      %v269 = vld [vmem:[%s226 + $0xf0] sm:$0xff]
      %v270 = vld [vmem:[%s226 + $0xf8] sm:$0xff]
      %v271 = vld [vmem:[%s226 + $0x108] sm:$0xff]
      %v272 = vld [vmem:[%s226 + $0x110] sm:$0xff]
      %v273 = vld [vmem:[%s226 + $0x120] sm:$0xff]
      %v274 = vld [vmem:[%s226 + $0x128] sm:$0xff]
      %v275 = vld [vmem:[%s226 + $0x138] sm:$0xff]
      %v276 = vld [vmem:[%s226 + $0x140] sm:$0xff]
      %v277 = vld [vmem:[%s226 + $0x150] sm:$0xff]
      %v278 = vld [vmem:[%s226 + $0x158] sm:$0xff]
      %v279 = vld [vmem:[%s226 + $0x168] sm:$0xff]
      %v280 = vld [vmem:[%s226 + $0x170] sm:$0xff]
      %v281 = vld [vmem:[%s1] sm:$0xff]
      %v282 = vld [vmem:[%s226 + $0x1] sm:$0xff]
      %v283 = vld [vmem:[%s226 + $0x9] sm:$0xff]
      %v284 = vld [vmem:[%s226 + $0x19] sm:$0xff]
      %v285 = vld [vmem:[%s226 + $0x21] sm:$0xff]
      %v286 = vld [vmem:[%s226 + $0x31] sm:$0xff]
      %v287 = vld [vmem:[%s226 + $0x39] sm:$0xff]
      %v288 = vld [vmem:[%s226 + $0x49] sm:$0xff]
      %v289 = vld [vmem:[%s226 + $0x51] sm:$0xff]
      %v290 = vld [vmem:[%s226 + $0x61] sm:$0xff]
      %v291 = vld [vmem:[%s226 + $0x69] sm:$0xff]
      %v292 = vld [vmem:[%s226 + $0x79] sm:$0xff]
      %v293 = vld [vmem:[%s226 + $0x81] sm:$0xff]
      %v294 = vld [vmem:[%s226 + $0x91] sm:$0xff]
      %v295 = vld [vmem:[%s226 + $0x99] sm:$0xff]
      %v296 = vld [vmem:[%s226 + $0xa9] sm:$0xff]
      %v297 = vld [vmem:[%s226 + $0xb1] sm:$0xff]
      %v298 = vld [vmem:[%s226 + $0xc1] sm:$0xff]
      %v299 = vld [vmem:[%s226 + $0xc9] sm:$0xff]
      %v300 = vld [vmem:[%s226 + $0xd9] sm:$0xff]
      %v301 = vld [vmem:[%s226 + $0xe1] sm:$0xff]
      %v302 = vld [vmem:[%s226 + $0xf1] sm:$0xff]
      %v303 = vld [vmem:[%s226 + $0xf9] sm:$0xff]
      %v304 = vld [vmem:[%s226 + $0x109] sm:$0xff]
      %v305 = vld [vmem:[%s226 + $0x111] sm:$0xff]
      %v306 = vld [vmem:[%s226 + $0x121] sm:$0xff]
      %v307 = vld [vmem:[%s226 + $0x129] sm:$0xff]
      %v308 = vld [vmem:[%s226 + $0x139] sm:$0xff]
      %v309 = vld [vmem:[%s226 + $0x141] sm:$0xff]
      %v310 = vld [vmem:[%s226 + $0x151] sm:$0xff]
      %v311 = vld [vmem:[%s226 + $0x159] sm:$0xff]
      %v312 = vld [vmem:[%s226 + $0x169] sm:$0xff]
      %v313 = vld [vmem:[%s226 + $0x171] sm:$0xff]
      %s314 = scalar_lea.vmem %s1, 8
      %v315 = vld [vmem:[%s314] sm:$0xff]
      %vm316 = vcmask 64512
      %v318 = vsel %vm316, %v282, 0
      %v321 = vsel %vm316, %v283, 0
      %v324 = vsel %vm316, %v284, 0
      %v327 = vsel %vm316, %v285, 0
      %v330 = vsel %vm316, %v286, 0
      %v333 = vsel %vm316, %v287, 0
      %v336 = vsel %vm316, %v288, 0
      %v339 = vsel %vm316, %v289, 0
      %v342 = vsel %vm316, %v290, 0
      %v345 = vsel %vm316, %v291, 0
      %v348 = vsel %vm316, %v292, 0
      %v351 = vsel %vm316, %v293, 0
      %v354 = vsel %vm316, %v294, 0
      %v357 = vsel %vm316, %v295, 0
      %v360 = vsel %vm316, %v296, 0
      %v363 = vsel %vm316, %v297, 0
      %v366 = vsel %vm316, %v298, 0
      %v369 = vsel %vm316, %v299, 0
      %v372 = vsel %vm316, %v300, 0
      %v375 = vsel %vm316, %v301, 0
      %v378 = vsel %vm316, %v302, 0
      %v381 = vsel %vm316, %v303, 0
      %v384 = vsel %vm316, %v304, 0
      %v387 = vsel %vm316, %v305, 0
      %v390 = vsel %vm316, %v306, 0
      %v393 = vsel %vm316, %v307, 0
      %v396 = vsel %vm316, %v308, 0
      %v399 = vsel %vm316, %v309, 0
      %v402 = vsel %vm316, %v310, 0
      %v405 = vsel %vm316, %v311, 0
      %v408 = vsel %vm316, %v312, 0
      %v411 = vsel %vm316, %v313, 0
      %413 = vmatprep.subr.mxu0 0.0
      %414 = vmatpush1.msra.mxu0 %v315
      %415 = vmatprep.subr.mxu0 0.0
      %416 = vmatpush1.msra.mxu0 0.0
      %417 = vmatprep.subr.mxu0 0.0
      %418 = vmatpush1.msra.mxu0 0.0
      %419 = vmatprep.subr.mxu0 0.0
      %420 = vmatpush1.msra.mxu0 0.0
      %421 = vmatprep.subr.mxu0 0.0
      %422 = vmatpush1.msra.mxu0 0.0
      %423 = vmatprep.subr.mxu0 0.0
      %424 = vmatpush1.msra.mxu0 0.0
      %425 = vmatprep.subr.mxu0 0.0
      %426 = vmatpush1.msra.mxu0 0.0
      %427 = vmatprep.subr.mxu0 0.0
      %428 = vmatpush1.msra.mxu0 0.0
      %429 = vmatprep.subr.mxu0 0.0
      %430 = vmatpush1.msra.mxu0 0.0
      %431 = vmatprep.subr.mxu0 0.0
      %432 = vmatpush1.msra.mxu0 0.0
      %433 = vmatprep.subr.mxu0 0.0
      %434 = vmatpush1.msra.mxu0 0.0
      %435 = vmatprep.subr.mxu0 0.0
      %436 = vmatpush1.msra.mxu0 0.0
      %437 = vmatprep.subr.mxu0 0.0
      %438 = vmatpush1.msra.mxu0 0.0
      %439 = vmatprep.subr.mxu0 0.0
      %440 = vmatpush1.msra.mxu0 0.0
      %441 = vmatprep.subr.mxu0 0.0
      %442 = vmatpush1.msra.mxu0 0.0
      %443 = vmatprep.subr.mxu0 0.0
      %444 = vmatpush1.msra.mxu0 0.0
      %445 = vmatprep.subr.mxu0 0.0
      %446 = vmatpush1.msra.mxu0 0.0
      %447 = vmatprep.subr.mxu0 0.0
      %448 = vmatpush1.msra.mxu0 0.0
      %449 = vmatprep.subr.mxu0 0.0
      %450 = vmatpush1.msra.mxu0 0.0
      %451 = vmatprep.subr.mxu0 0.0
      %452 = vmatpush1.msra.mxu0 0.0
      %453 = vmatprep.subr.mxu0 0.0
      %454 = vmatpush1.msra.mxu0 0.0
      %455 = vmatprep.subr.mxu0 0.0
      %456 = vmatpush1.msra.mxu0 0.0
      %457 = vmatprep.subr.mxu0 0.0
      %458 = vmatpush1.msra.mxu0 0.0
      %459 = vmatprep.subr.mxu0 0.0
      %460 = vmatpush1.msra.mxu0 0.0
      %461 = vmatprep.subr.mxu0 0.0
      %462 = vmatpush1.msra.mxu0 0.0
      %463 = vmatprep.subr.mxu0 0.0
      %464 = vmatpush1.msra.mxu0 0.0
      %465 = vmatprep.subr.mxu0 0.0
      %466 = vmatpush1.msra.mxu0 0.0
      %467 = vmatprep.subr.mxu0 0.0
      %468 = vmatpush1.msra.mxu0 0.0
      %469 = vmatprep.subr.mxu0 0.0
      %470 = vmatpush1.msra.mxu0 0.0
      %471 = vmatprep.subr.mxu0 0.0
      %472 = vmatpush1.msra.mxu0 0.0
      %473 = vmatprep.subr.mxu0 0.0
      %474 = vmatpush1.msra.mxu0 0.0
      %475 = vmatprep.subr.mxu0 0.0
      %476 = vmatpush1.msra.mxu0 0.0
      %477 = vmatprep.mubr.f32.mxu0 0.0
      %478 = vmatmul.mubr.f32.gmra.mrb[0].mxu0 %v318
      %v479 = vpop.f32.mrb[0].mxu0
      %v480 = vadd.f32 0.0, %v479
      %v481 = vpop.f32.mrb[0].mxu0
      %482 = vmatprep.mubr.f32.mxu0 0.0
      %483 = vmatmul.mubr.f32.gmra.mrb[0].mxu0 %v321
      %v484 = vpop.f32.mrb[0].mxu0
      %v485 = vadd.f32 0.0, %v484
      %v486 = vpop.f32.mrb[0].mxu0
      %487 = vmatprep.mubr.f32.mxu0 0.0
      %488 = vmatmul.mubr.f32.gmra.mrb[0].mxu0 %v324
      %v489 = vpop.f32.mrb[0].mxu0
      %v490 = vadd.f32 0.0, %v489
      %v491 = vpop.f32.mrb[0].mxu0
      %492 = vmatprep.mubr.f32.mxu0 0.0
      %493 = vmatmul.mubr.f32.gmra.mrb[0].mxu0 %v327
      %v494 = vpop.f32.mrb[0].mxu0
      %v495 = vadd.f32 0.0, %v494
      %v496 = vpop.f32.mrb[0].mxu0
      %497 = vmatprep.mubr.f32.mxu0 0.0
      %498 = vmatmul.mubr.f32.gmra.mrb[0].mxu0 %v330
      %v499 = vpop.f32.mrb[0].mxu0
      %v500 = vadd.f32 0.0, %v499
      %v501 = vpop.f32.mrb[0].mxu0
      %502 = vmatprep.mubr.f32.mxu0 0.0
      %503 = vmatmul.mubr.f32.gmra.mrb[0].mxu0 %v333
      %v504 = vpop.f32.mrb[0].mxu0
      %v505 = vadd.f32 0.0, %v504
      %v506 = vpop.f32.mrb[0].mxu0
      %507 = vmatprep.mubr.f32.mxu0 0.0
      %508 = vmatmul.mubr.f32.gmra.mrb[0].mxu0 %v336
      %v509 = vpop.f32.mrb[0].mxu0
      %v510 = vadd.f32 0.0, %v509
      %v511 = vpop.f32.mrb[0].mxu0
      %512 = vmatprep.mubr.f32.mxu0 0.0
      %513 = vmatmul.mubr.f32.gmra.mrb[0].mxu0 %v339
      %v514 = vpop.f32.mrb[0].mxu0
      %v515 = vadd.f32 0.0, %v514
      %v516 = vpop.f32.mrb[0].mxu0
      %517 = vmatprep.mubr.f32.mxu0 0.0
      %518 = vmatmul.mubr.f32.gmra.mrb[0].mxu0 %v342
      %v519 = vpop.f32.mrb[0].mxu0
      %v520 = vadd.f32 0.0, %v519
      %v521 = vpop.f32.mrb[0].mxu0
      %522 = vmatprep.mubr.f32.mxu0 0.0
      %523 = vmatmul.mubr.f32.gmra.mrb[0].mxu0 %v345
      %v524 = vpop.f32.mrb[0].mxu0
      %v525 = vadd.f32 0.0, %v524
      %v526 = vpop.f32.mrb[0].mxu0
      %527 = vmatprep.mubr.f32.mxu0 0.0
      %528 = vmatmul.mubr.f32.gmra.mrb[0].mxu0 %v348
      %v529 = vpop.f32.mrb[0].mxu0
      %v530 = vadd.f32 0.0, %v529
      %v531 = vpop.f32.mrb[0].mxu0
      %532 = vmatprep.mubr.f32.mxu0 0.0
      %533 = vmatmul.mubr.f32.gmra.mrb[0].mxu0 %v351
      %v534 = vpop.f32.mrb[0].mxu0
      %v535 = vadd.f32 0.0, %v534
      %v536 = vpop.f32.mrb[0].mxu0
      %537 = vmatprep.mubr.f32.mxu0 0.0
      %538 = vmatmul.mubr.f32.gmra.mrb[0].mxu0 %v354
      %v539 = vpop.f32.mrb[0].mxu0
      %v540 = vadd.f32 0.0, %v539
      %v541 = vpop.f32.mrb[0].mxu0
      %542 = vmatprep.mubr.f32.mxu0 0.0
      %543 = vmatmul.mubr.f32.gmra.mrb[0].mxu0 %v357
      %v544 = vpop.f32.mrb[0].mxu0
      %v545 = vadd.f32 0.0, %v544
      %v546 = vpop.f32.mrb[0].mxu0
      %547 = vmatprep.mubr.f32.mxu0 0.0
      %548 = vmatmul.mubr.f32.gmra.mrb[0].mxu0 %v360
      %v549 = vpop.f32.mrb[0].mxu0
      %v550 = vadd.f32 0.0, %v549
      %v551 = vpop.f32.mrb[0].mxu0
      %552 = vmatprep.mubr.f32.mxu0 0.0
      %553 = vmatmul.mubr.f32.gmra.mrb[0].mxu0 %v363
      %v554 = vpop.f32.mrb[0].mxu0
      %v555 = vadd.f32 0.0, %v554
      %v556 = vpop.f32.mrb[0].mxu0
      %557 = vmatprep.mubr.f32.mxu0 0.0
      %558 = vmatmul.mubr.f32.gmra.mrb[0].mxu0 %v366
      %v559 = vpop.f32.mrb[0].mxu0
      %v560 = vadd.f32 0.0, %v559
      %v561 = vpop.f32.mrb[0].mxu0
      %562 = vmatprep.mubr.f32.mxu0 0.0
      %563 = vmatmul.mubr.f32.gmra.mrb[0].mxu0 %v369
      %v564 = vpop.f32.mrb[0].mxu0
      %v565 = vadd.f32 0.0, %v564
      %v566 = vpop.f32.mrb[0].mxu0
      %567 = vmatprep.mubr.f32.mxu0 0.0
      %568 = vmatmul.mubr.f32.gmra.mrb[0].mxu0 %v372
      %v569 = vpop.f32.mrb[0].mxu0
      %v570 = vadd.f32 0.0, %v569
      %v571 = vpop.f32.mrb[0].mxu0
      %572 = vmatprep.mubr.f32.mxu0 0.0
      %573 = vmatmul.mubr.f32.gmra.mrb[0].mxu0 %v375
      %v574 = vpop.f32.mrb[0].mxu0
      %v575 = vadd.f32 0.0, %v574
      %v576 = vpop.f32.mrb[0].mxu0
      %577 = vmatprep.mubr.f32.mxu0 0.0
      %578 = vmatmul.mubr.f32.gmra.mrb[0].mxu0 %v378
      %v579 = vpop.f32.mrb[0].mxu0
      %v580 = vadd.f32 0.0, %v579
      %v581 = vpop.f32.mrb[0].mxu0
      %582 = vmatprep.mubr.f32.mxu0 0.0
      %583 = vmatmul.mubr.f32.gmra.mrb[0].mxu0 %v381
      %v584 = vpop.f32.mrb[0].mxu0
      %v585 = vadd.f32 0.0, %v584
      %v586 = vpop.f32.mrb[0].mxu0
      %587 = vmatprep.mubr.f32.mxu0 0.0
      %588 = vmatmul.mubr.f32.gmra.mrb[0].mxu0 %v384
      %v589 = vpop.f32.mrb[0].mxu0
      %v590 = vadd.f32 0.0, %v589
      %v591 = vpop.f32.mrb[0].mxu0
      %592 = vmatprep.mubr.f32.mxu0 0.0
      %593 = vmatmul.mubr.f32.gmra.mrb[0].mxu0 %v387
      %v594 = vpop.f32.mrb[0].mxu0
      %v595 = vadd.f32 0.0, %v594
      %v596 = vpop.f32.mrb[0].mxu0
      %597 = vmatprep.mubr.f32.mxu0 0.0
      %598 = vmatmul.mubr.f32.gmra.mrb[0].mxu0 %v390
      %v599 = vpop.f32.mrb[0].mxu0
      %v600 = vadd.f32 0.0, %v599
      %v601 = vpop.f32.mrb[0].mxu0
      %602 = vmatprep.mubr.f32.mxu0 0.0
      %603 = vmatmul.mubr.f32.gmra.mrb[0].mxu0 %v393
      %v604 = vpop.f32.mrb[0].mxu0
      %v605 = vadd.f32 0.0, %v604
      %v606 = vpop.f32.mrb[0].mxu0
      %607 = vmatprep.mubr.f32.mxu0 0.0
      %608 = vmatmul.mubr.f32.gmra.mrb[0].mxu0 %v396
      %v609 = vpop.f32.mrb[0].mxu0
      %v610 = vadd.f32 0.0, %v609
      %v611 = vpop.f32.mrb[0].mxu0
      %612 = vmatprep.mubr.f32.mxu0 0.0
      %613 = vmatmul.mubr.f32.gmra.mrb[0].mxu0 %v399
      %v614 = vpop.f32.mrb[0].mxu0
      %v615 = vadd.f32 0.0, %v614
      %v616 = vpop.f32.mrb[0].mxu0
      %617 = vmatprep.mubr.f32.mxu0 0.0
      %618 = vmatmul.mubr.f32.gmra.mrb[0].mxu0 %v402
      %v619 = vpop.f32.mrb[0].mxu0
      %v620 = vadd.f32 0.0, %v619
      %v621 = vpop.f32.mrb[0].mxu0
      %622 = vmatprep.mubr.f32.mxu0 0.0
      %623 = vmatmul.mubr.f32.gmra.mrb[0].mxu0 %v405
      %v624 = vpop.f32.mrb[0].mxu0
      %v625 = vadd.f32 0.0, %v624
      %v626 = vpop.f32.mrb[0].mxu0
      %627 = vmatprep.mubr.f32.mxu0 0.0
      %628 = vmatmul.mubr.f32.gmra.mrb[0].mxu0 %v408
      %v629 = vpop.f32.mrb[0].mxu0
      %v630 = vadd.f32 0.0, %v629
      %v631 = vpop.f32.mrb[0].mxu0
      %632 = vmatprep.mubr.f32.mxu0 0.0
      %633 = vmatmul.mubr.f32.gmra.mrb[0].mxu0 %v411
      %v634 = vpop.f32.mrb[0].mxu0
      %v635 = vadd.f32 0.0, %v634
      %v636 = vpop.f32.mrb[0].mxu0
      %637 = vdwg.mxu0
      %v639 = vsel %vm316, %v249, 0
      %v642 = vsel %vm316, %v250, 0
      %v645 = vsel %vm316, %v251, 0
      %v648 = vsel %vm316, %v252, 0
      %v651 = vsel %vm316, %v253, 0
      %v654 = vsel %vm316, %v254, 0
      %v657 = vsel %vm316, %v255, 0
      %v660 = vsel %vm316, %v256, 0
      %v663 = vsel %vm316, %v257, 0
      %v666 = vsel %vm316, %v258, 0
      %v669 = vsel %vm316, %v259, 0
      %v672 = vsel %vm316, %v260, 0
      %v675 = vsel %vm316, %v261, 0
      %v678 = vsel %vm316, %v262, 0
      %v681 = vsel %vm316, %v263, 0
      %v684 = vsel %vm316, %v264, 0
      %v687 = vsel %vm316, %v265, 0
      %v690 = vsel %vm316, %v266, 0
      %v693 = vsel %vm316, %v267, 0
      %v696 = vsel %vm316, %v268, 0
      %v699 = vsel %vm316, %v269, 0
      %v702 = vsel %vm316, %v270, 0
      %v705 = vsel %vm316, %v271, 0
      %v708 = vsel %vm316, %v272, 0
      %v711 = vsel %vm316, %v273, 0
      %v714 = vsel %vm316, %v274, 0
      %v717 = vsel %vm316, %v275, 0
      %v720 = vsel %vm316, %v276, 0
      %v723 = vsel %vm316, %v277, 0
      %v726 = vsel %vm316, %v278, 0
      %v729 = vsel %vm316, %v279, 0
      %v732 = vsel %vm316, %v280, 0
      %734 = vmatprep.subr.mxu0 0.0
      %735 = vmatpush1.msra.mxu0 %v281
      %736 = vmatprep.subr.mxu0 0.0
      %737 = vmatpush1.msra.mxu0 0.0
      %738 = vmatprep.subr.mxu0 0.0
      %739 = vmatpush1.msra.mxu0 0.0
      %740 = vmatprep.subr.mxu0 0.0
      %741 = vmatpush1.msra.mxu0 0.0
      %742 = vmatprep.subr.mxu0 0.0
      %743 = vmatpush1.msra.mxu0 0.0
      %744 = vmatprep.subr.mxu0 0.0
      %745 = vmatpush1.msra.mxu0 0.0
      %746 = vmatprep.subr.mxu0 0.0
      %747 = vmatpush1.msra.mxu0 0.0
      %748 = vmatprep.subr.mxu0 0.0
      %749 = vmatpush1.msra.mxu0 0.0
      %750 = vmatprep.subr.mxu0 0.0
      %751 = vmatpush1.msra.mxu0 0.0
      %752 = vmatprep.subr.mxu0 0.0
      %753 = vmatpush1.msra.mxu0 0.0
      %754 = vmatprep.subr.mxu0 0.0
      %755 = vmatpush1.msra.mxu0 0.0
      %756 = vmatprep.subr.mxu0 0.0
      %757 = vmatpush1.msra.mxu0 0.0
      %758 = vmatprep.subr.mxu0 0.0
      %759 = vmatpush1.msra.mxu0 0.0
      %760 = vmatprep.subr.mxu0 0.0
      %761 = vmatpush1.msra.mxu0 0.0
      %762 = vmatprep.subr.mxu0 0.0
      %763 = vmatpush1.msra.mxu0 0.0
      %764 = vmatprep.subr.mxu0 0.0
      %765 = vmatpush1.msra.mxu0 0.0
      %766 = vmatprep.subr.mxu0 0.0
      %767 = vmatpush1.msra.mxu0 0.0
      %768 = vmatprep.subr.mxu0 0.0
      %769 = vmatpush1.msra.mxu0 0.0
      %770 = vmatprep.subr.mxu0 0.0
      %771 = vmatpush1.msra.mxu0 0.0
      %772 = vmatprep.subr.mxu0 0.0
      %773 = vmatpush1.msra.mxu0 0.0
      %774 = vmatprep.subr.mxu0 0.0
      %775 = vmatpush1.msra.mxu0 0.0
      %776 = vmatprep.subr.mxu0 0.0
      %777 = vmatpush1.msra.mxu0 0.0
      %778 = vmatprep.subr.mxu0 0.0
      %779 = vmatpush1.msra.mxu0 0.0
      %780 = vmatprep.subr.mxu0 0.0
      %781 = vmatpush1.msra.mxu0 0.0
      %782 = vmatprep.subr.mxu0 0.0
      %783 = vmatpush1.msra.mxu0 0.0
      %784 = vmatprep.subr.mxu0 0.0
      %785 = vmatpush1.msra.mxu0 0.0
      %786 = vmatprep.subr.mxu0 0.0
      %787 = vmatpush1.msra.mxu0 0.0
      %788 = vmatprep.subr.mxu0 0.0
      %789 = vmatpush1.msra.mxu0 0.0
      %790 = vmatprep.subr.mxu0 0.0
      %791 = vmatpush1.msra.mxu0 0.0
      %792 = vmatprep.subr.mxu0 0.0
      %793 = vmatpush1.msra.mxu0 0.0
      %794 = vmatprep.subr.mxu0 0.0
      %795 = vmatpush1.msra.mxu0 0.0
      %796 = vmatprep.subr.mxu0 0.0
      %797 = vmatpush1.msra.mxu0 0.0
      %798 = vmatprep.mubr.f32.mxu0 0.0
      %799 = vmatmul.mubr.f32.gmra.mrb[0].mxu0 %v639
      %v800 = vpop.f32.mrb[0].mxu0
      %v801 = vadd.f32 %v480, %v800
      %v802 = vpop.f32.mrb[0].mxu0
      %803 = vmatprep.mubr.f32.mxu0 0.0
      %804 = vmatmul.mubr.f32.gmra.mrb[0].mxu0 %v642
      %v805 = vpop.f32.mrb[0].mxu0
      %v806 = vadd.f32 %v485, %v805
      %v807 = vpop.f32.mrb[0].mxu0
      %808 = vmatprep.mubr.f32.mxu0 0.0
      %809 = vmatmul.mubr.f32.gmra.mrb[0].mxu0 %v645
      %v810 = vpop.f32.mrb[0].mxu0
      %v811 = vadd.f32 %v490, %v810
      %v812 = vpop.f32.mrb[0].mxu0
      %813 = vmatprep.mubr.f32.mxu0 0.0
      %814 = vmatmul.mubr.f32.gmra.mrb[0].mxu0 %v648
      %v815 = vpop.f32.mrb[0].mxu0
      %v816 = vadd.f32 %v495, %v815
      %v817 = vpop.f32.mrb[0].mxu0
      %818 = vmatprep.mubr.f32.mxu0 0.0
      %819 = vmatmul.mubr.f32.gmra.mrb[0].mxu0 %v651
      %v820 = vpop.f32.mrb[0].mxu0
      %v821 = vadd.f32 %v500, %v820
      %v822 = vpop.f32.mrb[0].mxu0
      %823 = vmatprep.mubr.f32.mxu0 0.0
      %824 = vmatmul.mubr.f32.gmra.mrb[0].mxu0 %v654
      %v825 = vpop.f32.mrb[0].mxu0
      %v826 = vadd.f32 %v505, %v825
      %v827 = vpop.f32.mrb[0].mxu0
      %828 = vmatprep.mubr.f32.mxu0 0.0
      %829 = vmatmul.mubr.f32.gmra.mrb[0].mxu0 %v657
      %v830 = vpop.f32.mrb[0].mxu0
      %v831 = vadd.f32 %v510, %v830
      %v832 = vpop.f32.mrb[0].mxu0
      %833 = vmatprep.mubr.f32.mxu0 0.0
      %834 = vmatmul.mubr.f32.gmra.mrb[0].mxu0 %v660
      %v835 = vpop.f32.mrb[0].mxu0
      %v836 = vadd.f32 %v515, %v835
      %v837 = vpop.f32.mrb[0].mxu0
      %838 = vmatprep.mubr.f32.mxu0 0.0
      %839 = vmatmul.mubr.f32.gmra.mrb[0].mxu0 %v663
      %v840 = vpop.f32.mrb[0].mxu0
      %v841 = vadd.f32 %v520, %v840
      %v842 = vpop.f32.mrb[0].mxu0
      %843 = vmatprep.mubr.f32.mxu0 0.0
      %844 = vmatmul.mubr.f32.gmra.mrb[0].mxu0 %v666
      %v845 = vpop.f32.mrb[0].mxu0
      %v846 = vadd.f32 %v525, %v845
      %v847 = vpop.f32.mrb[0].mxu0
      %848 = vmatprep.mubr.f32.mxu0 0.0
      %849 = vmatmul.mubr.f32.gmra.mrb[0].mxu0 %v669
      %v850 = vpop.f32.mrb[0].mxu0
      %v851 = vadd.f32 %v530, %v850
      %v852 = vpop.f32.mrb[0].mxu0
      %853 = vmatprep.mubr.f32.mxu0 0.0
      %854 = vmatmul.mubr.f32.gmra.mrb[0].mxu0 %v672
      %v855 = vpop.f32.mrb[0].mxu0
      %v856 = vadd.f32 %v535, %v855
      %v857 = vpop.f32.mrb[0].mxu0
      %858 = vmatprep.mubr.f32.mxu0 0.0
      %859 = vmatmul.mubr.f32.gmra.mrb[0].mxu0 %v675
      %v860 = vpop.f32.mrb[0].mxu0
      %v861 = vadd.f32 %v540, %v860
      %v862 = vpop.f32.mrb[0].mxu0
      %863 = vmatprep.mubr.f32.mxu0 0.0
      %864 = vmatmul.mubr.f32.gmra.mrb[0].mxu0 %v678
      %v865 = vpop.f32.mrb[0].mxu0
      %v866 = vadd.f32 %v545, %v865
      %v867 = vpop.f32.mrb[0].mxu0
      %868 = vmatprep.mubr.f32.mxu0 0.0
      %869 = vmatmul.mubr.f32.gmra.mrb[0].mxu0 %v681
      %v870 = vpop.f32.mrb[0].mxu0
      %v871 = vadd.f32 %v550, %v870
      %v872 = vpop.f32.mrb[0].mxu0
      %873 = vmatprep.mubr.f32.mxu0 0.0
      %874 = vmatmul.mubr.f32.gmra.mrb[0].mxu0 %v684
      %v875 = vpop.f32.mrb[0].mxu0
      %v876 = vadd.f32 %v555, %v875
      %v877 = vpop.f32.mrb[0].mxu0
      %878 = vmatprep.mubr.f32.mxu0 0.0
      %879 = vmatmul.mubr.f32.gmra.mrb[0].mxu0 %v687
      %v880 = vpop.f32.mrb[0].mxu0
      %v881 = vadd.f32 %v560, %v880
      %v882 = vpop.f32.mrb[0].mxu0
      %883 = vmatprep.mubr.f32.mxu0 0.0
      %884 = vmatmul.mubr.f32.gmra.mrb[0].mxu0 %v690
      %v885 = vpop.f32.mrb[0].mxu0
      %v886 = vadd.f32 %v565, %v885
      %v887 = vpop.f32.mrb[0].mxu0
      %888 = vmatprep.mubr.f32.mxu0 0.0
      %889 = vmatmul.mubr.f32.gmra.mrb[0].mxu0 %v693
      %v890 = vpop.f32.mrb[0].mxu0
      %v891 = vadd.f32 %v570, %v890
      %v892 = vpop.f32.mrb[0].mxu0
      %893 = vmatprep.mubr.f32.mxu0 0.0
      %894 = vmatmul.mubr.f32.gmra.mrb[0].mxu0 %v696
      %v895 = vpop.f32.mrb[0].mxu0
      %v896 = vadd.f32 %v575, %v895
      %v897 = vpop.f32.mrb[0].mxu0
      %898 = vmatprep.mubr.f32.mxu0 0.0
      %899 = vmatmul.mubr.f32.gmra.mrb[0].mxu0 %v699
      %v900 = vpop.f32.mrb[0].mxu0
      %v901 = vadd.f32 %v580, %v900
      %v902 = vpop.f32.mrb[0].mxu0
      %903 = vmatprep.mubr.f32.mxu0 0.0
      %904 = vmatmul.mubr.f32.gmra.mrb[0].mxu0 %v702
      %v905 = vpop.f32.mrb[0].mxu0
      %v906 = vadd.f32 %v585, %v905
      %v907 = vpop.f32.mrb[0].mxu0
      %908 = vmatprep.mubr.f32.mxu0 0.0
      %909 = vmatmul.mubr.f32.gmra.mrb[0].mxu0 %v705
      %v910 = vpop.f32.mrb[0].mxu0
      %v911 = vadd.f32 %v590, %v910
      %v912 = vpop.f32.mrb[0].mxu0
      %913 = vmatprep.mubr.f32.mxu0 0.0
      %914 = vmatmul.mubr.f32.gmra.mrb[0].mxu0 %v708
      %v915 = vpop.f32.mrb[0].mxu0
      %v916 = vadd.f32 %v595, %v915
      %v917 = vpop.f32.mrb[0].mxu0
      %918 = vmatprep.mubr.f32.mxu0 0.0
      %919 = vmatmul.mubr.f32.gmra.mrb[0].mxu0 %v711
      %v920 = vpop.f32.mrb[0].mxu0
      %v921 = vadd.f32 %v600, %v920
      %v922 = vpop.f32.mrb[0].mxu0
      %923 = vmatprep.mubr.f32.mxu0 0.0
      %924 = vmatmul.mubr.f32.gmra.mrb[0].mxu0 %v714
      %v925 = vpop.f32.mrb[0].mxu0
      %v926 = vadd.f32 %v605, %v925
      %v927 = vpop.f32.mrb[0].mxu0
      %928 = vmatprep.mubr.f32.mxu0 0.0
      %929 = vmatmul.mubr.f32.gmra.mrb[0].mxu0 %v717
      %v930 = vpop.f32.mrb[0].mxu0
      %v931 = vadd.f32 %v610, %v930
      %v932 = vpop.f32.mrb[0].mxu0
      %933 = vmatprep.mubr.f32.mxu0 0.0
      %934 = vmatmul.mubr.f32.gmra.mrb[0].mxu0 %v720
      %v935 = vpop.f32.mrb[0].mxu0
      %v936 = vadd.f32 %v615, %v935
      %v937 = vpop.f32.mrb[0].mxu0
      %938 = vmatprep.mubr.f32.mxu0 0.0
      %939 = vmatmul.mubr.f32.gmra.mrb[0].mxu0 %v723
      %v940 = vpop.f32.mrb[0].mxu0
      %v941 = vadd.f32 %v620, %v940
      %v942 = vpop.f32.mrb[0].mxu0
      %943 = vmatprep.mubr.f32.mxu0 0.0
      %944 = vmatmul.mubr.f32.gmra.mrb[0].mxu0 %v726
      %v945 = vpop.f32.mrb[0].mxu0
      %v946 = vadd.f32 %v625, %v945
      %v947 = vpop.f32.mrb[0].mxu0
      %948 = vmatprep.mubr.f32.mxu0 0.0
      %949 = vmatmul.mubr.f32.gmra.mrb[0].mxu0 %v729
      %v950 = vpop.f32.mrb[0].mxu0
      %v951 = vadd.f32 %v630, %v950
      %v952 = vpop.f32.mrb[0].mxu0
      %953 = vmatprep.mubr.f32.mxu0 0.0
      %954 = vmatmul.mubr.f32.gmra.mrb[0].mxu0 %v732
      %v955 = vpop.f32.mrb[0].mxu0
      %v956 = vadd.f32 %v635, %v955
      %v957 = vpop.f32.mrb[0].mxu0
      %958 = vdwg.mxu0
      %v959 = vld [vmem:[%s226 + $0x2] sm:$0xff]
      %v960 = vld [vmem:[%s226 + $0xa] sm:$0xff]
      %v961 = vld [vmem:[%s226 + $0x1a] sm:$0xff]
      %v962 = vld [vmem:[%s226 + $0x22] sm:$0xff]
      %v963 = vld [vmem:[%s226 + $0x32] sm:$0xff]
      %v964 = vld [vmem:[%s226 + $0x3a] sm:$0xff]
      %v965 = vld [vmem:[%s226 + $0x4a] sm:$0xff]
      %v966 = vld [vmem:[%s226 + $0x52] sm:$0xff]
      %v967 = vld [vmem:[%s226 + $0x62] sm:$0xff]
      %v968 = vld [vmem:[%s226 + $0x6a] sm:$0xff]
      %v969 = vld [vmem:[%s226 + $0x7a] sm:$0xff]
      %v970 = vld [vmem:[%s226 + $0x82] sm:$0xff]
      %v971 = vld [vmem:[%s226 + $0x92] sm:$0xff]
      %v972 = vld [vmem:[%s226 + $0x9a] sm:$0xff]
      %v973 = vld [vmem:[%s226 + $0xaa] sm:$0xff]
      %v974 = vld [vmem:[%s226 + $0xb2] sm:$0xff]
      %v975 = vld [vmem:[%s226 + $0xc2] sm:$0xff]
      %v976 = vld [vmem:[%s226 + $0xca] sm:$0xff]
      %v977 = vld [vmem:[%s226 + $0xda] sm:$0xff]
      %v978 = vld [vmem:[%s226 + $0xe2] sm:$0xff]
      %v979 = vld [vmem:[%s226 + $0xf2] sm:$0xff]
      %v980 = vld [vmem:[%s226 + $0xfa] sm:$0xff]
      %v981 = vld [vmem:[%s226 + $0x10a] sm:$0xff]
      %v982 = vld [vmem:[%s226 + $0x112] sm:$0xff]
      %v983 = vld [vmem:[%s226 + $0x122] sm:$0xff]
      %v984 = vld [vmem:[%s226 + $0x12a] sm:$0xff]
      %v985 = vld [vmem:[%s226 + $0x13a] sm:$0xff]
      %v986 = vld [vmem:[%s226 + $0x142] sm:$0xff]
      %v987 = vld [vmem:[%s226 + $0x152] sm:$0xff]
      %v988 = vld [vmem:[%s226 + $0x15a] sm:$0xff]
      %v989 = vld [vmem:[%s226 + $0x16a] sm:$0xff]
      %v990 = vld [vmem:[%s226 + $0x172] sm:$0xff]
      %s991 = scalar_lea.vmem %s1, 16
      %v992 = vld [vmem:[%s991] sm:$0xff]
      %v994 = vsel %vm316, %v959, 0
      %v997 = vsel %vm316, %v960, 0
      %v1000 = vsel %vm316, %v961, 0
      %v1003 = vsel %vm316, %v962, 0
      %v1006 = vsel %vm316, %v963, 0
      %v1009 = vsel %vm316, %v964, 0
      %v1012 = vsel %vm316, %v965, 0
      %v1015 = vsel %vm316, %v966, 0
      %v1018 = vsel %vm316, %v967, 0
      %v1021 = vsel %vm316, %v968, 0
      %v1024 = vsel %vm316, %v969, 0
      %v1027 = vsel %vm316, %v970, 0
      %v1030 = vsel %vm316, %v971, 0
      %v1033 = vsel %vm316, %v972, 0
      %v1036 = vsel %vm316, %v973, 0
      %v1039 = vsel %vm316, %v974, 0
      %v1042 = vsel %vm316, %v975, 0
      %v1045 = vsel %vm316, %v976, 0
      %v1048 = vsel %vm316, %v977, 0
      %v1051 = vsel %vm316, %v978, 0
      %v1054 = vsel %vm316, %v979, 0
      %v1057 = vsel %vm316, %v980, 0
      %v1060 = vsel %vm316, %v981, 0
      %v1063 = vsel %vm316, %v982, 0
      %v1066 = vsel %vm316, %v983, 0
      %v1069 = vsel %vm316, %v984, 0
      %v1072 = vsel %vm316, %v985, 0
      %v1075 = vsel %vm316, %v986, 0
      %v1078 = vsel %vm316, %v987, 0
      %v1081 = vsel %vm316, %v988, 0
      %v1084 = vsel %vm316, %v989, 0
      %v1087 = vsel %vm316, %v990, 0
      %1089 = vmatprep.subr.mxu0 0.0
      %1090 = vmatpush1.msra.mxu0 %v992
      %1091 = vmatprep.subr.mxu0 0.0
      %1092 = vmatpush1.msra.mxu0 0.0
      %1093 = vmatprep.subr.mxu0 0.0
      %1094 = vmatpush1.msra.mxu0 0.0
      %1095 = vmatprep.subr.mxu0 0.0
      %1096 = vmatpush1.msra.mxu0 0.0
      %1097 = vmatprep.subr.mxu0 0.0
      %1098 = vmatpush1.msra.mxu0 0.0
      %1099 = vmatprep.subr.mxu0 0.0
      %1100 = vmatpush1.msra.mxu0 0.0
      %1101 = vmatprep.subr.mxu0 0.0
      %1102 = vmatpush1.msra.mxu0 0.0
      %1103 = vmatprep.subr.mxu0 0.0
      %1104 = vmatpush1.msra.mxu0 0.0
      %1105 = vmatprep.subr.mxu0 0.0
      %1106 = vmatpush1.msra.mxu0 0.0
      %1107 = vmatprep.subr.mxu0 0.0
      %1108 = vmatpush1.msra.mxu0 0.0
      %1109 = vmatprep.subr.mxu0 0.0
      %1110 = vmatpush1.msra.mxu0 0.0
      %1111 = vmatprep.subr.mxu0 0.0
      %1112 = vmatpush1.msra.mxu0 0.0
      %1113 = vmatprep.subr.mxu0 0.0
      %1114 = vmatpush1.msra.mxu0 0.0
      %1115 = vmatprep.subr.mxu0 0.0
      %1116 = vmatpush1.msra.mxu0 0.0
      %1117 = vmatprep.subr.mxu0 0.0
      %1118 = vmatpush1.msra.mxu0 0.0
      %1119 = vmatprep.subr.mxu0 0.0
      %1120 = vmatpush1.msra.mxu0 0.0
      %1121 = vmatprep.subr.mxu0 0.0
      %1122 = vmatpush1.msra.mxu0 0.0
      %1123 = vmatprep.subr.mxu0 0.0
      %1124 = vmatpush1.msra.mxu0 0.0
      %1125 = vmatprep.subr.mxu0 0.0
      %1126 = vmatpush1.msra.mxu0 0.0
      %1127 = vmatprep.subr.mxu0 0.0
      %1128 = vmatpush1.msra.mxu0 0.0
      %1129 = vmatprep.subr.mxu0 0.0
      %1130 = vmatpush1.msra.mxu0 0.0
      %1131 = vmatprep.subr.mxu0 0.0
      %1132 = vmatpush1.msra.mxu0 0.0
      %1133 = vmatprep.subr.mxu0 0.0
      %1134 = vmatpush1.msra.mxu0 0.0
      %1135 = vmatprep.subr.mxu0 0.0
      %1136 = vmatpush1.msra.mxu0 0.0
      %1137 = vmatprep.subr.mxu0 0.0
      %1138 = vmatpush1.msra.mxu0 0.0
      %1139 = vmatprep.subr.mxu0 0.0
      %1140 = vmatpush1.msra.mxu0 0.0
      %1141 = vmatprep.subr.mxu0 0.0
      %1142 = vmatpush1.msra.mxu0 0.0
      %1143 = vmatprep.subr.mxu0 0.0
      %1144 = vmatpush1.msra.mxu0 0.0
      %1145 = vmatprep.subr.mxu0 0.0
      %1146 = vmatpush1.msra.mxu0 0.0
      %1147 = vmatprep.subr.mxu0 0.0
      %1148 = vmatpush1.msra.mxu0 0.0
      %1149 = vmatprep.subr.mxu0 0.0
      %1150 = vmatpush1.msra.mxu0 0.0
      %1151 = vmatprep.subr.mxu0 0.0
      %1152 = vmatpush1.msra.mxu0 0.0
      %1153 = vmatprep.mubr.f32.mxu0 0.0
      %1154 = vmatmul.mubr.f32.gmra.mrb[0].mxu0 %v994
      %v1155 = vpop.f32.mrb[0].mxu0
      %v1156 = vadd.f32 0.0, %v1155
      %v1157 = vpop.f32.mrb[0].mxu0
      %1158 = vmatprep.mubr.f32.mxu0 0.0
      %1159 = vmatmul.mubr.f32.gmra.mrb[0].mxu0 %v997
      %v1160 = vpop.f32.mrb[0].mxu0
      %v1161 = vadd.f32 0.0, %v1160
      %v1162 = vpop.f32.mrb[0].mxu0
      %1163 = vmatprep.mubr.f32.mxu0 0.0
      %1164 = vmatmul.mubr.f32.gmra.mrb[0].mxu0 %v1000
      %v1165 = vpop.f32.mrb[0].mxu0
      %v1166 = vadd.f32 0.0, %v1165
      %v1167 = vpop.f32.mrb[0].mxu0
      %1168 = vmatprep.mubr.f32.mxu0 0.0
      %1169 = vmatmul.mubr.f32.gmra.mrb[0].mxu0 %v1003
      %v1170 = vpop.f32.mrb[0].mxu0
      %v1171 = vadd.f32 0.0, %v1170
      %v1172 = vpop.f32.mrb[0].mxu0
      %1173 = vmatprep.mubr.f32.mxu0 0.0
      %1174 = vmatmul.mubr.f32.gmra.mrb[0].mxu0 %v1006
      %v1175 = vpop.f32.mrb[0].mxu0
      %v1176 = vadd.f32 0.0, %v1175
      %v1177 = vpop.f32.mrb[0].mxu0
      %1178 = vmatprep.mubr.f32.mxu0 0.0
      %1179 = vmatmul.mubr.f32.gmra.mrb[0].mxu0 %v1009
      %v1180 = vpop.f32.mrb[0].mxu0
      %v1181 = vadd.f32 0.0, %v1180
      %v1182 = vpop.f32.mrb[0].mxu0
      %1183 = vmatprep.mubr.f32.mxu0 0.0
      %1184 = vmatmul.mubr.f32.gmra.mrb[0].mxu0 %v1012
      %v1185 = vpop.f32.mrb[0].mxu0
      %v1186 = vadd.f32 0.0, %v1185
      %v1187 = vpop.f32.mrb[0].mxu0
      %1188 = vmatprep.mubr.f32.mxu0 0.0
      %1189 = vmatmul.mubr.f32.gmra.mrb[0].mxu0 %v1015
      %v1190 = vpop.f32.mrb[0].mxu0
      %v1191 = vadd.f32 0.0, %v1190
      %v1192 = vpop.f32.mrb[0].mxu0
      %1193 = vmatprep.mubr.f32.mxu0 0.0
      %1194 = vmatmul.mubr.f32.gmra.mrb[0].mxu0 %v1018
      %v1195 = vpop.f32.mrb[0].mxu0
      %v1196 = vadd.f32 0.0, %v1195
      %v1197 = vpop.f32.mrb[0].mxu0
      %1198 = vmatprep.mubr.f32.mxu0 0.0
      %1199 = vmatmul.mubr.f32.gmra.mrb[0].mxu0 %v1021
      %v1200 = vpop.f32.mrb[0].mxu0
      %v1201 = vadd.f32 0.0, %v1200
      %v1202 = vpop.f32.mrb[0].mxu0
      %1203 = vmatprep.mubr.f32.mxu0 0.0
      %1204 = vmatmul.mubr.f32.gmra.mrb[0].mxu0 %v1024
      %v1205 = vpop.f32.mrb[0].mxu0
      %v1206 = vadd.f32 0.0, %v1205
      %v1207 = vpop.f32.mrb[0].mxu0
      %1208 = vmatprep.mubr.f32.mxu0 0.0
      %1209 = vmatmul.mubr.f32.gmra.mrb[0].mxu0 %v1027
      %v1210 = vpop.f32.mrb[0].mxu0
      %v1211 = vadd.f32 0.0, %v1210
      %v1212 = vpop.f32.mrb[0].mxu0
      %1213 = vmatprep.mubr.f32.mxu0 0.0
      %1214 = vmatmul.mubr.f32.gmra.mrb[0].mxu0 %v1030
      %v1215 = vpop.f32.mrb[0].mxu0
      %v1216 = vadd.f32 0.0, %v1215
      %v1217 = vpop.f32.mrb[0].mxu0
      %1218 = vmatprep.mubr.f32.mxu0 0.0
      %1219 = vmatmul.mubr.f32.gmra.mrb[0].mxu0 %v1033
      %v1220 = vpop.f32.mrb[0].mxu0
      %v1221 = vadd.f32 0.0, %v1220
      %v1222 = vpop.f32.mrb[0].mxu0
      %1223 = vmatprep.mubr.f32.mxu0 0.0
      %1224 = vmatmul.mubr.f32.gmra.mrb[0].mxu0 %v1036
      %v1225 = vpop.f32.mrb[0].mxu0
      %v1226 = vadd.f32 0.0, %v1225
      %v1227 = vpop.f32.mrb[0].mxu0
      %1228 = vmatprep.mubr.f32.mxu0 0.0
      %1229 = vmatmul.mubr.f32.gmra.mrb[0].mxu0 %v1039
      %v1230 = vpop.f32.mrb[0].mxu0
      %v1231 = vadd.f32 0.0, %v1230
      %v1232 = vpop.f32.mrb[0].mxu0
      %1233 = vmatprep.mubr.f32.mxu0 0.0
      %1234 = vmatmul.mubr.f32.gmra.mrb[0].mxu0 %v1042
      %v1235 = vpop.f32.mrb[0].mxu0
      %v1236 = vadd.f32 0.0, %v1235
      %v1237 = vpop.f32.mrb[0].mxu0
      %1238 = vmatprep.mubr.f32.mxu0 0.0
      %1239 = vmatmul.mubr.f32.gmra.mrb[0].mxu0 %v1045
      %v1240 = vpop.f32.mrb[0].mxu0
      %v1241 = vadd.f32 0.0, %v1240
      %v1242 = vpop.f32.mrb[0].mxu0
      %1243 = vmatprep.mubr.f32.mxu0 0.0
      %1244 = vmatmul.mubr.f32.gmra.mrb[0].mxu0 %v1048
      %v1245 = vpop.f32.mrb[0].mxu0
      %v1246 = vadd.f32 0.0, %v1245
      %v1247 = vpop.f32.mrb[0].mxu0
      %1248 = vmatprep.mubr.f32.mxu0 0.0
      %1249 = vmatmul.mubr.f32.gmra.mrb[0].mxu0 %v1051
      %v1250 = vpop.f32.mrb[0].mxu0
      %v1251 = vadd.f32 0.0, %v1250
      %v1252 = vpop.f32.mrb[0].mxu0
      %1253 = vmatprep.mubr.f32.mxu0 0.0
      %1254 = vmatmul.mubr.f32.gmra.mrb[0].mxu0 %v1054
      %v1255 = vpop.f32.mrb[0].mxu0
      %v1256 = vadd.f32 0.0, %v1255
      %v1257 = vpop.f32.mrb[0].mxu0
      %1258 = vmatprep.mubr.f32.mxu0 0.0
      %1259 = vmatmul.mubr.f32.gmra.mrb[0].mxu0 %v1057
      %v1260 = vpop.f32.mrb[0].mxu0
      %v1261 = vadd.f32 0.0, %v1260
      %v1262 = vpop.f32.mrb[0].mxu0
      %1263 = vmatprep.mubr.f32.mxu0 0.0
      %1264 = vmatmul.mubr.f32.gmra.mrb[0].mxu0 %v1060
      %v1265 = vpop.f32.mrb[0].mxu0
      %v1266 = vadd.f32 0.0, %v1265
      %v1267 = vpop.f32.mrb[0].mxu0
      %1268 = vmatprep.mubr.f32.mxu0 0.0
      %1269 = vmatmul.mubr.f32.gmra.mrb[0].mxu0 %v1063
      %v1270 = vpop.f32.mrb[0].mxu0
      %v1271 = vadd.f32 0.0, %v1270
      %v1272 = vpop.f32.mrb[0].mxu0
      %1273 = vmatprep.mubr.f32.mxu0 0.0
      %1274 = vmatmul.mubr.f32.gmra.mrb[0].mxu0 %v1066
      %v1275 = vpop.f32.mrb[0].mxu0
      %v1276 = vadd.f32 0.0, %v1275
      %v1277 = vpop.f32.mrb[0].mxu0
      %1278 = vmatprep.mubr.f32.mxu0 0.0
      %1279 = vmatmul.mubr.f32.gmra.mrb[0].mxu0 %v1069
      %v1280 = vpop.f32.mrb[0].mxu0
      %v1281 = vadd.f32 0.0, %v1280
      %v1282 = vpop.f32.mrb[0].mxu0
      %1283 = vmatprep.mubr.f32.mxu0 0.0
      %1284 = vmatmul.mubr.f32.gmra.mrb[0].mxu0 %v1072
      %v1285 = vpop.f32.mrb[0].mxu0
      %v1286 = vadd.f32 0.0, %v1285
      %v1287 = vpop.f32.mrb[0].mxu0
      %1288 = vmatprep.mubr.f32.mxu0 0.0
      %1289 = vmatmul.mubr.f32.gmra.mrb[0].mxu0 %v1075
      %v1290 = vpop.f32.mrb[0].mxu0
      %v1291 = vadd.f32 0.0, %v1290
      %v1292 = vpop.f32.mrb[0].mxu0
      %1293 = vmatprep.mubr.f32.mxu0 0.0
      %1294 = vmatmul.mubr.f32.gmra.mrb[0].mxu0 %v1078
      %v1295 = vpop.f32.mrb[0].mxu0
      %v1296 = vadd.f32 0.0, %v1295
      %v1297 = vpop.f32.mrb[0].mxu0
      %1298 = vmatprep.mubr.f32.mxu0 0.0
      %1299 = vmatmul.mubr.f32.gmra.mrb[0].mxu0 %v1081
      %v1300 = vpop.f32.mrb[0].mxu0
      %v1301 = vadd.f32 0.0, %v1300
      %v1302 = vpop.f32.mrb[0].mxu0
      %1303 = vmatprep.mubr.f32.mxu0 0.0
      %1304 = vmatmul.mubr.f32.gmra.mrb[0].mxu0 %v1084
      %v1305 = vpop.f32.mrb[0].mxu0
      %v1306 = vadd.f32 0.0, %v1305
      %v1307 = vpop.f32.mrb[0].mxu0
      %1308 = vmatprep.mubr.f32.mxu0 0.0
      %1309 = vmatmul.mubr.f32.gmra.mrb[0].mxu0 %v1087
      %v1310 = vpop.f32.mrb[0].mxu0
      %v1311 = vadd.f32 0.0, %v1310
      %v1312 = vpop.f32.mrb[0].mxu0
      %1313 = vdwg.mxu0
      %v1314 = vadd.f32 %v801, %v1156
      %v1315 = vadd.f32 %v806, %v1161
      %v1316 = vadd.f32 %v811, %v1166
      %v1317 = vadd.f32 %v816, %v1171
      %v1318 = vadd.f32 %v821, %v1176
      %v1319 = vadd.f32 %v826, %v1181
      %v1320 = vadd.f32 %v831, %v1186
      %v1321 = vadd.f32 %v836, %v1191
      %v1322 = vadd.f32 %v841, %v1196
      %v1323 = vadd.f32 %v846, %v1201
      %v1324 = vadd.f32 %v851, %v1206
      %v1325 = vadd.f32 %v856, %v1211
      %v1326 = vadd.f32 %v861, %v1216
      %v1327 = vadd.f32 %v866, %v1221
      %v1328 = vadd.f32 %v871, %v1226
      %v1329 = vadd.f32 %v876, %v1231
      %v1330 = vadd.f32 %v881, %v1236
      %v1331 = vadd.f32 %v886, %v1241
      %v1332 = vadd.f32 %v891, %v1246
      %v1333 = vadd.f32 %v896, %v1251
      %v1334 = vadd.f32 %v901, %v1256
      %v1335 = vadd.f32 %v906, %v1261
      %v1336 = vadd.f32 %v911, %v1266
      %v1337 = vadd.f32 %v916, %v1271
      %v1338 = vadd.f32 %v921, %v1276
      %v1339 = vadd.f32 %v926, %v1281
      %v1340 = vadd.f32 %v931, %v1286
      %v1341 = vadd.f32 %v936, %v1291
      %v1342 = vadd.f32 %v941, %v1296
      %v1343 = vadd.f32 %v946, %v1301
      %v1344 = vadd.f32 %v951, %v1306
      %v1345 = vadd.f32 %v956, %v1311
      %s1346 = scalar_lea.vmem %s226, 24
      %v1347 = vld [vmem:[%s1346] sm:$0xff]
      %v1348 = vld [vmem:[%s1346 + $0x8] sm:$0xff]
      %v1349 = vld [vmem:[%s1346 + $0x18] sm:$0xff]
      %v1350 = vld [vmem:[%s1346 + $0x20] sm:$0xff]
      %v1351 = vld [vmem:[%s1346 + $0x30] sm:$0xff]
      %v1352 = vld [vmem:[%s1346 + $0x38] sm:$0xff]
      %v1353 = vld [vmem:[%s1346 + $0x48] sm:$0xff]
      %v1354 = vld [vmem:[%s1346 + $0x50] sm:$0xff]
      %v1355 = vld [vmem:[%s1346 + $0x60] sm:$0xff]
      %v1356 = vld [vmem:[%s1346 + $0x68] sm:$0xff]
      %v1357 = vld [vmem:[%s1346 + $0x78] sm:$0xff]
      %v1358 = vld [vmem:[%s1346 + $0x80] sm:$0xff]
      %v1359 = vld [vmem:[%s1346 + $0x90] sm:$0xff]
      %v1360 = vld [vmem:[%s1346 + $0x98] sm:$0xff]
      %v1361 = vld [vmem:[%s1346 + $0xa8] sm:$0xff]
      %v1362 = vld [vmem:[%s1346 + $0xb0] sm:$0xff]
      %v1363 = vld [vmem:[%s1346 + $0xc0] sm:$0xff]
      %v1364 = vld [vmem:[%s1346 + $0xc8] sm:$0xff]
      %v1365 = vld [vmem:[%s1346 + $0xd8] sm:$0xff]
      %v1366 = vld [vmem:[%s1346 + $0xe0] sm:$0xff]
      %v1367 = vld [vmem:[%s1346 + $0xf0] sm:$0xff]
      %v1368 = vld [vmem:[%s1346 + $0xf8] sm:$0xff]
      %v1369 = vld [vmem:[%s1346 + $0x108] sm:$0xff]
      %v1370 = vld [vmem:[%s1346 + $0x110] sm:$0xff]
      %v1371 = vld [vmem:[%s1346 + $0x120] sm:$0xff]
      %v1372 = vld [vmem:[%s1346 + $0x128] sm:$0xff]
      %v1373 = vld [vmem:[%s1346 + $0x138] sm:$0xff]
      %v1374 = vld [vmem:[%s1346 + $0x140] sm:$0xff]
      %v1375 = vld [vmem:[%s1346 + $0x150] sm:$0xff]
      %v1376 = vld [vmem:[%s1346 + $0x158] sm:$0xff]
      %v1377 = vld [vmem:[%s1346 + $0x168] sm:$0xff]
      %v1378 = vld [vmem:[%s1346 + $0x170] sm:$0xff]
      %s1379 = scalar_lea.vmem %s1, 24
      %v1380 = vld [vmem:[%s1379] sm:$0xff]
      %v1382 = vsel %vm316, %v1347, 0
      %v1385 = vsel %vm316, %v1348, 0
      %v1388 = vsel %vm316, %v1349, 0
      %v1391 = vsel %vm316, %v1350, 0
      %v1394 = vsel %vm316, %v1351, 0
      %v1397 = vsel %vm316, %v1352, 0
      %v1400 = vsel %vm316, %v1353, 0
      %v1403 = vsel %vm316, %v1354, 0
      %v1406 = vsel %vm316, %v1355, 0
      %v1409 = vsel %vm316, %v1356, 0
      %v1412 = vsel %vm316, %v1357, 0
      %v1415 = vsel %vm316, %v1358, 0
      %v1418 = vsel %vm316, %v1359, 0
      %v1421 = vsel %vm316, %v1360, 0
      %v1424 = vsel %vm316, %v1361, 0
      %v1427 = vsel %vm316, %v1362, 0
      %v1430 = vsel %vm316, %v1363, 0
      %v1433 = vsel %vm316, %v1364, 0
      %v1436 = vsel %vm316, %v1365, 0
      %v1439 = vsel %vm316, %v1366, 0
      %v1442 = vsel %vm316, %v1367, 0
      %v1445 = vsel %vm316, %v1368, 0
      %v1448 = vsel %vm316, %v1369, 0
      %v1451 = vsel %vm316, %v1370, 0
      %v1454 = vsel %vm316, %v1371, 0
      %v1457 = vsel %vm316, %v1372, 0
      %v1460 = vsel %vm316, %v1373, 0
      %v1463 = vsel %vm316, %v1374, 0
      %v1466 = vsel %vm316, %v1375, 0
      %v1469 = vsel %vm316, %v1376, 0
      %v1472 = vsel %vm316, %v1377, 0
      %v1475 = vsel %vm316, %v1378, 0
      %1477 = vmatprep.subr.mxu0 0.0
      %1478 = vmatpush1.msra.mxu0 %v1380
      %1479 = vmatprep.subr.mxu0 0.0
      %1480 = vmatpush1.msra.mxu0 0.0
      %1481 = vmatprep.subr.mxu0 0.0
      %1482 = vmatpush1.msra.mxu0 0.0
      %1483 = vmatprep.subr.mxu0 0.0
      %1484 = vmatpush1.msra.mxu0 0.0
      %1485 = vmatprep.subr.mxu0 0.0
      %1486 = vmatpush1.msra.mxu0 0.0
      %1487 = vmatprep.subr.mxu0 0.0
      %1488 = vmatpush1.msra.mxu0 0.0
      %1489 = vmatprep.subr.mxu0 0.0
      %1490 = vmatpush1.msra.mxu0 0.0
      %1491 = vmatprep.subr.mxu0 0.0
      %1492 = vmatpush1.msra.mxu0 0.0
      %1493 = vmatprep.subr.mxu0 0.0
      %1494 = vmatpush1.msra.mxu0 0.0
      %1495 = vmatprep.subr.mxu0 0.0
      %1496 = vmatpush1.msra.mxu0 0.0
      %1497 = vmatprep.subr.mxu0 0.0
      %1498 = vmatpush1.msra.mxu0 0.0
      %1499 = vmatprep.subr.mxu0 0.0
      %1500 = vmatpush1.msra.mxu0 0.0
      %1501 = vmatprep.subr.mxu0 0.0
      %1502 = vmatpush1.msra.mxu0 0.0
      %1503 = vmatprep.subr.mxu0 0.0
      %1504 = vmatpush1.msra.mxu0 0.0
      %1505 = vmatprep.subr.mxu0 0.0
      %1506 = vmatpush1.msra.mxu0 0.0
      %1507 = vmatprep.subr.mxu0 0.0
      %1508 = vmatpush1.msra.mxu0 0.0
      %1509 = vmatprep.subr.mxu0 0.0
      %1510 = vmatpush1.msra.mxu0 0.0
      %1511 = vmatprep.subr.mxu0 0.0
      %1512 = vmatpush1.msra.mxu0 0.0
      %1513 = vmatprep.subr.mxu0 0.0
      %1514 = vmatpush1.msra.mxu0 0.0
      %1515 = vmatprep.subr.mxu0 0.0
      %1516 = vmatpush1.msra.mxu0 0.0
      %1517 = vmatprep.subr.mxu0 0.0
      %1518 = vmatpush1.msra.mxu0 0.0
      %1519 = vmatprep.subr.mxu0 0.0
      %1520 = vmatpush1.msra.mxu0 0.0
      %1521 = vmatprep.subr.mxu0 0.0
      %1522 = vmatpush1.msra.mxu0 0.0
      %1523 = vmatprep.subr.mxu0 0.0
      %1524 = vmatpush1.msra.mxu0 0.0
      %1525 = vmatprep.subr.mxu0 0.0
      %1526 = vmatpush1.msra.mxu0 0.0
      %1527 = vmatprep.subr.mxu0 0.0
      %1528 = vmatpush1.msra.mxu0 0.0
      %1529 = vmatprep.subr.mxu0 0.0
      %1530 = vmatpush1.msra.mxu0 0.0
      %1531 = vmatprep.subr.mxu0 0.0
      %1532 = vmatpush1.msra.mxu0 0.0
      %1533 = vmatprep.subr.mxu0 0.0
      %1534 = vmatpush1.msra.mxu0 0.0
      %1535 = vmatprep.subr.mxu0 0.0
      %1536 = vmatpush1.msra.mxu0 0.0
      %1537 = vmatprep.subr.mxu0 0.0
      %1538 = vmatpush1.msra.mxu0 0.0
      %1539 = vmatprep.subr.mxu0 0.0
      %1540 = vmatpush1.msra.mxu0 0.0
      %1541 = vmatprep.mubr.f32.mxu0 0.0
      %1542 = vmatmul.mubr.f32.gmra.mrb[0].mxu0 %v1382
      %v1543 = vpop.f32.mrb[0].mxu0
      %v1544 = vadd.f32 0.0, %v1543
      %v1545 = vpop.f32.mrb[0].mxu0
      %1546 = vmatprep.mubr.f32.mxu0 0.0
      %1547 = vmatmul.mubr.f32.gmra.mrb[0].mxu0 %v1385
      %v1548 = vpop.f32.mrb[0].mxu0
      %v1549 = vadd.f32 0.0, %v1548
      %v1550 = vpop.f32.mrb[0].mxu0
      %1551 = vmatprep.mubr.f32.mxu0 0.0
      %1552 = vmatmul.mubr.f32.gmra.mrb[0].mxu0 %v1388
      %v1553 = vpop.f32.mrb[0].mxu0
      %v1554 = vadd.f32 0.0, %v1553
      %v1555 = vpop.f32.mrb[0].mxu0
      %1556 = vmatprep.mubr.f32.mxu0 0.0
      %1557 = vmatmul.mubr.f32.gmra.mrb[0].mxu0 %v1391
      %v1558 = vpop.f32.mrb[0].mxu0
      %v1559 = vadd.f32 0.0, %v1558
      %v1560 = vpop.f32.mrb[0].mxu0
      %1561 = vmatprep.mubr.f32.mxu0 0.0
      %1562 = vmatmul.mubr.f32.gmra.mrb[0].mxu0 %v1394
      %v1563 = vpop.f32.mrb[0].mxu0
      %v1564 = vadd.f32 0.0, %v1563
      %v1565 = vpop.f32.mrb[0].mxu0
      %1566 = vmatprep.mubr.f32.mxu0 0.0
      %1567 = vmatmul.mubr.f32.gmra.mrb[0].mxu0 %v1397
      %v1568 = vpop.f32.mrb[0].mxu0
      %v1569 = vadd.f32 0.0, %v1568
      %v1570 = vpop.f32.mrb[0].mxu0
      %1571 = vmatprep.mubr.f32.mxu0 0.0
      %1572 = vmatmul.mubr.f32.gmra.mrb[0].mxu0 %v1400
      %v1573 = vpop.f32.mrb[0].mxu0
      %v1574 = vadd.f32 0.0, %v1573
      %v1575 = vpop.f32.mrb[0].mxu0
      %1576 = vmatprep.mubr.f32.mxu0 0.0
      %1577 = vmatmul.mubr.f32.gmra.mrb[0].mxu0 %v1403
      %v1578 = vpop.f32.mrb[0].mxu0
      %v1579 = vadd.f32 0.0, %v1578
      %v1580 = vpop.f32.mrb[0].mxu0
      %1581 = vmatprep.mubr.f32.mxu0 0.0
      %1582 = vmatmul.mubr.f32.gmra.mrb[0].mxu0 %v1406
      %v1583 = vpop.f32.mrb[0].mxu0
      %v1584 = vadd.f32 0.0, %v1583
      %v1585 = vpop.f32.mrb[0].mxu0
      %1586 = vmatprep.mubr.f32.mxu0 0.0
      %1587 = vmatmul.mubr.f32.gmra.mrb[0].mxu0 %v1409
      %v1588 = vpop.f32.mrb[0].mxu0
      %v1589 = vadd.f32 0.0, %v1588
      %v1590 = vpop.f32.mrb[0].mxu0
      %1591 = vmatprep.mubr.f32.mxu0 0.0
      %1592 = vmatmul.mubr.f32.gmra.mrb[0].mxu0 %v1412
      %v1593 = vpop.f32.mrb[0].mxu0
      %v1594 = vadd.f32 0.0, %v1593
      %v1595 = vpop.f32.mrb[0].mxu0
      %1596 = vmatprep.mubr.f32.mxu0 0.0
      %1597 = vmatmul.mubr.f32.gmra.mrb[0].mxu0 %v1415
      %v1598 = vpop.f32.mrb[0].mxu0
      %v1599 = vadd.f32 0.0, %v1598
      %v1600 = vpop.f32.mrb[0].mxu0
      %1601 = vmatprep.mubr.f32.mxu0 0.0
      %1602 = vmatmul.mubr.f32.gmra.mrb[0].mxu0 %v1418
      %v1603 = vpop.f32.mrb[0].mxu0
      %v1604 = vadd.f32 0.0, %v1603
      %v1605 = vpop.f32.mrb[0].mxu0
      %1606 = vmatprep.mubr.f32.mxu0 0.0
      %1607 = vmatmul.mubr.f32.gmra.mrb[0].mxu0 %v1421
      %v1608 = vpop.f32.mrb[0].mxu0
      %v1609 = vadd.f32 0.0, %v1608
      %v1610 = vpop.f32.mrb[0].mxu0
      %1611 = vmatprep.mubr.f32.mxu0 0.0
      %1612 = vmatmul.mubr.f32.gmra.mrb[0].mxu0 %v1424
      %v1613 = vpop.f32.mrb[0].mxu0
      %v1614 = vadd.f32 0.0, %v1613
      %v1615 = vpop.f32.mrb[0].mxu0
      %1616 = vmatprep.mubr.f32.mxu0 0.0
      %1617 = vmatmul.mubr.f32.gmra.mrb[0].mxu0 %v1427
      %v1618 = vpop.f32.mrb[0].mxu0
      %v1619 = vadd.f32 0.0, %v1618
      %v1620 = vpop.f32.mrb[0].mxu0
      %1621 = vmatprep.mubr.f32.mxu0 0.0
      %1622 = vmatmul.mubr.f32.gmra.mrb[0].mxu0 %v1430
      %v1623 = vpop.f32.mrb[0].mxu0
      %v1624 = vadd.f32 0.0, %v1623
      %v1625 = vpop.f32.mrb[0].mxu0
      %1626 = vmatprep.mubr.f32.mxu0 0.0
      %1627 = vmatmul.mubr.f32.gmra.mrb[0].mxu0 %v1433
      %v1628 = vpop.f32.mrb[0].mxu0
      %v1629 = vadd.f32 0.0, %v1628
      %v1630 = vpop.f32.mrb[0].mxu0
      %1631 = vmatprep.mubr.f32.mxu0 0.0
      %1632 = vmatmul.mubr.f32.gmra.mrb[0].mxu0 %v1436
      %v1633 = vpop.f32.mrb[0].mxu0
      %v1634 = vadd.f32 0.0, %v1633
      %v1635 = vpop.f32.mrb[0].mxu0
      %1636 = vmatprep.mubr.f32.mxu0 0.0
      %1637 = vmatmul.mubr.f32.gmra.mrb[0].mxu0 %v1439
      %v1638 = vpop.f32.mrb[0].mxu0
      %v1639 = vadd.f32 0.0, %v1638
      %v1640 = vpop.f32.mrb[0].mxu0
      %1641 = vmatprep.mubr.f32.mxu0 0.0
      %1642 = vmatmul.mubr.f32.gmra.mrb[0].mxu0 %v1442
      %v1643 = vpop.f32.mrb[0].mxu0
      %v1644 = vadd.f32 0.0, %v1643
      %v1645 = vpop.f32.mrb[0].mxu0
      %1646 = vmatprep.mubr.f32.mxu0 0.0
      %1647 = vmatmul.mubr.f32.gmra.mrb[0].mxu0 %v1445
      %v1648 = vpop.f32.mrb[0].mxu0
      %v1649 = vadd.f32 0.0, %v1648
      %v1650 = vpop.f32.mrb[0].mxu0
      %1651 = vmatprep.mubr.f32.mxu0 0.0
      %1652 = vmatmul.mubr.f32.gmra.mrb[0].mxu0 %v1448
      %v1653 = vpop.f32.mrb[0].mxu0
      %v1654 = vadd.f32 0.0, %v1653
      %v1655 = vpop.f32.mrb[0].mxu0
      %1656 = vmatprep.mubr.f32.mxu0 0.0
      %1657 = vmatmul.mubr.f32.gmra.mrb[0].mxu0 %v1451
      %v1658 = vpop.f32.mrb[0].mxu0
      %v1659 = vadd.f32 0.0, %v1658
      %v1660 = vpop.f32.mrb[0].mxu0
      %1661 = vmatprep.mubr.f32.mxu0 0.0
      %1662 = vmatmul.mubr.f32.gmra.mrb[0].mxu0 %v1454
      %v1663 = vpop.f32.mrb[0].mxu0
      %v1664 = vadd.f32 0.0, %v1663
      %v1665 = vpop.f32.mrb[0].mxu0
      %1666 = vmatprep.mubr.f32.mxu0 0.0
      %1667 = vmatmul.mubr.f32.gmra.mrb[0].mxu0 %v1457
      %v1668 = vpop.f32.mrb[0].mxu0
      %v1669 = vadd.f32 0.0, %v1668
      %v1670 = vpop.f32.mrb[0].mxu0
      %1671 = vmatprep.mubr.f32.mxu0 0.0
      %1672 = vmatmul.mubr.f32.gmra.mrb[0].mxu0 %v1460
      %v1673 = vpop.f32.mrb[0].mxu0
      %v1674 = vadd.f32 0.0, %v1673
      %v1675 = vpop.f32.mrb[0].mxu0
      %1676 = vmatprep.mubr.f32.mxu0 0.0
      %1677 = vmatmul.mubr.f32.gmra.mrb[0].mxu0 %v1463
      %v1678 = vpop.f32.mrb[0].mxu0
      %v1679 = vadd.f32 0.0, %v1678
      %v1680 = vpop.f32.mrb[0].mxu0
      %1681 = vmatprep.mubr.f32.mxu0 0.0
      %1682 = vmatmul.mubr.f32.gmra.mrb[0].mxu0 %v1466
      %v1683 = vpop.f32.mrb[0].mxu0
      %v1684 = vadd.f32 0.0, %v1683
      %v1685 = vpop.f32.mrb[0].mxu0
      %1686 = vmatprep.mubr.f32.mxu0 0.0
      %1687 = vmatmul.mubr.f32.gmra.mrb[0].mxu0 %v1469
      %v1688 = vpop.f32.mrb[0].mxu0
      %v1689 = vadd.f32 0.0, %v1688
      %v1690 = vpop.f32.mrb[0].mxu0
      %1691 = vmatprep.mubr.f32.mxu0 0.0
      %1692 = vmatmul.mubr.f32.gmra.mrb[0].mxu0 %v1472
      %v1693 = vpop.f32.mrb[0].mxu0
      %v1694 = vadd.f32 0.0, %v1693
      %v1695 = vpop.f32.mrb[0].mxu0
      %1696 = vmatprep.mubr.f32.mxu0 0.0
      %1697 = vmatmul.mubr.f32.gmra.mrb[0].mxu0 %v1475
      %v1698 = vpop.f32.mrb[0].mxu0
      %v1699 = vadd.f32 0.0, %v1698
      %v1700 = vpop.f32.mrb[0].mxu0
      %1701 = vdwg.mxu0
      %v1702 = vadd.f32 %v1314, %v1544
      %v1703 = vadd.f32 %v1315, %v1549
      %v1704 = vadd.f32 %v1316, %v1554
      %v1705 = vadd.f32 %v1317, %v1559
      %v1706 = vadd.f32 %v1318, %v1564
      %v1707 = vadd.f32 %v1319, %v1569
      %v1708 = vadd.f32 %v1320, %v1574
      %v1709 = vadd.f32 %v1321, %v1579
      %v1710 = vadd.f32 %v1322, %v1584
      %v1711 = vadd.f32 %v1323, %v1589
      %v1712 = vadd.f32 %v1324, %v1594
      %v1713 = vadd.f32 %v1325, %v1599
      %v1714 = vadd.f32 %v1326, %v1604
      %v1715 = vadd.f32 %v1327, %v1609
      %v1716 = vadd.f32 %v1328, %v1614
      %v1717 = vadd.f32 %v1329, %v1619
      %v1718 = vadd.f32 %v1330, %v1624
      %v1719 = vadd.f32 %v1331, %v1629
      %v1720 = vadd.f32 %v1332, %v1634
      %v1721 = vadd.f32 %v1333, %v1639
      %v1722 = vadd.f32 %v1334, %v1644
      %v1723 = vadd.f32 %v1335, %v1649
      %v1724 = vadd.f32 %v1336, %v1654
      %v1725 = vadd.f32 %v1337, %v1659
      %v1726 = vadd.f32 %v1338, %v1664
      %v1727 = vadd.f32 %v1339, %v1669
      %v1728 = vadd.f32 %v1340, %v1674
      %v1729 = vadd.f32 %v1341, %v1679
      %v1730 = vadd.f32 %v1342, %v1684
      %v1731 = vadd.f32 %v1343, %v1689
      %v1732 = vadd.f32 %v1344, %v1694
      %v1733 = vadd.f32 %v1345, %v1699
      %v1734 = vld [vmem:[%s1346 + $0x1] sm:$0xff]
      %v1735 = vld [vmem:[%s1346 + $0x9] sm:$0xff]
      %v1736 = vld [vmem:[%s1346 + $0x19] sm:$0xff]
      %v1737 = vld [vmem:[%s1346 + $0x21] sm:$0xff]
      %v1738 = vld [vmem:[%s1346 + $0x31] sm:$0xff]
      %v1739 = vld [vmem:[%s1346 + $0x39] sm:$0xff]
      %v1740 = vld [vmem:[%s1346 + $0x49] sm:$0xff]
      %v1741 = vld [vmem:[%s1346 + $0x51] sm:$0xff]
      %v1742 = vld [vmem:[%s1346 + $0x61] sm:$0xff]
      %v1743 = vld [vmem:[%s1346 + $0x69] sm:$0xff]
      %v1744 = vld [vmem:[%s1346 + $0x79] sm:$0xff]
      %v1745 = vld [vmem:[%s1346 + $0x81] sm:$0xff]
      %v1746 = vld [vmem:[%s1346 + $0x91] sm:$0xff]
      %v1747 = vld [vmem:[%s1346 + $0x99] sm:$0xff]
      %v1748 = vld [vmem:[%s1346 + $0xa9] sm:$0xff]
      %v1749 = vld [vmem:[%s1346 + $0xb1] sm:$0xff]
      %v1750 = vld [vmem:[%s1346 + $0xc1] sm:$0xff]
      %v1751 = vld [vmem:[%s1346 + $0xc9] sm:$0xff]
      %v1752 = vld [vmem:[%s1346 + $0xd9] sm:$0xff]
      %v1753 = vld [vmem:[%s1346 + $0xe1] sm:$0xff]
      %v1754 = vld [vmem:[%s1346 + $0xf1] sm:$0xff]
      %v1755 = vld [vmem:[%s1346 + $0xf9] sm:$0xff]
      %v1756 = vld [vmem:[%s1346 + $0x109] sm:$0xff]
      %v1757 = vld [vmem:[%s1346 + $0x111] sm:$0xff]
      %v1758 = vld [vmem:[%s1346 + $0x121] sm:$0xff]
      %v1759 = vld [vmem:[%s1346 + $0x129] sm:$0xff]
      %v1760 = vld [vmem:[%s1346 + $0x139] sm:$0xff]
      %v1761 = vld [vmem:[%s1346 + $0x141] sm:$0xff]
      %v1762 = vld [vmem:[%s1346 + $0x151] sm:$0xff]
      %v1763 = vld [vmem:[%s1346 + $0x159] sm:$0xff]
      %v1764 = vld [vmem:[%s1346 + $0x169] sm:$0xff]
      %v1765 = vld [vmem:[%s1346 + $0x171] sm:$0xff]
      %s1766 = scalar_lea.vmem %s1, 32
      %v1767 = vld [vmem:[%s1766] sm:$0xff]
      %v1769 = vsel %vm316, %v1734, 0
      %v1772 = vsel %vm316, %v1735, 0
      %v1775 = vsel %vm316, %v1736, 0
      %v1778 = vsel %vm316, %v1737, 0
      %v1781 = vsel %vm316, %v1738, 0
      %v1784 = vsel %vm316, %v1739, 0
      %v1787 = vsel %vm316, %v1740, 0
      %v1790 = vsel %vm316, %v1741, 0
      %v1793 = vsel %vm316, %v1742, 0
      %v1796 = vsel %vm316, %v1743, 0
      %v1799 = vsel %vm316, %v1744, 0
      %v1802 = vsel %vm316, %v1745, 0
      %v1805 = vsel %vm316, %v1746, 0
      %v1808 = vsel %vm316, %v1747, 0
      %v1811 = vsel %vm316, %v1748, 0
      %v1814 = vsel %vm316, %v1749, 0
      %v1817 = vsel %vm316, %v1750, 0
      %v1820 = vsel %vm316, %v1751, 0
      %v1823 = vsel %vm316, %v1752, 0
      %v1826 = vsel %vm316, %v1753, 0
      %v1829 = vsel %vm316, %v1754, 0
      %v1832 = vsel %vm316, %v1755, 0
      %v1835 = vsel %vm316, %v1756, 0
      %v1838 = vsel %vm316, %v1757, 0
      %v1841 = vsel %vm316, %v1758, 0
      %v1844 = vsel %vm316, %v1759, 0
      %v1847 = vsel %vm316, %v1760, 0
      %v1850 = vsel %vm316, %v1761, 0
      %v1853 = vsel %vm316, %v1762, 0
      %v1856 = vsel %vm316, %v1763, 0
      %v1859 = vsel %vm316, %v1764, 0
      %v1862 = vsel %vm316, %v1765, 0
      %1864 = vmatprep.subr.mxu0 0.0
      %1865 = vmatpush1.msra.mxu0 %v1767
      %1866 = vmatprep.subr.mxu0 0.0
      %1867 = vmatpush1.msra.mxu0 0.0
      %1868 = vmatprep.subr.mxu0 0.0
      %1869 = vmatpush1.msra.mxu0 0.0
      %1870 = vmatprep.subr.mxu0 0.0
      %1871 = vmatpush1.msra.mxu0 0.0
      %1872 = vmatprep.subr.mxu0 0.0
      %1873 = vmatpush1.msra.mxu0 0.0
      %1874 = vmatprep.subr.mxu0 0.0
      %1875 = vmatpush1.msra.mxu0 0.0
      %1876 = vmatprep.subr.mxu0 0.0
      %1877 = vmatpush1.msra.mxu0 0.0
      %1878 = vmatprep.subr.mxu0 0.0
      %1879 = vmatpush1.msra.mxu0 0.0
      %1880 = vmatprep.subr.mxu0 0.0
      %1881 = vmatpush1.msra.mxu0 0.0
      %1882 = vmatprep.subr.mxu0 0.0
      %1883 = vmatpush1.msra.mxu0 0.0
      %1884 = vmatprep.subr.mxu0 0.0
      %1885 = vmatpush1.msra.mxu0 0.0
      %1886 = vmatprep.subr.mxu0 0.0
      %1887 = vmatpush1.msra.mxu0 0.0
      %1888 = vmatprep.subr.mxu0 0.0
      %1889 = vmatpush1.msra.mxu0 0.0
      %1890 = vmatprep.subr.mxu0 0.0
      %1891 = vmatpush1.msra.mxu0 0.0
      %1892 = vmatprep.subr.mxu0 0.0
      %1893 = vmatpush1.msra.mxu0 0.0
      %1894 = vmatprep.subr.mxu0 0.0
      %1895 = vmatpush1.msra.mxu0 0.0
      %1896 = vmatprep.subr.mxu0 0.0
      %1897 = vmatpush1.msra.mxu0 0.0
      %1898 = vmatprep.subr.mxu0 0.0
      %1899 = vmatpush1.msra.mxu0 0.0
      %1900 = vmatprep.subr.mxu0 0.0
      %1901 = vmatpush1.msra.mxu0 0.0
      %1902 = vmatprep.subr.mxu0 0.0
      %1903 = vmatpush1.msra.mxu0 0.0
      %1904 = vmatprep.subr.mxu0 0.0
      %1905 = vmatpush1.msra.mxu0 0.0
      %1906 = vmatprep.subr.mxu0 0.0
      %1907 = vmatpush1.msra.mxu0 0.0
      %1908 = vmatprep.subr.mxu0 0.0
      %1909 = vmatpush1.msra.mxu0 0.0
      %1910 = vmatprep.subr.mxu0 0.0
      %1911 = vmatpush1.msra.mxu0 0.0
      %1912 = vmatprep.subr.mxu0 0.0
      %1913 = vmatpush1.msra.mxu0 0.0
      %1914 = vmatprep.subr.mxu0 0.0
      %1915 = vmatpush1.msra.mxu0 0.0
      %1916 = vmatprep.subr.mxu0 0.0
      %1917 = vmatpush1.msra.mxu0 0.0
      %1918 = vmatprep.subr.mxu0 0.0
      %1919 = vmatpush1.msra.mxu0 0.0
      %1920 = vmatprep.subr.mxu0 0.0
      %1921 = vmatpush1.msra.mxu0 0.0
      %1922 = vmatprep.subr.mxu0 0.0
      %1923 = vmatpush1.msra.mxu0 0.0
      %1924 = vmatprep.subr.mxu0 0.0
      %1925 = vmatpush1.msra.mxu0 0.0
      %1926 = vmatprep.subr.mxu0 0.0
      %1927 = vmatpush1.msra.mxu0 0.0
      %1928 = vmatprep.mubr.f32.mxu0 0.0
      %1929 = vmatmul.mubr.f32.gmra.mrb[0].mxu0 %v1769
      %v1930 = vpop.f32.mrb[0].mxu0
      %v1931 = vadd.f32 0.0, %v1930
      %v1932 = vpop.f32.mrb[0].mxu0
      %1933 = vmatprep.mubr.f32.mxu0 0.0
      %1934 = vmatmul.mubr.f32.gmra.mrb[0].mxu0 %v1772
      %v1935 = vpop.f32.mrb[0].mxu0
      %v1936 = vadd.f32 0.0, %v1935
      %v1937 = vpop.f32.mrb[0].mxu0
      %1938 = vmatprep.mubr.f32.mxu0 0.0
      %1939 = vmatmul.mubr.f32.gmra.mrb[0].mxu0 %v1775
      %v1940 = vpop.f32.mrb[0].mxu0
      %v1941 = vadd.f32 0.0, %v1940
      %v1942 = vpop.f32.mrb[0].mxu0
      %1943 = vmatprep.mubr.f32.mxu0 0.0
      %1944 = vmatmul.mubr.f32.gmra.mrb[0].mxu0 %v1778
      %v1945 = vpop.f32.mrb[0].mxu0
      %v1946 = vadd.f32 0.0, %v1945
      %v1947 = vpop.f32.mrb[0].mxu0
      %1948 = vmatprep.mubr.f32.mxu0 0.0
      %1949 = vmatmul.mubr.f32.gmra.mrb[0].mxu0 %v1781
      %v1950 = vpop.f32.mrb[0].mxu0
      %v1951 = vadd.f32 0.0, %v1950
      %v1952 = vpop.f32.mrb[0].mxu0
      %1953 = vmatprep.mubr.f32.mxu0 0.0
      %1954 = vmatmul.mubr.f32.gmra.mrb[0].mxu0 %v1784
      %v1955 = vpop.f32.mrb[0].mxu0
      %v1956 = vadd.f32 0.0, %v1955
      %v1957 = vpop.f32.mrb[0].mxu0
      %1958 = vmatprep.mubr.f32.mxu0 0.0
      %1959 = vmatmul.mubr.f32.gmra.mrb[0].mxu0 %v1787
      %v1960 = vpop.f32.mrb[0].mxu0
      %v1961 = vadd.f32 0.0, %v1960
      %v1962 = vpop.f32.mrb[0].mxu0
      %1963 = vmatprep.mubr.f32.mxu0 0.0
      %1964 = vmatmul.mubr.f32.gmra.mrb[0].mxu0 %v1790
      %v1965 = vpop.f32.mrb[0].mxu0
      %v1966 = vadd.f32 0.0, %v1965
      %v1967 = vpop.f32.mrb[0].mxu0
      %1968 = vmatprep.mubr.f32.mxu0 0.0
      %1969 = vmatmul.mubr.f32.gmra.mrb[0].mxu0 %v1793
      %v1970 = vpop.f32.mrb[0].mxu0
      %v1971 = vadd.f32 0.0, %v1970
      %v1972 = vpop.f32.mrb[0].mxu0
      %1973 = vmatprep.mubr.f32.mxu0 0.0
      %1974 = vmatmul.mubr.f32.gmra.mrb[0].mxu0 %v1796
      %v1975 = vpop.f32.mrb[0].mxu0
      %v1976 = vadd.f32 0.0, %v1975
      %v1977 = vpop.f32.mrb[0].mxu0
      %1978 = vmatprep.mubr.f32.mxu0 0.0
      %1979 = vmatmul.mubr.f32.gmra.mrb[0].mxu0 %v1799
      %v1980 = vpop.f32.mrb[0].mxu0
      %v1981 = vadd.f32 0.0, %v1980
      %v1982 = vpop.f32.mrb[0].mxu0
      %1983 = vmatprep.mubr.f32.mxu0 0.0
      %1984 = vmatmul.mubr.f32.gmra.mrb[0].mxu0 %v1802
      %v1985 = vpop.f32.mrb[0].mxu0
      %v1986 = vadd.f32 0.0, %v1985
      %v1987 = vpop.f32.mrb[0].mxu0
      %1988 = vmatprep.mubr.f32.mxu0 0.0
      %1989 = vmatmul.mubr.f32.gmra.mrb[0].mxu0 %v1805
      %v1990 = vpop.f32.mrb[0].mxu0
      %v1991 = vadd.f32 0.0, %v1990
      %v1992 = vpop.f32.mrb[0].mxu0
      %1993 = vmatprep.mubr.f32.mxu0 0.0
      %1994 = vmatmul.mubr.f32.gmra.mrb[0].mxu0 %v1808
      %v1995 = vpop.f32.mrb[0].mxu0
      %v1996 = vadd.f32 0.0, %v1995
      %v1997 = vpop.f32.mrb[0].mxu0
      %1998 = vmatprep.mubr.f32.mxu0 0.0
      %1999 = vmatmul.mubr.f32.gmra.mrb[0].mxu0 %v1811
      %v2000 = vpop.f32.mrb[0].mxu0
      %v2001 = vadd.f32 0.0, %v2000
      %v2002 = vpop.f32.mrb[0].mxu0
      %2003 = vmatprep.mubr.f32.mxu0 0.0
      %2004 = vmatmul.mubr.f32.gmra.mrb[0].mxu0 %v1814
      %v2005 = vpop.f32.mrb[0].mxu0
      %v2006 = vadd.f32 0.0, %v2005
      %v2007 = vpop.f32.mrb[0].mxu0
      %2008 = vmatprep.mubr.f32.mxu0 0.0
      %2009 = vmatmul.mubr.f32.gmra.mrb[0].mxu0 %v1817
      %v2010 = vpop.f32.mrb[0].mxu0
      %v2011 = vadd.f32 0.0, %v2010
      %v2012 = vpop.f32.mrb[0].mxu0
      %2013 = vmatprep.mubr.f32.mxu0 0.0
      %2014 = vmatmul.mubr.f32.gmra.mrb[0].mxu0 %v1820
      %v2015 = vpop.f32.mrb[0].mxu0
      %v2016 = vadd.f32 0.0, %v2015
      %v2017 = vpop.f32.mrb[0].mxu0
      %2018 = vmatprep.mubr.f32.mxu0 0.0
      %2019 = vmatmul.mubr.f32.gmra.mrb[0].mxu0 %v1823
      %v2020 = vpop.f32.mrb[0].mxu0
      %v2021 = vadd.f32 0.0, %v2020
      %v2022 = vpop.f32.mrb[0].mxu0
      %2023 = vmatprep.mubr.f32.mxu0 0.0
      %2024 = vmatmul.mubr.f32.gmra.mrb[0].mxu0 %v1826
      %v2025 = vpop.f32.mrb[0].mxu0
      %v2026 = vadd.f32 0.0, %v2025
      %v2027 = vpop.f32.mrb[0].mxu0
      %2028 = vmatprep.mubr.f32.mxu0 0.0
      %2029 = vmatmul.mubr.f32.gmra.mrb[0].mxu0 %v1829
      %v2030 = vpop.f32.mrb[0].mxu0
      %v2031 = vadd.f32 0.0, %v2030
      %v2032 = vpop.f32.mrb[0].mxu0
      %2033 = vmatprep.mubr.f32.mxu0 0.0
      %2034 = vmatmul.mubr.f32.gmra.mrb[0].mxu0 %v1832
      %v2035 = vpop.f32.mrb[0].mxu0
      %v2036 = vadd.f32 0.0, %v2035
      %v2037 = vpop.f32.mrb[0].mxu0
      %2038 = vmatprep.mubr.f32.mxu0 0.0
      %2039 = vmatmul.mubr.f32.gmra.mrb[0].mxu0 %v1835
      %v2040 = vpop.f32.mrb[0].mxu0
      %v2041 = vadd.f32 0.0, %v2040
      %v2042 = vpop.f32.mrb[0].mxu0
      %2043 = vmatprep.mubr.f32.mxu0 0.0
      %2044 = vmatmul.mubr.f32.gmra.mrb[0].mxu0 %v1838
      %v2045 = vpop.f32.mrb[0].mxu0
      %v2046 = vadd.f32 0.0, %v2045
      %v2047 = vpop.f32.mrb[0].mxu0
      %2048 = vmatprep.mubr.f32.mxu0 0.0
      %2049 = vmatmul.mubr.f32.gmra.mrb[0].mxu0 %v1841
      %v2050 = vpop.f32.mrb[0].mxu0
      %v2051 = vadd.f32 0.0, %v2050
      %v2052 = vpop.f32.mrb[0].mxu0
      %2053 = vmatprep.mubr.f32.mxu0 0.0
      %2054 = vmatmul.mubr.f32.gmra.mrb[0].mxu0 %v1844
      %v2055 = vpop.f32.mrb[0].mxu0
      %v2056 = vadd.f32 0.0, %v2055
      %v2057 = vpop.f32.mrb[0].mxu0
      %2058 = vmatprep.mubr.f32.mxu0 0.0
      %2059 = vmatmul.mubr.f32.gmra.mrb[0].mxu0 %v1847
      %v2060 = vpop.f32.mrb[0].mxu0
      %v2061 = vadd.f32 0.0, %v2060
      %v2062 = vpop.f32.mrb[0].mxu0
      %2063 = vmatprep.mubr.f32.mxu0 0.0
      %2064 = vmatmul.mubr.f32.gmra.mrb[0].mxu0 %v1850
      %v2065 = vpop.f32.mrb[0].mxu0
      %v2066 = vadd.f32 0.0, %v2065
      %v2067 = vpop.f32.mrb[0].mxu0
      %2068 = vmatprep.mubr.f32.mxu0 0.0
      %2069 = vmatmul.mubr.f32.gmra.mrb[0].mxu0 %v1853
      %v2070 = vpop.f32.mrb[0].mxu0
      %v2071 = vadd.f32 0.0, %v2070
      %v2072 = vpop.f32.mrb[0].mxu0
      %2073 = vmatprep.mubr.f32.mxu0 0.0
      %2074 = vmatmul.mubr.f32.gmra.mrb[0].mxu0 %v1856
      %v2075 = vpop.f32.mrb[0].mxu0
      %v2076 = vadd.f32 0.0, %v2075
      %v2077 = vpop.f32.mrb[0].mxu0
      %2078 = vmatprep.mubr.f32.mxu0 0.0
      %2079 = vmatmul.mubr.f32.gmra.mrb[0].mxu0 %v1859
      %v2080 = vpop.f32.mrb[0].mxu0
      %v2081 = vadd.f32 0.0, %v2080
      %v2082 = vpop.f32.mrb[0].mxu0
      %2083 = vmatprep.mubr.f32.mxu0 0.0
      %2084 = vmatmul.mubr.f32.gmra.mrb[0].mxu0 %v1862
      %v2085 = vpop.f32.mrb[0].mxu0
      %v2086 = vadd.f32 0.0, %v2085
      %v2087 = vpop.f32.mrb[0].mxu0
      %2088 = vdwg.mxu0
      %v2089 = vadd.f32 %v1702, %v1931
      %v2090 = vadd.f32 %v1703, %v1936
      %v2091 = vadd.f32 %v1704, %v1941
      %v2092 = vadd.f32 %v1705, %v1946
      %v2093 = vadd.f32 %v1706, %v1951
      %v2094 = vadd.f32 %v1707, %v1956
      %v2095 = vadd.f32 %v1708, %v1961
      %v2096 = vadd.f32 %v1709, %v1966
      %v2097 = vadd.f32 %v1710, %v1971
      %v2098 = vadd.f32 %v1711, %v1976
      %v2099 = vadd.f32 %v1712, %v1981
      %v2100 = vadd.f32 %v1713, %v1986
      %v2101 = vadd.f32 %v1714, %v1991
      %v2102 = vadd.f32 %v1715, %v1996
      %v2103 = vadd.f32 %v1716, %v2001
      %v2104 = vadd.f32 %v1717, %v2006
      %v2105 = vadd.f32 %v1718, %v2011
      %v2106 = vadd.f32 %v1719, %v2016
      %v2107 = vadd.f32 %v1720, %v2021
      %v2108 = vadd.f32 %v1721, %v2026
      %v2109 = vadd.f32 %v1722, %v2031
      %v2110 = vadd.f32 %v1723, %v2036
      %v2111 = vadd.f32 %v1724, %v2041
      %v2112 = vadd.f32 %v1725, %v2046
      %v2113 = vadd.f32 %v1726, %v2051
      %v2114 = vadd.f32 %v1727, %v2056
      %v2115 = vadd.f32 %v1728, %v2061
      %v2116 = vadd.f32 %v1729, %v2066
      %v2117 = vadd.f32 %v1730, %v2071
      %v2118 = vadd.f32 %v1731, %v2076
      %v2119 = vadd.f32 %v1732, %v2081
      %v2120 = vadd.f32 %v1733, %v2086
      %v2121 = vld [vmem:[%s1346 + $0x2] sm:$0xff]
      %v2122 = vld [vmem:[%s1346 + $0xa] sm:$0xff]
      %v2123 = vld [vmem:[%s1346 + $0x1a] sm:$0xff]
      %v2124 = vld [vmem:[%s1346 + $0x22] sm:$0xff]
      %v2125 = vld [vmem:[%s1346 + $0x32] sm:$0xff]
      %v2126 = vld [vmem:[%s1346 + $0x3a] sm:$0xff]
      %v2127 = vld [vmem:[%s1346 + $0x4a] sm:$0xff]
      %v2128 = vld [vmem:[%s1346 + $0x52] sm:$0xff]
      %v2129 = vld [vmem:[%s1346 + $0x62] sm:$0xff]
      %v2130 = vld [vmem:[%s1346 + $0x6a] sm:$0xff]
      %v2131 = vld [vmem:[%s1346 + $0x7a] sm:$0xff]
      %v2132 = vld [vmem:[%s1346 + $0x82] sm:$0xff]
      %v2133 = vld [vmem:[%s1346 + $0x92] sm:$0xff]
      %v2134 = vld [vmem:[%s1346 + $0x9a] sm:$0xff]
      %v2135 = vld [vmem:[%s1346 + $0xaa] sm:$0xff]
      %v2136 = vld [vmem:[%s1346 + $0xb2] sm:$0xff]
      %v2137 = vld [vmem:[%s1346 + $0xc2] sm:$0xff]
      %v2138 = vld [vmem:[%s1346 + $0xca] sm:$0xff]
      %v2139 = vld [vmem:[%s1346 + $0xda] sm:$0xff]
      %v2140 = vld [vmem:[%s1346 + $0xe2] sm:$0xff]
      %v2141 = vld [vmem:[%s1346 + $0xf2] sm:$0xff]
      %v2142 = vld [vmem:[%s1346 + $0xfa] sm:$0xff]
      %v2143 = vld [vmem:[%s1346 + $0x10a] sm:$0xff]
      %v2144 = vld [vmem:[%s1346 + $0x112] sm:$0xff]
      %v2145 = vld [vmem:[%s1346 + $0x122] sm:$0xff]
      %v2146 = vld [vmem:[%s1346 + $0x12a] sm:$0xff]
      %v2147 = vld [vmem:[%s1346 + $0x13a] sm:$0xff]
      %v2148 = vld [vmem:[%s1346 + $0x142] sm:$0xff]
      %v2149 = vld [vmem:[%s1346 + $0x152] sm:$0xff]
      %v2150 = vld [vmem:[%s1346 + $0x15a] sm:$0xff]
      %v2151 = vld [vmem:[%s1346 + $0x16a] sm:$0xff]
      %v2152 = vld [vmem:[%s1346 + $0x172] sm:$0xff]
      %s2153 = scalar_lea.vmem %s1, 40
      %v2154 = vld [vmem:[%s2153] sm:$0xff]
      %v2156 = vsel %vm316, %v2121, 0
      %v2159 = vsel %vm316, %v2122, 0
      %v2162 = vsel %vm316, %v2123, 0
      %v2165 = vsel %vm316, %v2124, 0
      %v2168 = vsel %vm316, %v2125, 0
      %v2171 = vsel %vm316, %v2126, 0
      %v2174 = vsel %vm316, %v2127, 0
      %v2177 = vsel %vm316, %v2128, 0
      %v2180 = vsel %vm316, %v2129, 0
      %v2183 = vsel %vm316, %v2130, 0
      %v2186 = vsel %vm316, %v2131, 0
      %v2189 = vsel %vm316, %v2132, 0
      %v2192 = vsel %vm316, %v2133, 0
      %v2195 = vsel %vm316, %v2134, 0
      %v2198 = vsel %vm316, %v2135, 0
      %v2201 = vsel %vm316, %v2136, 0
      %v2204 = vsel %vm316, %v2137, 0
      %v2207 = vsel %vm316, %v2138, 0
      %v2210 = vsel %vm316, %v2139, 0
      %v2213 = vsel %vm316, %v2140, 0
      %v2216 = vsel %vm316, %v2141, 0
      %v2219 = vsel %vm316, %v2142, 0
      %v2222 = vsel %vm316, %v2143, 0
      %v2225 = vsel %vm316, %v2144, 0
      %v2228 = vsel %vm316, %v2145, 0
      %v2231 = vsel %vm316, %v2146, 0
      %v2234 = vsel %vm316, %v2147, 0
      %v2237 = vsel %vm316, %v2148, 0
      %v2240 = vsel %vm316, %v2149, 0
      %v2243 = vsel %vm316, %v2150, 0
      %v2246 = vsel %vm316, %v2151, 0
      %v2249 = vsel %vm316, %v2152, 0
      %2251 = vmatprep.subr.mxu0 0.0
      %2252 = vmatpush1.msra.mxu0 %v2154
      %2253 = vmatprep.subr.mxu0 0.0
      %2254 = vmatpush1.msra.mxu0 0.0
      %2255 = vmatprep.subr.mxu0 0.0
      %2256 = vmatpush1.msra.mxu0 0.0
      %2257 = vmatprep.subr.mxu0 0.0
      %2258 = vmatpush1.msra.mxu0 0.0
      %2259 = vmatprep.subr.mxu0 0.0
      %2260 = vmatpush1.msra.mxu0 0.0
      %2261 = vmatprep.subr.mxu0 0.0
      %2262 = vmatpush1.msra.mxu0 0.0
      %2263 = vmatprep.subr.mxu0 0.0
      %2264 = vmatpush1.msra.mxu0 0.0
      %2265 = vmatprep.subr.mxu0 0.0
      %2266 = vmatpush1.msra.mxu0 0.0
      %2267 = vmatprep.subr.mxu0 0.0
      %2268 = vmatpush1.msra.mxu0 0.0
      %2269 = vmatprep.subr.mxu0 0.0
      %2270 = vmatpush1.msra.mxu0 0.0
      %2271 = vmatprep.subr.mxu0 0.0
      %2272 = vmatpush1.msra.mxu0 0.0
      %2273 = vmatprep.subr.mxu0 0.0
      %2274 = vmatpush1.msra.mxu0 0.0
      %2275 = vmatprep.subr.mxu0 0.0
      %2276 = vmatpush1.msra.mxu0 0.0
      %2277 = vmatprep.subr.mxu0 0.0
      %2278 = vmatpush1.msra.mxu0 0.0
      %2279 = vmatprep.subr.mxu0 0.0
      %2280 = vmatpush1.msra.mxu0 0.0
      %2281 = vmatprep.subr.mxu0 0.0
      %2282 = vmatpush1.msra.mxu0 0.0
      %2283 = vmatprep.subr.mxu0 0.0
      %2284 = vmatpush1.msra.mxu0 0.0
      %2285 = vmatprep.subr.mxu0 0.0
      %2286 = vmatpush1.msra.mxu0 0.0
      %2287 = vmatprep.subr.mxu0 0.0
      %2288 = vmatpush1.msra.mxu0 0.0
      %2289 = vmatprep.subr.mxu0 0.0
      %2290 = vmatpush1.msra.mxu0 0.0
      %2291 = vmatprep.subr.mxu0 0.0
      %2292 = vmatpush1.msra.mxu0 0.0
      %2293 = vmatprep.subr.mxu0 0.0
      %2294 = vmatpush1.msra.mxu0 0.0
      %2295 = vmatprep.subr.mxu0 0.0
      %2296 = vmatpush1.msra.mxu0 0.0
      %2297 = vmatprep.subr.mxu0 0.0
      %2298 = vmatpush1.msra.mxu0 0.0
      %2299 = vmatprep.subr.mxu0 0.0
      %2300 = vmatpush1.msra.mxu0 0.0
      %2301 = vmatprep.subr.mxu0 0.0
      %2302 = vmatpush1.msra.mxu0 0.0
      %2303 = vmatprep.subr.mxu0 0.0
      %2304 = vmatpush1.msra.mxu0 0.0
      %2305 = vmatprep.subr.mxu0 0.0
      %2306 = vmatpush1.msra.mxu0 0.0
      %2307 = vmatprep.subr.mxu0 0.0
      %2308 = vmatpush1.msra.mxu0 0.0
      %2309 = vmatprep.subr.mxu0 0.0
      %2310 = vmatpush1.msra.mxu0 0.0
      %2311 = vmatprep.subr.mxu0 0.0
      %2312 = vmatpush1.msra.mxu0 0.0
      %2313 = vmatprep.subr.mxu0 0.0
      %2314 = vmatpush1.msra.mxu0 0.0
      %2315 = vmatprep.mubr.f32.mxu0 0.0
      %2316 = vmatmul.mubr.f32.gmra.mrb[0].mxu0 %v2156
      %v2317 = vpop.f32.mrb[0].mxu0
      %v2318 = vadd.f32 0.0, %v2317
      %v2319 = vpop.f32.mrb[0].mxu0
      %2320 = vmatprep.mubr.f32.mxu0 0.0
      %2321 = vmatmul.mubr.f32.gmra.mrb[0].mxu0 %v2159
      %v2322 = vpop.f32.mrb[0].mxu0
      %v2323 = vadd.f32 0.0, %v2322
      %v2324 = vpop.f32.mrb[0].mxu0
      %2325 = vmatprep.mubr.f32.mxu0 0.0
      %2326 = vmatmul.mubr.f32.gmra.mrb[0].mxu0 %v2162
      %v2327 = vpop.f32.mrb[0].mxu0
      %v2328 = vadd.f32 0.0, %v2327
      %v2329 = vpop.f32.mrb[0].mxu0
      %2330 = vmatprep.mubr.f32.mxu0 0.0
      %2331 = vmatmul.mubr.f32.gmra.mrb[0].mxu0 %v2165
      %v2332 = vpop.f32.mrb[0].mxu0
      %v2333 = vadd.f32 0.0, %v2332
      %v2334 = vpop.f32.mrb[0].mxu0
      %2335 = vmatprep.mubr.f32.mxu0 0.0
      %2336 = vmatmul.mubr.f32.gmra.mrb[0].mxu0 %v2168
      %v2337 = vpop.f32.mrb[0].mxu0
      %v2338 = vadd.f32 0.0, %v2337
      %v2339 = vpop.f32.mrb[0].mxu0
      %2340 = vmatprep.mubr.f32.mxu0 0.0
      %2341 = vmatmul.mubr.f32.gmra.mrb[0].mxu0 %v2171
      %v2342 = vpop.f32.mrb[0].mxu0
      %v2343 = vadd.f32 0.0, %v2342
      %v2344 = vpop.f32.mrb[0].mxu0
      %2345 = vmatprep.mubr.f32.mxu0 0.0
      %2346 = vmatmul.mubr.f32.gmra.mrb[0].mxu0 %v2174
      %v2347 = vpop.f32.mrb[0].mxu0
      %v2348 = vadd.f32 0.0, %v2347
      %v2349 = vpop.f32.mrb[0].mxu0
      %2350 = vmatprep.mubr.f32.mxu0 0.0
      %2351 = vmatmul.mubr.f32.gmra.mrb[0].mxu0 %v2177
      %v2352 = vpop.f32.mrb[0].mxu0
      %v2353 = vadd.f32 0.0, %v2352
      %v2354 = vpop.f32.mrb[0].mxu0
      %2355 = vmatprep.mubr.f32.mxu0 0.0
      %2356 = vmatmul.mubr.f32.gmra.mrb[0].mxu0 %v2180
      %v2357 = vpop.f32.mrb[0].mxu0
      %v2358 = vadd.f32 0.0, %v2357
      %v2359 = vpop.f32.mrb[0].mxu0
      %2360 = vmatprep.mubr.f32.mxu0 0.0
      %2361 = vmatmul.mubr.f32.gmra.mrb[0].mxu0 %v2183
      %v2362 = vpop.f32.mrb[0].mxu0
      %v2363 = vadd.f32 0.0, %v2362
      %v2364 = vpop.f32.mrb[0].mxu0
      %2365 = vmatprep.mubr.f32.mxu0 0.0
      %2366 = vmatmul.mubr.f32.gmra.mrb[0].mxu0 %v2186
      %v2367 = vpop.f32.mrb[0].mxu0
      %v2368 = vadd.f32 0.0, %v2367
      %v2369 = vpop.f32.mrb[0].mxu0
      %2370 = vmatprep.mubr.f32.mxu0 0.0
      %2371 = vmatmul.mubr.f32.gmra.mrb[0].mxu0 %v2189
      %v2372 = vpop.f32.mrb[0].mxu0
      %v2373 = vadd.f32 0.0, %v2372
      %v2374 = vpop.f32.mrb[0].mxu0
      %2375 = vmatprep.mubr.f32.mxu0 0.0
      %2376 = vmatmul.mubr.f32.gmra.mrb[0].mxu0 %v2192
      %v2377 = vpop.f32.mrb[0].mxu0
      %v2378 = vadd.f32 0.0, %v2377
      %v2379 = vpop.f32.mrb[0].mxu0
      %2380 = vmatprep.mubr.f32.mxu0 0.0
      %2381 = vmatmul.mubr.f32.gmra.mrb[0].mxu0 %v2195
      %v2382 = vpop.f32.mrb[0].mxu0
      %v2383 = vadd.f32 0.0, %v2382
      %v2384 = vpop.f32.mrb[0].mxu0
      %2385 = vmatprep.mubr.f32.mxu0 0.0
      %2386 = vmatmul.mubr.f32.gmra.mrb[0].mxu0 %v2198
      %v2387 = vpop.f32.mrb[0].mxu0
      %v2388 = vadd.f32 0.0, %v2387
      %v2389 = vpop.f32.mrb[0].mxu0
      %2390 = vmatprep.mubr.f32.mxu0 0.0
      %2391 = vmatmul.mubr.f32.gmra.mrb[0].mxu0 %v2201
      %v2392 = vpop.f32.mrb[0].mxu0
      %v2393 = vadd.f32 0.0, %v2392
      %v2394 = vpop.f32.mrb[0].mxu0
      %2395 = vmatprep.mubr.f32.mxu0 0.0
      %2396 = vmatmul.mubr.f32.gmra.mrb[0].mxu0 %v2204
      %v2397 = vpop.f32.mrb[0].mxu0
      %v2398 = vadd.f32 0.0, %v2397
      %v2399 = vpop.f32.mrb[0].mxu0
      %2400 = vmatprep.mubr.f32.mxu0 0.0
      %2401 = vmatmul.mubr.f32.gmra.mrb[0].mxu0 %v2207
      %v2402 = vpop.f32.mrb[0].mxu0
      %v2403 = vadd.f32 0.0, %v2402
      %v2404 = vpop.f32.mrb[0].mxu0
      %2405 = vmatprep.mubr.f32.mxu0 0.0
      %2406 = vmatmul.mubr.f32.gmra.mrb[0].mxu0 %v2210
      %v2407 = vpop.f32.mrb[0].mxu0
      %v2408 = vadd.f32 0.0, %v2407
      %v2409 = vpop.f32.mrb[0].mxu0
      %2410 = vmatprep.mubr.f32.mxu0 0.0
      %2411 = vmatmul.mubr.f32.gmra.mrb[0].mxu0 %v2213
      %v2412 = vpop.f32.mrb[0].mxu0
      %v2413 = vadd.f32 0.0, %v2412
      %v2414 = vpop.f32.mrb[0].mxu0
      %2415 = vmatprep.mubr.f32.mxu0 0.0
      %2416 = vmatmul.mubr.f32.gmra.mrb[0].mxu0 %v2216
      %v2417 = vpop.f32.mrb[0].mxu0
      %v2418 = vadd.f32 0.0, %v2417
      %v2419 = vpop.f32.mrb[0].mxu0
      %2420 = vmatprep.mubr.f32.mxu0 0.0
      %2421 = vmatmul.mubr.f32.gmra.mrb[0].mxu0 %v2219
      %v2422 = vpop.f32.mrb[0].mxu0
      %v2423 = vadd.f32 0.0, %v2422
      %v2424 = vpop.f32.mrb[0].mxu0
      %2425 = vmatprep.mubr.f32.mxu0 0.0
      %2426 = vmatmul.mubr.f32.gmra.mrb[0].mxu0 %v2222
      %v2427 = vpop.f32.mrb[0].mxu0
      %v2428 = vadd.f32 0.0, %v2427
      %v2429 = vpop.f32.mrb[0].mxu0
      %2430 = vmatprep.mubr.f32.mxu0 0.0
      %2431 = vmatmul.mubr.f32.gmra.mrb[0].mxu0 %v2225
      %v2432 = vpop.f32.mrb[0].mxu0
      %v2433 = vadd.f32 0.0, %v2432
      %v2434 = vpop.f32.mrb[0].mxu0
      %2435 = vmatprep.mubr.f32.mxu0 0.0
      %2436 = vmatmul.mubr.f32.gmra.mrb[0].mxu0 %v2228
      %v2437 = vpop.f32.mrb[0].mxu0
      %v2438 = vadd.f32 0.0, %v2437
      %v2439 = vpop.f32.mrb[0].mxu0
      %2440 = vmatprep.mubr.f32.mxu0 0.0
      %2441 = vmatmul.mubr.f32.gmra.mrb[0].mxu0 %v2231
      %v2442 = vpop.f32.mrb[0].mxu0
      %v2443 = vadd.f32 0.0, %v2442
      %v2444 = vpop.f32.mrb[0].mxu0
      %2445 = vmatprep.mubr.f32.mxu0 0.0
      %2446 = vmatmul.mubr.f32.gmra.mrb[0].mxu0 %v2234
      %v2447 = vpop.f32.mrb[0].mxu0
      %v2448 = vadd.f32 0.0, %v2447
      %v2449 = vpop.f32.mrb[0].mxu0
      %2450 = vmatprep.mubr.f32.mxu0 0.0
      %2451 = vmatmul.mubr.f32.gmra.mrb[0].mxu0 %v2237
      %v2452 = vpop.f32.mrb[0].mxu0
      %v2453 = vadd.f32 0.0, %v2452
      %v2454 = vpop.f32.mrb[0].mxu0
      %2455 = vmatprep.mubr.f32.mxu0 0.0
      %2456 = vmatmul.mubr.f32.gmra.mrb[0].mxu0 %v2240
      %v2457 = vpop.f32.mrb[0].mxu0
      %v2458 = vadd.f32 0.0, %v2457
      %v2459 = vpop.f32.mrb[0].mxu0
      %2460 = vmatprep.mubr.f32.mxu0 0.0
      %2461 = vmatmul.mubr.f32.gmra.mrb[0].mxu0 %v2243
      %v2462 = vpop.f32.mrb[0].mxu0
      %v2463 = vadd.f32 0.0, %v2462
      %v2464 = vpop.f32.mrb[0].mxu0
      %2465 = vmatprep.mubr.f32.mxu0 0.0
      %2466 = vmatmul.mubr.f32.gmra.mrb[0].mxu0 %v2246
      %v2467 = vpop.f32.mrb[0].mxu0
      %v2468 = vadd.f32 0.0, %v2467
      %v2469 = vpop.f32.mrb[0].mxu0
      %2470 = vmatprep.mubr.f32.mxu0 0.0
      %2471 = vmatmul.mubr.f32.gmra.mrb[0].mxu0 %v2249
      %v2472 = vpop.f32.mrb[0].mxu0
      %v2473 = vadd.f32 0.0, %v2472
      %v2474 = vpop.f32.mrb[0].mxu0
      %2475 = vdwg.mxu0
      %v2476 = vadd.f32 %v2089, %v2318
      %v2477 = vadd.f32 %v2090, %v2323
      %v2478 = vadd.f32 %v2091, %v2328
      %v2479 = vadd.f32 %v2092, %v2333
      %v2480 = vadd.f32 %v2093, %v2338
      %v2481 = vadd.f32 %v2094, %v2343
      %v2482 = vadd.f32 %v2095, %v2348
      %v2483 = vadd.f32 %v2096, %v2353
      %v2484 = vadd.f32 %v2097, %v2358
      %v2485 = vadd.f32 %v2098, %v2363
      %v2486 = vadd.f32 %v2099, %v2368
      %v2487 = vadd.f32 %v2100, %v2373
      %v2488 = vadd.f32 %v2101, %v2378
      %v2489 = vadd.f32 %v2102, %v2383
      %v2490 = vadd.f32 %v2103, %v2388
      %v2491 = vadd.f32 %v2104, %v2393
      %v2492 = vadd.f32 %v2105, %v2398
      %v2493 = vadd.f32 %v2106, %v2403
      %v2494 = vadd.f32 %v2107, %v2408
      %v2495 = vadd.f32 %v2108, %v2413
      %v2496 = vadd.f32 %v2109, %v2418
      %v2497 = vadd.f32 %v2110, %v2423
      %v2498 = vadd.f32 %v2111, %v2428
      %v2499 = vadd.f32 %v2112, %v2433
      %v2500 = vadd.f32 %v2113, %v2438
      %v2501 = vadd.f32 %v2114, %v2443
      %v2502 = vadd.f32 %v2115, %v2448
      %v2503 = vadd.f32 %v2116, %v2453
      %v2504 = vadd.f32 %v2117, %v2458
      %v2505 = vadd.f32 %v2118, %v2463
      %v2506 = vadd.f32 %v2119, %v2468
      %v2507 = vadd.f32 %v2120, %v2473
      %s2508 = scalar_lea.vmem %s226, 48
      %v2509 = vld [vmem:[%s2508] sm:$0xff]
      %v2510 = vld [vmem:[%s2508 + $0x8] sm:$0xff]
      %v2511 = vld [vmem:[%s2508 + $0x18] sm:$0xff]
      %v2512 = vld [vmem:[%s2508 + $0x20] sm:$0xff]
      %v2513 = vld [vmem:[%s2508 + $0x30] sm:$0xff]
      %v2514 = vld [vmem:[%s2508 + $0x38] sm:$0xff]
      %v2515 = vld [vmem:[%s2508 + $0x48] sm:$0xff]
      %v2516 = vld [vmem:[%s2508 + $0x50] sm:$0xff]
      %v2517 = vld [vmem:[%s2508 + $0x60] sm:$0xff]
      %v2518 = vld [vmem:[%s2508 + $0x68] sm:$0xff]
      %v2519 = vld [vmem:[%s2508 + $0x78] sm:$0xff]
      %v2520 = vld [vmem:[%s2508 + $0x80] sm:$0xff]
      %v2521 = vld [vmem:[%s2508 + $0x90] sm:$0xff]
      %v2522 = vld [vmem:[%s2508 + $0x98] sm:$0xff]
      %v2523 = vld [vmem:[%s2508 + $0xa8] sm:$0xff]
      %v2524 = vld [vmem:[%s2508 + $0xb0] sm:$0xff]
      %v2525 = vld [vmem:[%s2508 + $0xc0] sm:$0xff]
      %v2526 = vld [vmem:[%s2508 + $0xc8] sm:$0xff]
      %v2527 = vld [vmem:[%s2508 + $0xd8] sm:$0xff]
      %v2528 = vld [vmem:[%s2508 + $0xe0] sm:$0xff]
      %v2529 = vld [vmem:[%s2508 + $0xf0] sm:$0xff]
      %v2530 = vld [vmem:[%s2508 + $0xf8] sm:$0xff]
      %v2531 = vld [vmem:[%s2508 + $0x108] sm:$0xff]
      %v2532 = vld [vmem:[%s2508 + $0x110] sm:$0xff]
      %v2533 = vld [vmem:[%s2508 + $0x120] sm:$0xff]
      %v2534 = vld [vmem:[%s2508 + $0x128] sm:$0xff]
      %v2535 = vld [vmem:[%s2508 + $0x138] sm:$0xff]
      %v2536 = vld [vmem:[%s2508 + $0x140] sm:$0xff]
      %v2537 = vld [vmem:[%s2508 + $0x150] sm:$0xff]
      %v2538 = vld [vmem:[%s2508 + $0x158] sm:$0xff]
      %v2539 = vld [vmem:[%s2508 + $0x168] sm:$0xff]
      %v2540 = vld [vmem:[%s2508 + $0x170] sm:$0xff]
      %s2541 = scalar_lea.vmem %s1, 48
      %v2542 = vld [vmem:[%s2541] sm:$0xff]
      %v2544 = vsel %vm316, %v2509, 0
      %v2547 = vsel %vm316, %v2510, 0
      %v2550 = vsel %vm316, %v2511, 0
      %v2553 = vsel %vm316, %v2512, 0
      %v2556 = vsel %vm316, %v2513, 0
      %v2559 = vsel %vm316, %v2514, 0
      %v2562 = vsel %vm316, %v2515, 0
      %v2565 = vsel %vm316, %v2516, 0
      %v2568 = vsel %vm316, %v2517, 0
      %v2571 = vsel %vm316, %v2518, 0
      %v2574 = vsel %vm316, %v2519, 0
      %v2577 = vsel %vm316, %v2520, 0
      %v2580 = vsel %vm316, %v2521, 0
      %v2583 = vsel %vm316, %v2522, 0
      %v2586 = vsel %vm316, %v2523, 0
      %v2589 = vsel %vm316, %v2524, 0
      %v2592 = vsel %vm316, %v2525, 0
      %v2595 = vsel %vm316, %v2526, 0
      %v2598 = vsel %vm316, %v2527, 0
      %v2601 = vsel %vm316, %v2528, 0
      %v2604 = vsel %vm316, %v2529, 0
      %v2607 = vsel %vm316, %v2530, 0
      %v2610 = vsel %vm316, %v2531, 0
      %v2613 = vsel %vm316, %v2532, 0
      %v2616 = vsel %vm316, %v2533, 0
      %v2619 = vsel %vm316, %v2534, 0
      %v2622 = vsel %vm316, %v2535, 0
      %v2625 = vsel %vm316, %v2536, 0
      %v2628 = vsel %vm316, %v2537, 0
      %v2631 = vsel %vm316, %v2538, 0
      %v2634 = vsel %vm316, %v2539, 0
      %v2637 = vsel %vm316, %v2540, 0
      %2639 = vmatprep.subr.mxu0 0.0
      %2640 = vmatpush1.msra.mxu0 %v2542
      %2641 = vmatprep.subr.mxu0 0.0
      %2642 = vmatpush1.msra.mxu0 0.0
      %2643 = vmatprep.subr.mxu0 0.0
      %2644 = vmatpush1.msra.mxu0 0.0
      %2645 = vmatprep.subr.mxu0 0.0
      %2646 = vmatpush1.msra.mxu0 0.0
      %2647 = vmatprep.subr.mxu0 0.0
      %2648 = vmatpush1.msra.mxu0 0.0
      %2649 = vmatprep.subr.mxu0 0.0
      %2650 = vmatpush1.msra.mxu0 0.0
      %2651 = vmatprep.subr.mxu0 0.0
      %2652 = vmatpush1.msra.mxu0 0.0
      %2653 = vmatprep.subr.mxu0 0.0
      %2654 = vmatpush1.msra.mxu0 0.0
      %2655 = vmatprep.subr.mxu0 0.0
      %2656 = vmatpush1.msra.mxu0 0.0
      %2657 = vmatprep.subr.mxu0 0.0
      %2658 = vmatpush1.msra.mxu0 0.0
      %2659 = vmatprep.subr.mxu0 0.0
      %2660 = vmatpush1.msra.mxu0 0.0
      %2661 = vmatprep.subr.mxu0 0.0
      %2662 = vmatpush1.msra.mxu0 0.0
      %2663 = vmatprep.subr.mxu0 0.0
      %2664 = vmatpush1.msra.mxu0 0.0
      %2665 = vmatprep.subr.mxu0 0.0
      %2666 = vmatpush1.msra.mxu0 0.0
      %2667 = vmatprep.subr.mxu0 0.0
      %2668 = vmatpush1.msra.mxu0 0.0
      %2669 = vmatprep.subr.mxu0 0.0
      %2670 = vmatpush1.msra.mxu0 0.0
      %2671 = vmatprep.subr.mxu0 0.0
      %2672 = vmatpush1.msra.mxu0 0.0
      %2673 = vmatprep.subr.mxu0 0.0
      %2674 = vmatpush1.msra.mxu0 0.0
      %2675 = vmatprep.subr.mxu0 0.0
      %2676 = vmatpush1.msra.mxu0 0.0
      %2677 = vmatprep.subr.mxu0 0.0
      %2678 = vmatpush1.msra.mxu0 0.0
      %2679 = vmatprep.subr.mxu0 0.0
      %2680 = vmatpush1.msra.mxu0 0.0
      %2681 = vmatprep.subr.mxu0 0.0
      %2682 = vmatpush1.msra.mxu0 0.0
      %2683 = vmatprep.subr.mxu0 0.0
      %2684 = vmatpush1.msra.mxu0 0.0
      %2685 = vmatprep.subr.mxu0 0.0
      %2686 = vmatpush1.msra.mxu0 0.0
      %2687 = vmatprep.subr.mxu0 0.0
      %2688 = vmatpush1.msra.mxu0 0.0
      %2689 = vmatprep.subr.mxu0 0.0
      %2690 = vmatpush1.msra.mxu0 0.0
      %2691 = vmatprep.subr.mxu0 0.0
      %2692 = vmatpush1.msra.mxu0 0.0
      %2693 = vmatprep.subr.mxu0 0.0
      %2694 = vmatpush1.msra.mxu0 0.0
      %2695 = vmatprep.subr.mxu0 0.0
      %2696 = vmatpush1.msra.mxu0 0.0
      %2697 = vmatprep.subr.mxu0 0.0
      %2698 = vmatpush1.msra.mxu0 0.0
      %2699 = vmatprep.subr.mxu0 0.0
      %2700 = vmatpush1.msra.mxu0 0.0
      %2701 = vmatprep.subr.mxu0 0.0
      %2702 = vmatpush1.msra.mxu0 0.0
      %2703 = vmatprep.mubr.f32.mxu0 0.0
      %2704 = vmatmul.mubr.f32.gmra.mrb[0].mxu0 %v2544
      %v2705 = vpop.f32.mrb[0].mxu0
      %v2706 = vadd.f32 0.0, %v2705
      %v2707 = vpop.f32.mrb[0].mxu0
      %2708 = vmatprep.mubr.f32.mxu0 0.0
      %2709 = vmatmul.mubr.f32.gmra.mrb[0].mxu0 %v2547
      %v2710 = vpop.f32.mrb[0].mxu0
      %v2711 = vadd.f32 0.0, %v2710
      %v2712 = vpop.f32.mrb[0].mxu0
      %2713 = vmatprep.mubr.f32.mxu0 0.0
      %2714 = vmatmul.mubr.f32.gmra.mrb[0].mxu0 %v2550
      %v2715 = vpop.f32.mrb[0].mxu0
      %v2716 = vadd.f32 0.0, %v2715
      %v2717 = vpop.f32.mrb[0].mxu0
      %2718 = vmatprep.mubr.f32.mxu0 0.0
      %2719 = vmatmul.mubr.f32.gmra.mrb[0].mxu0 %v2553
      %v2720 = vpop.f32.mrb[0].mxu0
      %v2721 = vadd.f32 0.0, %v2720
      %v2722 = vpop.f32.mrb[0].mxu0
      %2723 = vmatprep.mubr.f32.mxu0 0.0
      %2724 = vmatmul.mubr.f32.gmra.mrb[0].mxu0 %v2556
      %v2725 = vpop.f32.mrb[0].mxu0
      %v2726 = vadd.f32 0.0, %v2725
      %v2727 = vpop.f32.mrb[0].mxu0
      %2728 = vmatprep.mubr.f32.mxu0 0.0
      %2729 = vmatmul.mubr.f32.gmra.mrb[0].mxu0 %v2559
      %v2730 = vpop.f32.mrb[0].mxu0
      %v2731 = vadd.f32 0.0, %v2730
      %v2732 = vpop.f32.mrb[0].mxu0
      %2733 = vmatprep.mubr.f32.mxu0 0.0
      %2734 = vmatmul.mubr.f32.gmra.mrb[0].mxu0 %v2562
      %v2735 = vpop.f32.mrb[0].mxu0
      %v2736 = vadd.f32 0.0, %v2735
      %v2737 = vpop.f32.mrb[0].mxu0
      %2738 = vmatprep.mubr.f32.mxu0 0.0
      %2739 = vmatmul.mubr.f32.gmra.mrb[0].mxu0 %v2565
      %v2740 = vpop.f32.mrb[0].mxu0
      %v2741 = vadd.f32 0.0, %v2740
      %v2742 = vpop.f32.mrb[0].mxu0
      %2743 = vmatprep.mubr.f32.mxu0 0.0
      %2744 = vmatmul.mubr.f32.gmra.mrb[0].mxu0 %v2568
      %v2745 = vpop.f32.mrb[0].mxu0
      %v2746 = vadd.f32 0.0, %v2745
      %v2747 = vpop.f32.mrb[0].mxu0
      %2748 = vmatprep.mubr.f32.mxu0 0.0
      %2749 = vmatmul.mubr.f32.gmra.mrb[0].mxu0 %v2571
      %v2750 = vpop.f32.mrb[0].mxu0
      %v2751 = vadd.f32 0.0, %v2750
      %v2752 = vpop.f32.mrb[0].mxu0
      %2753 = vmatprep.mubr.f32.mxu0 0.0
      %2754 = vmatmul.mubr.f32.gmra.mrb[0].mxu0 %v2574
      %v2755 = vpop.f32.mrb[0].mxu0
      %v2756 = vadd.f32 0.0, %v2755
      %v2757 = vpop.f32.mrb[0].mxu0
      %2758 = vmatprep.mubr.f32.mxu0 0.0
      %2759 = vmatmul.mubr.f32.gmra.mrb[0].mxu0 %v2577
      %v2760 = vpop.f32.mrb[0].mxu0
      %v2761 = vadd.f32 0.0, %v2760
      %v2762 = vpop.f32.mrb[0].mxu0
      %2763 = vmatprep.mubr.f32.mxu0 0.0
      %2764 = vmatmul.mubr.f32.gmra.mrb[0].mxu0 %v2580
      %v2765 = vpop.f32.mrb[0].mxu0
      %v2766 = vadd.f32 0.0, %v2765
      %v2767 = vpop.f32.mrb[0].mxu0
      %2768 = vmatprep.mubr.f32.mxu0 0.0
      %2769 = vmatmul.mubr.f32.gmra.mrb[0].mxu0 %v2583
      %v2770 = vpop.f32.mrb[0].mxu0
      %v2771 = vadd.f32 0.0, %v2770
      %v2772 = vpop.f32.mrb[0].mxu0
      %2773 = vmatprep.mubr.f32.mxu0 0.0
      %2774 = vmatmul.mubr.f32.gmra.mrb[0].mxu0 %v2586
      %v2775 = vpop.f32.mrb[0].mxu0
      %v2776 = vadd.f32 0.0, %v2775
      %v2777 = vpop.f32.mrb[0].mxu0
      %2778 = vmatprep.mubr.f32.mxu0 0.0
      %2779 = vmatmul.mubr.f32.gmra.mrb[0].mxu0 %v2589
      %v2780 = vpop.f32.mrb[0].mxu0
      %v2781 = vadd.f32 0.0, %v2780
      %v2782 = vpop.f32.mrb[0].mxu0
      %2783 = vmatprep.mubr.f32.mxu0 0.0
      %2784 = vmatmul.mubr.f32.gmra.mrb[0].mxu0 %v2592
      %v2785 = vpop.f32.mrb[0].mxu0
      %v2786 = vadd.f32 0.0, %v2785
      %v2787 = vpop.f32.mrb[0].mxu0
      %2788 = vmatprep.mubr.f32.mxu0 0.0
      %2789 = vmatmul.mubr.f32.gmra.mrb[0].mxu0 %v2595
      %v2790 = vpop.f32.mrb[0].mxu0
      %v2791 = vadd.f32 0.0, %v2790
      %v2792 = vpop.f32.mrb[0].mxu0
      %2793 = vmatprep.mubr.f32.mxu0 0.0
      %2794 = vmatmul.mubr.f32.gmra.mrb[0].mxu0 %v2598
      %v2795 = vpop.f32.mrb[0].mxu0
      %v2796 = vadd.f32 0.0, %v2795
      %v2797 = vpop.f32.mrb[0].mxu0
      %2798 = vmatprep.mubr.f32.mxu0 0.0
      %2799 = vmatmul.mubr.f32.gmra.mrb[0].mxu0 %v2601
      %v2800 = vpop.f32.mrb[0].mxu0
      %v2801 = vadd.f32 0.0, %v2800
      %v2802 = vpop.f32.mrb[0].mxu0
      %2803 = vmatprep.mubr.f32.mxu0 0.0
      %2804 = vmatmul.mubr.f32.gmra.mrb[0].mxu0 %v2604
      %v2805 = vpop.f32.mrb[0].mxu0
      %v2806 = vadd.f32 0.0, %v2805
      %v2807 = vpop.f32.mrb[0].mxu0
      %2808 = vmatprep.mubr.f32.mxu0 0.0
      %2809 = vmatmul.mubr.f32.gmra.mrb[0].mxu0 %v2607
      %v2810 = vpop.f32.mrb[0].mxu0
      %v2811 = vadd.f32 0.0, %v2810
      %v2812 = vpop.f32.mrb[0].mxu0
      %2813 = vmatprep.mubr.f32.mxu0 0.0
      %2814 = vmatmul.mubr.f32.gmra.mrb[0].mxu0 %v2610
      %v2815 = vpop.f32.mrb[0].mxu0
      %v2816 = vadd.f32 0.0, %v2815
      %v2817 = vpop.f32.mrb[0].mxu0
      %2818 = vmatprep.mubr.f32.mxu0 0.0
      %2819 = vmatmul.mubr.f32.gmra.mrb[0].mxu0 %v2613
      %v2820 = vpop.f32.mrb[0].mxu0
      %v2821 = vadd.f32 0.0, %v2820
      %v2822 = vpop.f32.mrb[0].mxu0
      %2823 = vmatprep.mubr.f32.mxu0 0.0
      %2824 = vmatmul.mubr.f32.gmra.mrb[0].mxu0 %v2616
      %v2825 = vpop.f32.mrb[0].mxu0
      %v2826 = vadd.f32 0.0, %v2825
      %v2827 = vpop.f32.mrb[0].mxu0
      %2828 = vmatprep.mubr.f32.mxu0 0.0
      %2829 = vmatmul.mubr.f32.gmra.mrb[0].mxu0 %v2619
      %v2830 = vpop.f32.mrb[0].mxu0
      %v2831 = vadd.f32 0.0, %v2830
      %v2832 = vpop.f32.mrb[0].mxu0
      %2833 = vmatprep.mubr.f32.mxu0 0.0
      %2834 = vmatmul.mubr.f32.gmra.mrb[0].mxu0 %v2622
      %v2835 = vpop.f32.mrb[0].mxu0
      %v2836 = vadd.f32 0.0, %v2835
      %v2837 = vpop.f32.mrb[0].mxu0
      %2838 = vmatprep.mubr.f32.mxu0 0.0
      %2839 = vmatmul.mubr.f32.gmra.mrb[0].mxu0 %v2625
      %v2840 = vpop.f32.mrb[0].mxu0
      %v2841 = vadd.f32 0.0, %v2840
      %v2842 = vpop.f32.mrb[0].mxu0
      %2843 = vmatprep.mubr.f32.mxu0 0.0
      %2844 = vmatmul.mubr.f32.gmra.mrb[0].mxu0 %v2628
      %v2845 = vpop.f32.mrb[0].mxu0
      %v2846 = vadd.f32 0.0, %v2845
      %v2847 = vpop.f32.mrb[0].mxu0
      %2848 = vmatprep.mubr.f32.mxu0 0.0
      %2849 = vmatmul.mubr.f32.gmra.mrb[0].mxu0 %v2631
      %v2850 = vpop.f32.mrb[0].mxu0
      %v2851 = vadd.f32 0.0, %v2850
      %v2852 = vpop.f32.mrb[0].mxu0
      %2853 = vmatprep.mubr.f32.mxu0 0.0
      %2854 = vmatmul.mubr.f32.gmra.mrb[0].mxu0 %v2634
      %v2855 = vpop.f32.mrb[0].mxu0
      %v2856 = vadd.f32 0.0, %v2855
      %v2857 = vpop.f32.mrb[0].mxu0
      %2858 = vmatprep.mubr.f32.mxu0 0.0
      %2859 = vmatmul.mubr.f32.gmra.mrb[0].mxu0 %v2637
      %v2860 = vpop.f32.mrb[0].mxu0
      %v2861 = vadd.f32 0.0, %v2860
      %v2862 = vpop.f32.mrb[0].mxu0
      %2863 = vdwg.mxu0
      %v2864 = vadd.f32 %v2476, %v2706
      %v2865 = vadd.f32 %v2477, %v2711
      %v2866 = vadd.f32 %v2478, %v2716
      %v2867 = vadd.f32 %v2479, %v2721
      %v2868 = vadd.f32 %v2480, %v2726
      %v2869 = vadd.f32 %v2481, %v2731
      %v2870 = vadd.f32 %v2482, %v2736
      %v2871 = vadd.f32 %v2483, %v2741
      %v2872 = vadd.f32 %v2484, %v2746
      %v2873 = vadd.f32 %v2485, %v2751
      %v2874 = vadd.f32 %v2486, %v2756
      %v2875 = vadd.f32 %v2487, %v2761
      %v2876 = vadd.f32 %v2488, %v2766
      %v2877 = vadd.f32 %v2489, %v2771
      %v2878 = vadd.f32 %v2490, %v2776
      %v2879 = vadd.f32 %v2491, %v2781
      %v2880 = vadd.f32 %v2492, %v2786
      %v2881 = vadd.f32 %v2493, %v2791
      %v2882 = vadd.f32 %v2494, %v2796
      %v2883 = vadd.f32 %v2495, %v2801
      %v2884 = vadd.f32 %v2496, %v2806
      %v2885 = vadd.f32 %v2497, %v2811
      %v2886 = vadd.f32 %v2498, %v2816
      %v2887 = vadd.f32 %v2499, %v2821
      %v2888 = vadd.f32 %v2500, %v2826
      %v2889 = vadd.f32 %v2501, %v2831
      %v2890 = vadd.f32 %v2502, %v2836
      %v2891 = vadd.f32 %v2503, %v2841
      %v2892 = vadd.f32 %v2504, %v2846
      %v2893 = vadd.f32 %v2505, %v2851
      %v2894 = vadd.f32 %v2506, %v2856
      %v2895 = vadd.f32 %v2507, %v2861
      %v2896 = vld [vmem:[%s2508 + $0x1] sm:$0xff]
      %v2897 = vld [vmem:[%s2508 + $0x9] sm:$0xff]
      %v2898 = vld [vmem:[%s2508 + $0x19] sm:$0xff]
      %v2899 = vld [vmem:[%s2508 + $0x21] sm:$0xff]
      %v2900 = vld [vmem:[%s2508 + $0x31] sm:$0xff]
      %v2901 = vld [vmem:[%s2508 + $0x39] sm:$0xff]
      %v2902 = vld [vmem:[%s2508 + $0x49] sm:$0xff]
      %v2903 = vld [vmem:[%s2508 + $0x51] sm:$0xff]
      %v2904 = vld [vmem:[%s2508 + $0x61] sm:$0xff]
      %v2905 = vld [vmem:[%s2508 + $0x69] sm:$0xff]
      %v2906 = vld [vmem:[%s2508 + $0x79] sm:$0xff]
      %v2907 = vld [vmem:[%s2508 + $0x81] sm:$0xff]
      %v2908 = vld [vmem:[%s2508 + $0x91] sm:$0xff]
      %v2909 = vld [vmem:[%s2508 + $0x99] sm:$0xff]
      %v2910 = vld [vmem:[%s2508 + $0xa9] sm:$0xff]
      %v2911 = vld [vmem:[%s2508 + $0xb1] sm:$0xff]
      %v2912 = vld [vmem:[%s2508 + $0xc1] sm:$0xff]
      %v2913 = vld [vmem:[%s2508 + $0xc9] sm:$0xff]
      %v2914 = vld [vmem:[%s2508 + $0xd9] sm:$0xff]
      %v2915 = vld [vmem:[%s2508 + $0xe1] sm:$0xff]
      %v2916 = vld [vmem:[%s2508 + $0xf1] sm:$0xff]
      %v2917 = vld [vmem:[%s2508 + $0xf9] sm:$0xff]
      %v2918 = vld [vmem:[%s2508 + $0x109] sm:$0xff]
      %v2919 = vld [vmem:[%s2508 + $0x111] sm:$0xff]
      %v2920 = vld [vmem:[%s2508 + $0x121] sm:$0xff]
      %v2921 = vld [vmem:[%s2508 + $0x129] sm:$0xff]
      %v2922 = vld [vmem:[%s2508 + $0x139] sm:$0xff]
      %v2923 = vld [vmem:[%s2508 + $0x141] sm:$0xff]
      %v2924 = vld [vmem:[%s2508 + $0x151] sm:$0xff]
      %v2925 = vld [vmem:[%s2508 + $0x159] sm:$0xff]
      %v2926 = vld [vmem:[%s2508 + $0x169] sm:$0xff]
      %v2927 = vld [vmem:[%s2508 + $0x171] sm:$0xff]
      %s2928 = scalar_lea.vmem %s1, 56
      %v2929 = vld [vmem:[%s2928] sm:$0xff]
      %v2931 = vsel %vm316, %v2896, 0
      %v2934 = vsel %vm316, %v2897, 0
      %v2937 = vsel %vm316, %v2898, 0
      %v2940 = vsel %vm316, %v2899, 0
      %v2943 = vsel %vm316, %v2900, 0
      %v2946 = vsel %vm316, %v2901, 0
      %v2949 = vsel %vm316, %v2902, 0
      %v2952 = vsel %vm316, %v2903, 0
      %v2955 = vsel %vm316, %v2904, 0
      %v2958 = vsel %vm316, %v2905, 0
      %v2961 = vsel %vm316, %v2906, 0
      %v2964 = vsel %vm316, %v2907, 0
      %v2967 = vsel %vm316, %v2908, 0
      %v2970 = vsel %vm316, %v2909, 0
      %v2973 = vsel %vm316, %v2910, 0
      %v2976 = vsel %vm316, %v2911, 0
      %v2979 = vsel %vm316, %v2912, 0
      %v2982 = vsel %vm316, %v2913, 0
      %v2985 = vsel %vm316, %v2914, 0
      %v2988 = vsel %vm316, %v2915, 0
      %v2991 = vsel %vm316, %v2916, 0
      %v2994 = vsel %vm316, %v2917, 0
      %v2997 = vsel %vm316, %v2918, 0
      %v3000 = vsel %vm316, %v2919, 0
      %v3003 = vsel %vm316, %v2920, 0
      %v3006 = vsel %vm316, %v2921, 0
      %v3009 = vsel %vm316, %v2922, 0
      %v3012 = vsel %vm316, %v2923, 0
      %v3015 = vsel %vm316, %v2924, 0
      %v3018 = vsel %vm316, %v2925, 0
      %v3021 = vsel %vm316, %v2926, 0
      %v3024 = vsel %vm316, %v2927, 0
      %3026 = vmatprep.subr.mxu0 0.0
      %3027 = vmatpush1.msra.mxu0 %v2929
      %3028 = vmatprep.subr.mxu0 0.0
      %3029 = vmatpush1.msra.mxu0 0.0
      %3030 = vmatprep.subr.mxu0 0.0
      %3031 = vmatpush1.msra.mxu0 0.0
      %3032 = vmatprep.subr.mxu0 0.0
      %3033 = vmatpush1.msra.mxu0 0.0
      %3034 = vmatprep.subr.mxu0 0.0
      %3035 = vmatpush1.msra.mxu0 0.0
      %3036 = vmatprep.subr.mxu0 0.0
      %3037 = vmatpush1.msra.mxu0 0.0
      %3038 = vmatprep.subr.mxu0 0.0
      %3039 = vmatpush1.msra.mxu0 0.0
      %3040 = vmatprep.subr.mxu0 0.0
      %3041 = vmatpush1.msra.mxu0 0.0
      %3042 = vmatprep.subr.mxu0 0.0
      %3043 = vmatpush1.msra.mxu0 0.0
      %3044 = vmatprep.subr.mxu0 0.0
      %3045 = vmatpush1.msra.mxu0 0.0
      %3046 = vmatprep.subr.mxu0 0.0
      %3047 = vmatpush1.msra.mxu0 0.0
      %3048 = vmatprep.subr.mxu0 0.0
      %3049 = vmatpush1.msra.mxu0 0.0
      %3050 = vmatprep.subr.mxu0 0.0
      %3051 = vmatpush1.msra.mxu0 0.0
      %3052 = vmatprep.subr.mxu0 0.0
      %3053 = vmatpush1.msra.mxu0 0.0
      %3054 = vmatprep.subr.mxu0 0.0
      %3055 = vmatpush1.msra.mxu0 0.0
      %3056 = vmatprep.subr.mxu0 0.0
      %3057 = vmatpush1.msra.mxu0 0.0
      %3058 = vmatprep.subr.mxu0 0.0
      %3059 = vmatpush1.msra.mxu0 0.0
      %3060 = vmatprep.subr.mxu0 0.0
      %3061 = vmatpush1.msra.mxu0 0.0
      %3062 = vmatprep.subr.mxu0 0.0
      %3063 = vmatpush1.msra.mxu0 0.0
      %3064 = vmatprep.subr.mxu0 0.0
      %3065 = vmatpush1.msra.mxu0 0.0
      %3066 = vmatprep.subr.mxu0 0.0
      %3067 = vmatpush1.msra.mxu0 0.0
      %3068 = vmatprep.subr.mxu0 0.0
      %3069 = vmatpush1.msra.mxu0 0.0
      %3070 = vmatprep.subr.mxu0 0.0
      %3071 = vmatpush1.msra.mxu0 0.0
      %3072 = vmatprep.subr.mxu0 0.0
      %3073 = vmatpush1.msra.mxu0 0.0
      %3074 = vmatprep.subr.mxu0 0.0
      %3075 = vmatpush1.msra.mxu0 0.0
      %3076 = vmatprep.subr.mxu0 0.0
      %3077 = vmatpush1.msra.mxu0 0.0
      %3078 = vmatprep.subr.mxu0 0.0
      %3079 = vmatpush1.msra.mxu0 0.0
      %3080 = vmatprep.subr.mxu0 0.0
      %3081 = vmatpush1.msra.mxu0 0.0
      %3082 = vmatprep.subr.mxu0 0.0
      %3083 = vmatpush1.msra.mxu0 0.0
      %3084 = vmatprep.subr.mxu0 0.0
      %3085 = vmatpush1.msra.mxu0 0.0
      %3086 = vmatprep.subr.mxu0 0.0
      %3087 = vmatpush1.msra.mxu0 0.0
      %3088 = vmatprep.subr.mxu0 0.0
      %3089 = vmatpush1.msra.mxu0 0.0
      %3090 = vmatprep.mubr.f32.mxu0 0.0
      %3091 = vmatmul.mubr.f32.gmra.mrb[0].mxu0 %v2931
      %v3092 = vpop.f32.mrb[0].mxu0
      %v3093 = vadd.f32 0.0, %v3092
      %v3094 = vpop.f32.mrb[0].mxu0
      %3095 = vmatprep.mubr.f32.mxu0 0.0
      %3096 = vmatmul.mubr.f32.gmra.mrb[0].mxu0 %v2934
      %v3097 = vpop.f32.mrb[0].mxu0
      %v3098 = vadd.f32 0.0, %v3097
      %v3099 = vpop.f32.mrb[0].mxu0
      %3100 = vmatprep.mubr.f32.mxu0 0.0
      %3101 = vmatmul.mubr.f32.gmra.mrb[0].mxu0 %v2937
      %v3102 = vpop.f32.mrb[0].mxu0
      %v3103 = vadd.f32 0.0, %v3102
      %v3104 = vpop.f32.mrb[0].mxu0
      %3105 = vmatprep.mubr.f32.mxu0 0.0
      %3106 = vmatmul.mubr.f32.gmra.mrb[0].mxu0 %v2940
      %v3107 = vpop.f32.mrb[0].mxu0
      %v3108 = vadd.f32 0.0, %v3107
      %v3109 = vpop.f32.mrb[0].mxu0
      %3110 = vmatprep.mubr.f32.mxu0 0.0
      %3111 = vmatmul.mubr.f32.gmra.mrb[0].mxu0 %v2943
      %v3112 = vpop.f32.mrb[0].mxu0
      %v3113 = vadd.f32 0.0, %v3112
      %v3114 = vpop.f32.mrb[0].mxu0
      %3115 = vmatprep.mubr.f32.mxu0 0.0
      %3116 = vmatmul.mubr.f32.gmra.mrb[0].mxu0 %v2946
      %v3117 = vpop.f32.mrb[0].mxu0
      %v3118 = vadd.f32 0.0, %v3117
      %v3119 = vpop.f32.mrb[0].mxu0
      %3120 = vmatprep.mubr.f32.mxu0 0.0
      %3121 = vmatmul.mubr.f32.gmra.mrb[0].mxu0 %v2949
      %v3122 = vpop.f32.mrb[0].mxu0
      %v3123 = vadd.f32 0.0, %v3122
      %v3124 = vpop.f32.mrb[0].mxu0
      %3125 = vmatprep.mubr.f32.mxu0 0.0
      %3126 = vmatmul.mubr.f32.gmra.mrb[0].mxu0 %v2952
      %v3127 = vpop.f32.mrb[0].mxu0
      %v3128 = vadd.f32 0.0, %v3127
      %v3129 = vpop.f32.mrb[0].mxu0
      %3130 = vmatprep.mubr.f32.mxu0 0.0
      %3131 = vmatmul.mubr.f32.gmra.mrb[0].mxu0 %v2955
      %v3132 = vpop.f32.mrb[0].mxu0
      %v3133 = vadd.f32 0.0, %v3132
      %v3134 = vpop.f32.mrb[0].mxu0
      %3135 = vmatprep.mubr.f32.mxu0 0.0
      %3136 = vmatmul.mubr.f32.gmra.mrb[0].mxu0 %v2958
      %v3137 = vpop.f32.mrb[0].mxu0
      %v3138 = vadd.f32 0.0, %v3137
      %v3139 = vpop.f32.mrb[0].mxu0
      %3140 = vmatprep.mubr.f32.mxu0 0.0
      %3141 = vmatmul.mubr.f32.gmra.mrb[0].mxu0 %v2961
      %v3142 = vpop.f32.mrb[0].mxu0
      %v3143 = vadd.f32 0.0, %v3142
      %v3144 = vpop.f32.mrb[0].mxu0
      %3145 = vmatprep.mubr.f32.mxu0 0.0
      %3146 = vmatmul.mubr.f32.gmra.mrb[0].mxu0 %v2964
      %v3147 = vpop.f32.mrb[0].mxu0
      %v3148 = vadd.f32 0.0, %v3147
      %v3149 = vpop.f32.mrb[0].mxu0
      %3150 = vmatprep.mubr.f32.mxu0 0.0
      %3151 = vmatmul.mubr.f32.gmra.mrb[0].mxu0 %v2967
      %v3152 = vpop.f32.mrb[0].mxu0
      %v3153 = vadd.f32 0.0, %v3152
      %v3154 = vpop.f32.mrb[0].mxu0
      %3155 = vmatprep.mubr.f32.mxu0 0.0
      %3156 = vmatmul.mubr.f32.gmra.mrb[0].mxu0 %v2970
      %v3157 = vpop.f32.mrb[0].mxu0
      %v3158 = vadd.f32 0.0, %v3157
      %v3159 = vpop.f32.mrb[0].mxu0
      %3160 = vmatprep.mubr.f32.mxu0 0.0
      %3161 = vmatmul.mubr.f32.gmra.mrb[0].mxu0 %v2973
      %v3162 = vpop.f32.mrb[0].mxu0
      %v3163 = vadd.f32 0.0, %v3162
      %v3164 = vpop.f32.mrb[0].mxu0
      %3165 = vmatprep.mubr.f32.mxu0 0.0
      %3166 = vmatmul.mubr.f32.gmra.mrb[0].mxu0 %v2976
      %v3167 = vpop.f32.mrb[0].mxu0
      %v3168 = vadd.f32 0.0, %v3167
      %v3169 = vpop.f32.mrb[0].mxu0
      %3170 = vmatprep.mubr.f32.mxu0 0.0
      %3171 = vmatmul.mubr.f32.gmra.mrb[0].mxu0 %v2979
      %v3172 = vpop.f32.mrb[0].mxu0
      %v3173 = vadd.f32 0.0, %v3172
      %v3174 = vpop.f32.mrb[0].mxu0
      %3175 = vmatprep.mubr.f32.mxu0 0.0
      %3176 = vmatmul.mubr.f32.gmra.mrb[0].mxu0 %v2982
      %v3177 = vpop.f32.mrb[0].mxu0
      %v3178 = vadd.f32 0.0, %v3177
      %v3179 = vpop.f32.mrb[0].mxu0
      %3180 = vmatprep.mubr.f32.mxu0 0.0
      %3181 = vmatmul.mubr.f32.gmra.mrb[0].mxu0 %v2985
      %v3182 = vpop.f32.mrb[0].mxu0
      %v3183 = vadd.f32 0.0, %v3182
      %v3184 = vpop.f32.mrb[0].mxu0
      %3185 = vmatprep.mubr.f32.mxu0 0.0
      %3186 = vmatmul.mubr.f32.gmra.mrb[0].mxu0 %v2988
      %v3187 = vpop.f32.mrb[0].mxu0
      %v3188 = vadd.f32 0.0, %v3187
      %v3189 = vpop.f32.mrb[0].mxu0
      %3190 = vmatprep.mubr.f32.mxu0 0.0
      %3191 = vmatmul.mubr.f32.gmra.mrb[0].mxu0 %v2991
      %v3192 = vpop.f32.mrb[0].mxu0
      %v3193 = vadd.f32 0.0, %v3192
      %v3194 = vpop.f32.mrb[0].mxu0
      %3195 = vmatprep.mubr.f32.mxu0 0.0
      %3196 = vmatmul.mubr.f32.gmra.mrb[0].mxu0 %v2994
      %v3197 = vpop.f32.mrb[0].mxu0
      %v3198 = vadd.f32 0.0, %v3197
      %v3199 = vpop.f32.mrb[0].mxu0
      %3200 = vmatprep.mubr.f32.mxu0 0.0
      %3201 = vmatmul.mubr.f32.gmra.mrb[0].mxu0 %v2997
      %v3202 = vpop.f32.mrb[0].mxu0
      %v3203 = vadd.f32 0.0, %v3202
      %v3204 = vpop.f32.mrb[0].mxu0
      %3205 = vmatprep.mubr.f32.mxu0 0.0
      %3206 = vmatmul.mubr.f32.gmra.mrb[0].mxu0 %v3000
      %v3207 = vpop.f32.mrb[0].mxu0
      %v3208 = vadd.f32 0.0, %v3207
      %v3209 = vpop.f32.mrb[0].mxu0
      %3210 = vmatprep.mubr.f32.mxu0 0.0
      %3211 = vmatmul.mubr.f32.gmra.mrb[0].mxu0 %v3003
      %v3212 = vpop.f32.mrb[0].mxu0
      %v3213 = vadd.f32 0.0, %v3212
      %v3214 = vpop.f32.mrb[0].mxu0
      %3215 = vmatprep.mubr.f32.mxu0 0.0
      %3216 = vmatmul.mubr.f32.gmra.mrb[0].mxu0 %v3006
      %v3217 = vpop.f32.mrb[0].mxu0
      %v3218 = vadd.f32 0.0, %v3217
      %v3219 = vpop.f32.mrb[0].mxu0
      %3220 = vmatprep.mubr.f32.mxu0 0.0
      %3221 = vmatmul.mubr.f32.gmra.mrb[0].mxu0 %v3009
      %v3222 = vpop.f32.mrb[0].mxu0
      %v3223 = vadd.f32 0.0, %v3222
      %v3224 = vpop.f32.mrb[0].mxu0
      %3225 = vmatprep.mubr.f32.mxu0 0.0
      %3226 = vmatmul.mubr.f32.gmra.mrb[0].mxu0 %v3012
      %v3227 = vpop.f32.mrb[0].mxu0
      %v3228 = vadd.f32 0.0, %v3227
      %v3229 = vpop.f32.mrb[0].mxu0
      %3230 = vmatprep.mubr.f32.mxu0 0.0
      %3231 = vmatmul.mubr.f32.gmra.mrb[0].mxu0 %v3015
      %v3232 = vpop.f32.mrb[0].mxu0
      %v3233 = vadd.f32 0.0, %v3232
      %v3234 = vpop.f32.mrb[0].mxu0
      %3235 = vmatprep.mubr.f32.mxu0 0.0
      %3236 = vmatmul.mubr.f32.gmra.mrb[0].mxu0 %v3018
      %v3237 = vpop.f32.mrb[0].mxu0
      %v3238 = vadd.f32 0.0, %v3237
      %v3239 = vpop.f32.mrb[0].mxu0
      %3240 = vmatprep.mubr.f32.mxu0 0.0
      %3241 = vmatmul.mubr.f32.gmra.mrb[0].mxu0 %v3021
      %v3242 = vpop.f32.mrb[0].mxu0
      %v3243 = vadd.f32 0.0, %v3242
      %v3244 = vpop.f32.mrb[0].mxu0
      %3245 = vmatprep.mubr.f32.mxu0 0.0
      %3246 = vmatmul.mubr.f32.gmra.mrb[0].mxu0 %v3024
      %v3247 = vpop.f32.mrb[0].mxu0
      %v3248 = vadd.f32 0.0, %v3247
      %v3249 = vpop.f32.mrb[0].mxu0
      %3250 = vdwg.mxu0
      %v3251 = vadd.f32 %v2864, %v3093
      %v3252 = vadd.f32 %v2865, %v3098
      %v3253 = vadd.f32 %v2866, %v3103
      %v3254 = vadd.f32 %v2867, %v3108
      %v3255 = vadd.f32 %v2868, %v3113
      %v3256 = vadd.f32 %v2869, %v3118
      %v3257 = vadd.f32 %v2870, %v3123
      %v3258 = vadd.f32 %v2871, %v3128
      %v3259 = vadd.f32 %v2872, %v3133
      %v3260 = vadd.f32 %v2873, %v3138
      %v3261 = vadd.f32 %v2874, %v3143
      %v3262 = vadd.f32 %v2875, %v3148
      %v3263 = vadd.f32 %v2876, %v3153
      %v3264 = vadd.f32 %v2877, %v3158
      %v3265 = vadd.f32 %v2878, %v3163
      %v3266 = vadd.f32 %v2879, %v3168
      %v3267 = vadd.f32 %v2880, %v3173
      %v3268 = vadd.f32 %v2881, %v3178
      %v3269 = vadd.f32 %v2882, %v3183
      %v3270 = vadd.f32 %v2883, %v3188
      %v3271 = vadd.f32 %v2884, %v3193
      %v3272 = vadd.f32 %v2885, %v3198
      %v3273 = vadd.f32 %v2886, %v3203
      %v3274 = vadd.f32 %v2887, %v3208
      %v3275 = vadd.f32 %v2888, %v3213
      %v3276 = vadd.f32 %v2889, %v3218
      %v3277 = vadd.f32 %v2890, %v3223
      %v3278 = vadd.f32 %v2891, %v3228
      %v3279 = vadd.f32 %v2892, %v3233
      %v3280 = vadd.f32 %v2893, %v3238
      %v3281 = vadd.f32 %v2894, %v3243
      %v3282 = vadd.f32 %v2895, %v3248
      %v3283 = vld [vmem:[%s2508 + $0x2] sm:$0xff]
      %v3284 = vld [vmem:[%s2508 + $0xa] sm:$0xff]
      %v3285 = vld [vmem:[%s2508 + $0x1a] sm:$0xff]
      %v3286 = vld [vmem:[%s2508 + $0x22] sm:$0xff]
      %v3287 = vld [vmem:[%s2508 + $0x32] sm:$0xff]
      %v3288 = vld [vmem:[%s2508 + $0x3a] sm:$0xff]
      %v3289 = vld [vmem:[%s2508 + $0x4a] sm:$0xff]
      %v3290 = vld [vmem:[%s2508 + $0x52] sm:$0xff]
      %v3291 = vld [vmem:[%s2508 + $0x62] sm:$0xff]
      %v3292 = vld [vmem:[%s2508 + $0x6a] sm:$0xff]
      %v3293 = vld [vmem:[%s2508 + $0x7a] sm:$0xff]
      %v3294 = vld [vmem:[%s2508 + $0x82] sm:$0xff]
      %v3295 = vld [vmem:[%s2508 + $0x92] sm:$0xff]
      %v3296 = vld [vmem:[%s2508 + $0x9a] sm:$0xff]
      %v3297 = vld [vmem:[%s2508 + $0xaa] sm:$0xff]
      %v3298 = vld [vmem:[%s2508 + $0xb2] sm:$0xff]
      %v3299 = vld [vmem:[%s2508 + $0xc2] sm:$0xff]
      %v3300 = vld [vmem:[%s2508 + $0xca] sm:$0xff]
      %v3301 = vld [vmem:[%s2508 + $0xda] sm:$0xff]
      %v3302 = vld [vmem:[%s2508 + $0xe2] sm:$0xff]
      %v3303 = vld [vmem:[%s2508 + $0xf2] sm:$0xff]
      %v3304 = vld [vmem:[%s2508 + $0xfa] sm:$0xff]
      %v3305 = vld [vmem:[%s2508 + $0x10a] sm:$0xff]
      %v3306 = vld [vmem:[%s2508 + $0x112] sm:$0xff]
      %v3307 = vld [vmem:[%s2508 + $0x122] sm:$0xff]
      %v3308 = vld [vmem:[%s2508 + $0x12a] sm:$0xff]
      %v3309 = vld [vmem:[%s2508 + $0x13a] sm:$0xff]
      %v3310 = vld [vmem:[%s2508 + $0x142] sm:$0xff]
      %v3311 = vld [vmem:[%s2508 + $0x152] sm:$0xff]
      %v3312 = vld [vmem:[%s2508 + $0x15a] sm:$0xff]
      %v3313 = vld [vmem:[%s2508 + $0x16a] sm:$0xff]
      %v3314 = vld [vmem:[%s2508 + $0x172] sm:$0xff]
      %s3315 = scalar_lea.vmem %s1, 64
      %v3316 = vld [vmem:[%s3315] sm:$0xff]
      %v3318 = vsel %vm316, %v3283, 0
      %v3321 = vsel %vm316, %v3284, 0
      %v3324 = vsel %vm316, %v3285, 0
      %v3327 = vsel %vm316, %v3286, 0
      %v3330 = vsel %vm316, %v3287, 0
      %v3333 = vsel %vm316, %v3288, 0
      %v3336 = vsel %vm316, %v3289, 0
      %v3339 = vsel %vm316, %v3290, 0
      %v3342 = vsel %vm316, %v3291, 0
      %v3345 = vsel %vm316, %v3292, 0
      %v3348 = vsel %vm316, %v3293, 0
      %v3351 = vsel %vm316, %v3294, 0
      %v3354 = vsel %vm316, %v3295, 0
      %v3357 = vsel %vm316, %v3296, 0
      %v3360 = vsel %vm316, %v3297, 0
      %v3363 = vsel %vm316, %v3298, 0
      %v3366 = vsel %vm316, %v3299, 0
      %v3369 = vsel %vm316, %v3300, 0
      %v3372 = vsel %vm316, %v3301, 0
      %v3375 = vsel %vm316, %v3302, 0
      %v3378 = vsel %vm316, %v3303, 0
      %v3381 = vsel %vm316, %v3304, 0
      %v3384 = vsel %vm316, %v3305, 0
      %v3387 = vsel %vm316, %v3306, 0
      %v3390 = vsel %vm316, %v3307, 0
      %v3393 = vsel %vm316, %v3308, 0
      %v3396 = vsel %vm316, %v3309, 0
      %v3399 = vsel %vm316, %v3310, 0
      %v3402 = vsel %vm316, %v3311, 0
      %v3405 = vsel %vm316, %v3312, 0
      %v3408 = vsel %vm316, %v3313, 0
      %v3411 = vsel %vm316, %v3314, 0
      %3413 = vmatprep.subr.mxu0 0.0
      %3414 = vmatpush1.msra.mxu0 %v3316
      %3415 = vmatprep.subr.mxu0 0.0
      %3416 = vmatpush1.msra.mxu0 0.0
      %3417 = vmatprep.subr.mxu0 0.0
      %3418 = vmatpush1.msra.mxu0 0.0
      %3419 = vmatprep.subr.mxu0 0.0
      %3420 = vmatpush1.msra.mxu0 0.0
      %3421 = vmatprep.subr.mxu0 0.0
      %3422 = vmatpush1.msra.mxu0 0.0
      %3423 = vmatprep.subr.mxu0 0.0
      %3424 = vmatpush1.msra.mxu0 0.0
      %3425 = vmatprep.subr.mxu0 0.0
      %3426 = vmatpush1.msra.mxu0 0.0
      %3427 = vmatprep.subr.mxu0 0.0
      %3428 = vmatpush1.msra.mxu0 0.0
      %3429 = vmatprep.subr.mxu0 0.0
      %3430 = vmatpush1.msra.mxu0 0.0
      %3431 = vmatprep.subr.mxu0 0.0
      %3432 = vmatpush1.msra.mxu0 0.0
      %3433 = vmatprep.subr.mxu0 0.0
      %3434 = vmatpush1.msra.mxu0 0.0
      %3435 = vmatprep.subr.mxu0 0.0
      %3436 = vmatpush1.msra.mxu0 0.0
      %3437 = vmatprep.subr.mxu0 0.0
      %3438 = vmatpush1.msra.mxu0 0.0
      %3439 = vmatprep.subr.mxu0 0.0
      %3440 = vmatpush1.msra.mxu0 0.0
      %3441 = vmatprep.subr.mxu0 0.0
      %3442 = vmatpush1.msra.mxu0 0.0
      %3443 = vmatprep.subr.mxu0 0.0
      %3444 = vmatpush1.msra.mxu0 0.0
      %3445 = vmatprep.subr.mxu0 0.0
      %3446 = vmatpush1.msra.mxu0 0.0
      %3447 = vmatprep.subr.mxu0 0.0
      %3448 = vmatpush1.msra.mxu0 0.0
      %3449 = vmatprep.subr.mxu0 0.0
      %3450 = vmatpush1.msra.mxu0 0.0
      %3451 = vmatprep.subr.mxu0 0.0
      %3452 = vmatpush1.msra.mxu0 0.0
      %3453 = vmatprep.subr.mxu0 0.0
      %3454 = vmatpush1.msra.mxu0 0.0
      %3455 = vmatprep.subr.mxu0 0.0
      %3456 = vmatpush1.msra.mxu0 0.0
      %3457 = vmatprep.subr.mxu0 0.0
      %3458 = vmatpush1.msra.mxu0 0.0
      %3459 = vmatprep.subr.mxu0 0.0
      %3460 = vmatpush1.msra.mxu0 0.0
      %3461 = vmatprep.subr.mxu0 0.0
      %3462 = vmatpush1.msra.mxu0 0.0
      %3463 = vmatprep.subr.mxu0 0.0
      %3464 = vmatpush1.msra.mxu0 0.0
      %3465 = vmatprep.subr.mxu0 0.0
      %3466 = vmatpush1.msra.mxu0 0.0
      %3467 = vmatprep.subr.mxu0 0.0
      %3468 = vmatpush1.msra.mxu0 0.0
      %3469 = vmatprep.subr.mxu0 0.0
      %3470 = vmatpush1.msra.mxu0 0.0
      %3471 = vmatprep.subr.mxu0 0.0
      %3472 = vmatpush1.msra.mxu0 0.0
      %3473 = vmatprep.subr.mxu0 0.0
      %3474 = vmatpush1.msra.mxu0 0.0
      %3475 = vmatprep.subr.mxu0 0.0
      %3476 = vmatpush1.msra.mxu0 0.0
      %3477 = vmatprep.mubr.f32.mxu0 0.0
      %3478 = vmatmul.mubr.f32.gmra.mrb[0].mxu0 %v3318
      %v3479 = vpop.f32.mrb[0].mxu0
      %v3480 = vadd.f32 0.0, %v3479
      %v3481 = vpop.f32.mrb[0].mxu0
      %3482 = vmatprep.mubr.f32.mxu0 0.0
      %3483 = vmatmul.mubr.f32.gmra.mrb[0].mxu0 %v3321
      %v3484 = vpop.f32.mrb[0].mxu0
      %v3485 = vadd.f32 0.0, %v3484
      %v3486 = vpop.f32.mrb[0].mxu0
      %3487 = vmatprep.mubr.f32.mxu0 0.0
      %3488 = vmatmul.mubr.f32.gmra.mrb[0].mxu0 %v3324
      %v3489 = vpop.f32.mrb[0].mxu0
      %v3490 = vadd.f32 0.0, %v3489
      %v3491 = vpop.f32.mrb[0].mxu0
      %3492 = vmatprep.mubr.f32.mxu0 0.0
      %3493 = vmatmul.mubr.f32.gmra.mrb[0].mxu0 %v3327
      %v3494 = vpop.f32.mrb[0].mxu0
      %v3495 = vadd.f32 0.0, %v3494
      %v3496 = vpop.f32.mrb[0].mxu0
      %3497 = vmatprep.mubr.f32.mxu0 0.0
      %3498 = vmatmul.mubr.f32.gmra.mrb[0].mxu0 %v3330
      %v3499 = vpop.f32.mrb[0].mxu0
      %v3500 = vadd.f32 0.0, %v3499
      %v3501 = vpop.f32.mrb[0].mxu0
      %3502 = vmatprep.mubr.f32.mxu0 0.0
      %3503 = vmatmul.mubr.f32.gmra.mrb[0].mxu0 %v3333
      %v3504 = vpop.f32.mrb[0].mxu0
      %v3505 = vadd.f32 0.0, %v3504
      %v3506 = vpop.f32.mrb[0].mxu0
      %3507 = vmatprep.mubr.f32.mxu0 0.0
      %3508 = vmatmul.mubr.f32.gmra.mrb[0].mxu0 %v3336
      %v3509 = vpop.f32.mrb[0].mxu0
      %v3510 = vadd.f32 0.0, %v3509
      %v3511 = vpop.f32.mrb[0].mxu0
      %3512 = vmatprep.mubr.f32.mxu0 0.0
      %3513 = vmatmul.mubr.f32.gmra.mrb[0].mxu0 %v3339
      %v3514 = vpop.f32.mrb[0].mxu0
      %v3515 = vadd.f32 0.0, %v3514
      %v3516 = vpop.f32.mrb[0].mxu0
      %3517 = vmatprep.mubr.f32.mxu0 0.0
      %3518 = vmatmul.mubr.f32.gmra.mrb[0].mxu0 %v3342
      %v3519 = vpop.f32.mrb[0].mxu0
      %v3520 = vadd.f32 0.0, %v3519
      %v3521 = vpop.f32.mrb[0].mxu0
      %3522 = vmatprep.mubr.f32.mxu0 0.0
      %3523 = vmatmul.mubr.f32.gmra.mrb[0].mxu0 %v3345
      %v3524 = vpop.f32.mrb[0].mxu0
      %v3525 = vadd.f32 0.0, %v3524
      %v3526 = vpop.f32.mrb[0].mxu0
      %3527 = vmatprep.mubr.f32.mxu0 0.0
      %3528 = vmatmul.mubr.f32.gmra.mrb[0].mxu0 %v3348
      %v3529 = vpop.f32.mrb[0].mxu0
      %v3530 = vadd.f32 0.0, %v3529
      %v3531 = vpop.f32.mrb[0].mxu0
      %3532 = vmatprep.mubr.f32.mxu0 0.0
      %3533 = vmatmul.mubr.f32.gmra.mrb[0].mxu0 %v3351
      %v3534 = vpop.f32.mrb[0].mxu0
      %v3535 = vadd.f32 0.0, %v3534
      %v3536 = vpop.f32.mrb[0].mxu0
      %3537 = vmatprep.mubr.f32.mxu0 0.0
      %3538 = vmatmul.mubr.f32.gmra.mrb[0].mxu0 %v3354
      %v3539 = vpop.f32.mrb[0].mxu0
      %v3540 = vadd.f32 0.0, %v3539
      %v3541 = vpop.f32.mrb[0].mxu0
      %3542 = vmatprep.mubr.f32.mxu0 0.0
      %3543 = vmatmul.mubr.f32.gmra.mrb[0].mxu0 %v3357
      %v3544 = vpop.f32.mrb[0].mxu0
      %v3545 = vadd.f32 0.0, %v3544
      %v3546 = vpop.f32.mrb[0].mxu0
      %3547 = vmatprep.mubr.f32.mxu0 0.0
      %3548 = vmatmul.mubr.f32.gmra.mrb[0].mxu0 %v3360
      %v3549 = vpop.f32.mrb[0].mxu0
      %v3550 = vadd.f32 0.0, %v3549
      %v3551 = vpop.f32.mrb[0].mxu0
      %3552 = vmatprep.mubr.f32.mxu0 0.0
      %3553 = vmatmul.mubr.f32.gmra.mrb[0].mxu0 %v3363
      %v3554 = vpop.f32.mrb[0].mxu0
      %v3555 = vadd.f32 0.0, %v3554
      %v3556 = vpop.f32.mrb[0].mxu0
      %3557 = vmatprep.mubr.f32.mxu0 0.0
      %3558 = vmatmul.mubr.f32.gmra.mrb[0].mxu0 %v3366
      %v3559 = vpop.f32.mrb[0].mxu0
      %v3560 = vadd.f32 0.0, %v3559
      %v3561 = vpop.f32.mrb[0].mxu0
      %3562 = vmatprep.mubr.f32.mxu0 0.0
      %3563 = vmatmul.mubr.f32.gmra.mrb[0].mxu0 %v3369
      %v3564 = vpop.f32.mrb[0].mxu0
      %v3565 = vadd.f32 0.0, %v3564
      %v3566 = vpop.f32.mrb[0].mxu0
      %3567 = vmatprep.mubr.f32.mxu0 0.0
      %3568 = vmatmul.mubr.f32.gmra.mrb[0].mxu0 %v3372
      %v3569 = vpop.f32.mrb[0].mxu0
      %v3570 = vadd.f32 0.0, %v3569
      %v3571 = vpop.f32.mrb[0].mxu0
      %3572 = vmatprep.mubr.f32.mxu0 0.0
      %3573 = vmatmul.mubr.f32.gmra.mrb[0].mxu0 %v3375
      %v3574 = vpop.f32.mrb[0].mxu0
      %v3575 = vadd.f32 0.0, %v3574
      %v3576 = vpop.f32.mrb[0].mxu0
      %3577 = vmatprep.mubr.f32.mxu0 0.0
      %3578 = vmatmul.mubr.f32.gmra.mrb[0].mxu0 %v3378
      %v3579 = vpop.f32.mrb[0].mxu0
      %v3580 = vadd.f32 0.0, %v3579
      %v3581 = vpop.f32.mrb[0].mxu0
      %3582 = vmatprep.mubr.f32.mxu0 0.0
      %3583 = vmatmul.mubr.f32.gmra.mrb[0].mxu0 %v3381
      %v3584 = vpop.f32.mrb[0].mxu0
      %v3585 = vadd.f32 0.0, %v3584
      %v3586 = vpop.f32.mrb[0].mxu0
      %3587 = vmatprep.mubr.f32.mxu0 0.0
      %3588 = vmatmul.mubr.f32.gmra.mrb[0].mxu0 %v3384
      %v3589 = vpop.f32.mrb[0].mxu0
      %v3590 = vadd.f32 0.0, %v3589
      %v3591 = vpop.f32.mrb[0].mxu0
      %3592 = vmatprep.mubr.f32.mxu0 0.0
      %3593 = vmatmul.mubr.f32.gmra.mrb[0].mxu0 %v3387
      %v3594 = vpop.f32.mrb[0].mxu0
      %v3595 = vadd.f32 0.0, %v3594
      %v3596 = vpop.f32.mrb[0].mxu0
      %3597 = vmatprep.mubr.f32.mxu0 0.0
      %3598 = vmatmul.mubr.f32.gmra.mrb[0].mxu0 %v3390
      %v3599 = vpop.f32.mrb[0].mxu0
      %v3600 = vadd.f32 0.0, %v3599
      %v3601 = vpop.f32.mrb[0].mxu0
      %3602 = vmatprep.mubr.f32.mxu0 0.0
      %3603 = vmatmul.mubr.f32.gmra.mrb[0].mxu0 %v3393
      %v3604 = vpop.f32.mrb[0].mxu0
      %v3605 = vadd.f32 0.0, %v3604
      %v3606 = vpop.f32.mrb[0].mxu0
      %3607 = vmatprep.mubr.f32.mxu0 0.0
      %3608 = vmatmul.mubr.f32.gmra.mrb[0].mxu0 %v3396
      %v3609 = vpop.f32.mrb[0].mxu0
      %v3610 = vadd.f32 0.0, %v3609
      %v3611 = vpop.f32.mrb[0].mxu0
      %3612 = vmatprep.mubr.f32.mxu0 0.0
      %3613 = vmatmul.mubr.f32.gmra.mrb[0].mxu0 %v3399
      %v3614 = vpop.f32.mrb[0].mxu0
      %v3615 = vadd.f32 0.0, %v3614
      %v3616 = vpop.f32.mrb[0].mxu0
      %3617 = vmatprep.mubr.f32.mxu0 0.0
      %3618 = vmatmul.mubr.f32.gmra.mrb[0].mxu0 %v3402
      %v3619 = vpop.f32.mrb[0].mxu0
      %v3620 = vadd.f32 0.0, %v3619
      %v3621 = vpop.f32.mrb[0].mxu0
      %3622 = vmatprep.mubr.f32.mxu0 0.0
      %3623 = vmatmul.mubr.f32.gmra.mrb[0].mxu0 %v3405
      %v3624 = vpop.f32.mrb[0].mxu0
      %v3625 = vadd.f32 0.0, %v3624
      %v3626 = vpop.f32.mrb[0].mxu0
      %3627 = vmatprep.mubr.f32.mxu0 0.0
      %3628 = vmatmul.mubr.f32.gmra.mrb[0].mxu0 %v3408
      %v3629 = vpop.f32.mrb[0].mxu0
      %v3630 = vadd.f32 0.0, %v3629
      %v3631 = vpop.f32.mrb[0].mxu0
      %3632 = vmatprep.mubr.f32.mxu0 0.0
      %3633 = vmatmul.mubr.f32.gmra.mrb[0].mxu0 %v3411
      %v3634 = vpop.f32.mrb[0].mxu0
      %v3635 = vadd.f32 0.0, %v3634
      %v3636 = vpop.f32.mrb[0].mxu0
      %3637 = vdwg.mxu0
      %v3638 = vadd.f32 %v3251, %v3480
      %v3639 = vadd.f32 %v3252, %v3485
      %v3640 = vadd.f32 %v3253, %v3490
      %v3641 = vadd.f32 %v3254, %v3495
      %v3642 = vadd.f32 %v3255, %v3500
      %v3643 = vadd.f32 %v3256, %v3505
      %v3644 = vadd.f32 %v3257, %v3510
      %v3645 = vadd.f32 %v3258, %v3515
      %v3646 = vadd.f32 %v3259, %v3520
      %v3647 = vadd.f32 %v3260, %v3525
      %v3648 = vadd.f32 %v3261, %v3530
      %v3649 = vadd.f32 %v3262, %v3535
      %v3650 = vadd.f32 %v3263, %v3540
      %v3651 = vadd.f32 %v3264, %v3545
      %v3652 = vadd.f32 %v3265, %v3550
      %v3653 = vadd.f32 %v3266, %v3555
      %v3654 = vadd.f32 %v3267, %v3560
      %v3655 = vadd.f32 %v3268, %v3565
      %v3656 = vadd.f32 %v3269, %v3570
      %v3657 = vadd.f32 %v3270, %v3575
      %v3658 = vadd.f32 %v3271, %v3580
      %v3659 = vadd.f32 %v3272, %v3585
      %v3660 = vadd.f32 %v3273, %v3590
      %v3661 = vadd.f32 %v3274, %v3595
      %v3662 = vadd.f32 %v3275, %v3600
      %v3663 = vadd.f32 %v3276, %v3605
      %v3664 = vadd.f32 %v3277, %v3610
      %v3665 = vadd.f32 %v3278, %v3615
      %v3666 = vadd.f32 %v3279, %v3620
      %v3667 = vadd.f32 %v3280, %v3625
      %v3668 = vadd.f32 %v3281, %v3630
      %v3669 = vadd.f32 %v3282, %v3635
      %v3670 = vadd.f32 %v3638, %v3639
      %v3671 = vadd.f32 %v3670, %v3640
      %v3672 = vadd.f32 %v3671, %v3641
      %v3673 = vadd.f32 %v3672, %v3642
      %v3674 = vadd.f32 %v3673, %v3643
      %v3675 = vadd.f32 %v3674, %v3644
      %v3676 = vadd.f32 %v3675, %v3645
      %v3677 = vadd.f32 %v3676, %v3646
      %v3678 = vadd.f32 %v3677, %v3647
      %v3679 = vadd.f32 %v3678, %v3648
      %v3680 = vadd.f32 %v3679, %v3649
      %v3681 = vadd.f32 %v3680, %v3650
      %v3682 = vadd.f32 %v3681, %v3651
      %v3683 = vadd.f32 %v3682, %v3652
      %v3684 = vadd.f32 %v3683, %v3653
      %v3685 = vadd.f32 %v3684, %v3654
      %v3686 = vadd.f32 %v3685, %v3655
      %v3687 = vadd.f32 %v3686, %v3656
      %v3688 = vadd.f32 %v3687, %v3657
      %v3689 = vadd.f32 %v3688, %v3658
      %v3690 = vadd.f32 %v3689, %v3659
      %v3691 = vadd.f32 %v3690, %v3660
      %v3692 = vadd.f32 %v3691, %v3661
      %v3693 = vadd.f32 %v3692, %v3662
      %v3694 = vadd.f32 %v3693, %v3663
      %v3695 = vadd.f32 %v3694, %v3664
      %v3696 = vadd.f32 %v3695, %v3665
      %v3697 = vadd.f32 %v3696, %v3666
      %v3698 = vadd.f32 %v3697, %v3667
      %v3699 = vadd.f32 %v3698, %v3668
      %v3700 = vadd.f32 %v3699, %v3669
      %v3701 = vmul.f32 %v3638, %v3638
      %v3702 = vmul.f32 %v3639, %v3639
      %v3703 = vmul.f32 %v3640, %v3640
      %v3704 = vmul.f32 %v3641, %v3641
      %v3705 = vmul.f32 %v3642, %v3642
      %v3706 = vmul.f32 %v3643, %v3643
      %v3707 = vmul.f32 %v3644, %v3644
      %v3708 = vmul.f32 %v3645, %v3645
      %v3709 = vmul.f32 %v3646, %v3646
      %v3710 = vmul.f32 %v3647, %v3647
      %v3711 = vmul.f32 %v3648, %v3648
      %v3712 = vmul.f32 %v3649, %v3649
      %v3713 = vmul.f32 %v3650, %v3650
      %v3714 = vmul.f32 %v3651, %v3651
      %v3715 = vmul.f32 %v3652, %v3652
      %v3716 = vmul.f32 %v3653, %v3653
      %v3717 = vmul.f32 %v3654, %v3654
      %v3718 = vmul.f32 %v3655, %v3655
      %v3719 = vmul.f32 %v3656, %v3656
      %v3720 = vmul.f32 %v3657, %v3657
      %v3721 = vmul.f32 %v3658, %v3658
      %v3722 = vmul.f32 %v3659, %v3659
      %v3723 = vmul.f32 %v3660, %v3660
      %v3724 = vmul.f32 %v3661, %v3661
      %v3725 = vmul.f32 %v3662, %v3662
      %v3726 = vmul.f32 %v3663, %v3663
      %v3727 = vmul.f32 %v3664, %v3664
      %v3728 = vmul.f32 %v3665, %v3665
      %v3729 = vmul.f32 %v3666, %v3666
      %v3730 = vmul.f32 %v3667, %v3667
      %v3731 = vmul.f32 %v3668, %v3668
      %v3732 = vmul.f32 %v3669, %v3669
      %v3733 = vadd.f32 %v3701, %v3702
      %v3734 = vadd.f32 %v3733, %v3703
      %v3735 = vadd.f32 %v3734, %v3704
      %v3736 = vadd.f32 %v3735, %v3705
      %v3737 = vadd.f32 %v3736, %v3706
      %v3738 = vadd.f32 %v3737, %v3707
      %v3739 = vadd.f32 %v3738, %v3708
      %v3740 = vadd.f32 %v3739, %v3709
      %v3741 = vadd.f32 %v3740, %v3710
      %v3742 = vadd.f32 %v3741, %v3711
      %v3743 = vadd.f32 %v3742, %v3712
      %v3744 = vadd.f32 %v3743, %v3713
      %v3745 = vadd.f32 %v3744, %v3714
      %v3746 = vadd.f32 %v3745, %v3715
      %v3747 = vadd.f32 %v3746, %v3716
      %v3748 = vadd.f32 %v3747, %v3717
      %v3749 = vadd.f32 %v3748, %v3718
      %v3750 = vadd.f32 %v3749, %v3719
      %v3751 = vadd.f32 %v3750, %v3720
      %v3752 = vadd.f32 %v3751, %v3721
      %v3753 = vadd.f32 %v3752, %v3722
      %v3754 = vadd.f32 %v3753, %v3723
      %v3755 = vadd.f32 %v3754, %v3724
      %v3756 = vadd.f32 %v3755, %v3725
      %v3757 = vadd.f32 %v3756, %v3726
      %v3758 = vadd.f32 %v3757, %v3727
      %v3759 = vadd.f32 %v3758, %v3728
      %v3760 = vadd.f32 %v3759, %v3729
      %v3761 = vadd.f32 %v3760, %v3730
      %v3762 = vadd.f32 %v3761, %v3731
      %v3763 = vadd.f32 %v3762, %v3732
      %v3764 = vld [vmem:[%s238] sm:$0xff]
      %v3765 = vadd.f32 %v3764, %v3700
      %3766 = vst [vmem:[%s238] sm:$0xff] %v3765
      %v3767 = vld [vmem:[%s242] sm:$0xff]
      %v3768 = vadd.f32 %v3767, %v3763
      %3769 = vst [vmem:[%s242] sm:$0xff] %v3768
      %3770 = vst [vmem:[%s233] sm:$0xff] %v3638
      %3771 = vst [vmem:[%s233 + $0x8] sm:$0xff] %v3639
      %3772 = vst [vmem:[%s233 + $0x10] sm:$0xff] %v3640
      %3773 = vst [vmem:[%s233 + $0x18] sm:$0xff] %v3641
      %3774 = vst [vmem:[%s233 + $0x20] sm:$0xff] %v3642
      %3775 = vst [vmem:[%s233 + $0x28] sm:$0xff] %v3643
      %3776 = vst [vmem:[%s233 + $0x30] sm:$0xff] %v3644
      %3777 = vst [vmem:[%s233 + $0x38] sm:$0xff] %v3645
      %3778 = vst [vmem:[%s233 + $0x40] sm:$0xff] %v3646
      %3779 = vst [vmem:[%s233 + $0x48] sm:$0xff] %v3647
      %3780 = vst [vmem:[%s233 + $0x50] sm:$0xff] %v3648
      %3781 = vst [vmem:[%s233 + $0x58] sm:$0xff] %v3649
      %3782 = vst [vmem:[%s233 + $0x60] sm:$0xff] %v3650
      %3783 = vst [vmem:[%s233 + $0x68] sm:$0xff] %v3651
      %3784 = vst [vmem:[%s233 + $0x70] sm:$0xff] %v3652
      %3785 = vst [vmem:[%s233 + $0x78] sm:$0xff] %v3653
      %3786 = vst [vmem:[%s233 + $0x80] sm:$0xff] %v3654
      %3787 = vst [vmem:[%s233 + $0x88] sm:$0xff] %v3655
      %3788 = vst [vmem:[%s233 + $0x90] sm:$0xff] %v3656
      %3789 = vst [vmem:[%s233 + $0x98] sm:$0xff] %v3657
      %3790 = vst [vmem:[%s233 + $0xa0] sm:$0xff] %v3658
      %3791 = vst [vmem:[%s233 + $0xa8] sm:$0xff] %v3659
      %3792 = vst [vmem:[%s233 + $0xb0] sm:$0xff] %v3660
      %3793 = vst [vmem:[%s233 + $0xb8] sm:$0xff] %v3661
      %3794 = vst [vmem:[%s233 + $0xc0] sm:$0xff] %v3662
      %3795 = vst [vmem:[%s233 + $0xc8] sm:$0xff] %v3663
      %3796 = vst [vmem:[%s233 + $0xd0] sm:$0xff] %v3664
      %3797 = vst [vmem:[%s233 + $0xd8] sm:$0xff] %v3665
      %3798 = vst [vmem:[%s233 + $0xe0] sm:$0xff] %v3666
      %3799 = vst [vmem:[%s233 + $0xe8] sm:$0xff] %v3667
      %3800 = vst [vmem:[%s233 + $0xf0] sm:$0xff] %v3668
      %3801 = vst [vmem:[%s233 + $0xf8] sm:$0xff] %v3669
      %s3802 = sadd.s32 %s20, %s21
      %p3803 = scmp.lt.s32.totalorder %s3802, 1
      %s3804 = scalar_select %p3803, %s3802, 1
      %s3805 = smul.addr %s3804, 32
      %s3806 = smul.addr %s3805, 8
      %s3807 = scalar_lea.vmem %s2, %s3806
      %p3808 = scmp.lt.s32.totalorder %s20, 1
      %s3809 = scalar_select %p3808, %s20, 1
      %s3810 = smul.addr %s3809, 8
      %s3811 = scalar_lea.vmem %s3, %s3810
      %p3812 = scmp.lt.s32.totalorder %s20, 1
      %s3813 = scalar_select %p3812, %s20, 1
      %s3814 = smul.addr %s3813, 8
      %s3815 = scalar_lea.vmem %s4, %s3814
      // Predicated region
      $region33: #{conv2d_bn.2} parent=27 // pred_check
        %p3816 = pneg %p97
      $region34: #{conv2d_bn.2} parent=27 // pred_check_branch
        %3818 = sbr.rel (%p3816) target = $region36
      $region35: #{conv2d_bn.2} parent=27 // pred_region
        %s3819 = sadd.s32 %s20, %s21
      $region36: #{conv2d_bn.2} parent=27 // pred_fallthru
        _
      // Predicated region
      $region37: #{conv2d_bn.2} parent=27 // pred_check
        %p3820 = pneg %p123
      $region38: #{conv2d_bn.2} parent=27 // pred_check_branch
        %3822 = sbr.rel (%p3820) target = $region40
      $region39: #{conv2d_bn.2} parent=27 // pred_region
        _
      $region40: #{conv2d_bn.2} parent=27 // pred_fallthru
        _
      // Predicated region
      $region41: #{conv2d_bn.2} parent=27 // pred_check
        %p3823 = pneg %p149
      $region42: #{conv2d_bn.2} parent=27 // pred_check_branch
        %3825 = sbr.rel (%p3823) target = $region44
      $region43: #{conv2d_bn.2} parent=27 // pred_region
        _
      $region44: #{conv2d_bn.2} parent=27 // pred_fallthru
        _
    $region28: #{conv2d_bn.2} parent=5 // pred_fallthru
      _
    %p3826 = scmp.le.s32.totalorder 2, %s11
    // Predicated region
    $region45: #{conv2d_bn.2} parent=5 // pred_check
      %p3827 = pneg %p3826
    $region46: #{conv2d_bn.2} parent=5 // pred_check_branch
      %3829 = sbr.rel (%p3827) target = $region48
    $region47: #{conv2d_bn.2} parent=5 // pred_region
      %s3830 = ssub.s32 %s11, 2
      // Predicated region
      $region49: #{conv2d_bn.2} parent=47 // pred_check
        %p3831 = pneg %p103
      $region50: #{conv2d_bn.2} parent=47 // pred_check_branch
        %3833 = sbr.rel (%p3831) target = $region52
      $region51: #{conv2d_bn.2} parent=47 // pred_region
        %s3834 = sadd.s32 %s22, %s23
        %p3835 = scmp.lt.s32.totalorder %s3834, 1
        %s3836 = scalar_select %p3835, %s3834, 1
        %s3837 = smul.addr %s3836, 32
        %s3838 = smul.addr %s3837, 8
        %s3839 = scalar_lea.vmem %s2, %s3838
      $region52: #{conv2d_bn.2} parent=47 // pred_fallthru
        _
      // Predicated region
      $region53: #{conv2d_bn.2} parent=47 // pred_check
        %p3840 = pneg %p129
      $region54: #{conv2d_bn.2} parent=47 // pred_check_branch
        %3842 = sbr.rel (%p3840) target = $region56
      $region55: #{conv2d_bn.2} parent=47 // pred_region
        %p3843 = scmp.lt.s32.totalorder %s22, 1
        %s3844 = scalar_select %p3843, %s22, 1
        %s3845 = smul.addr %s3844, 8
        %s3846 = scalar_lea.vmem %s3, %s3845
      $region56: #{conv2d_bn.2} parent=47 // pred_fallthru
        _
      // Predicated region
      $region57: #{conv2d_bn.2} parent=47 // pred_check
        %p3847 = pneg %p155
      $region58: #{conv2d_bn.2} parent=47 // pred_check_branch
        %3849 = sbr.rel (%p3847) target = $region60
      $region59: #{conv2d_bn.2} parent=47 // pred_region
        %p3850 = scmp.lt.s32.totalorder %s22, 1
        %s3851 = scalar_select %p3850, %s22, 1
        %s3852 = smul.addr %s3851, 8
        %s3853 = scalar_lea.vmem %s4, %s3852
      $region60: #{conv2d_bn.2} parent=47 // pred_fallthru
        _
    $region48: #{conv2d_bn.2} parent=5 // pred_fallthru
      _
  $region6: #{conv2d_bn.2} parent=0 // loop_footer
    %s15 = sadd.s32 1, %s11
  $region7: #{conv2d_bn.2} parent=0 // loop_footer_branch
    %10 = sbr.rel target = $region3
  $region8: #{conv2d_bn.2} parent=0 // loop_exit
    _

</llo_original>
